<compile_context>
chip_gen: v6e
topology: v6e:2x2x1
jax: 0.10.0
libtpu: 0.0.40
codegen_flags: <defaults>
</compile_context>

<pallas_src>
import functools

import jax
import jax.numpy as jnp
from jax.experimental import pallas as pl
from jax.experimental.pallas import tpu as pltpu


OUT_W = 128      # lane-dense output slab width (holds [logits | q | zero-pad])
HEAD_W = 128     # fused head latent width (hidden_pi + hidden_vf = 64 + 64)


# ----------------------------------------------------------------------------
# Pallas kernel: entire forward pass (all matmuls + relu/tanh + residual adds)
# ----------------------------------------------------------------------------
def neurd_kernel(
    x_ref,
    w1, b1, w2, b2, w3, b3, w4, b4, w5, b5,   # shared trunk (weights bf16, biases f32)
    hw1, hb1, hw2, hb2,                       # fused policy / action-value heads
    out_ref,                                  # (bt, OUT_W) = [logits | q | 0...]
):
    x = x_ref[...]

    def lin(h, w_ref, b_ref):
        # bf16 x bf16 on the MXU (native path), f32 accumulation; bias add in f32.
        return jnp.dot(h.astype(jnp.bfloat16), w_ref[...],
                       preferred_element_type=jnp.float32) + b_ref[...]

    relu = lambda z: jnp.maximum(z, 0.0)

    # forward_shared (residual MLP, width 512) -- activations / residuals kept f32
    h1 = relu(lin(x, w1, b1))
    h2 = relu(lin(relu(lin(h1, w2, b2)), w3, b3) + h1)
    h3 = relu(lin(relu(lin(h2, w4, b4)), w5, b5) + h2 + h1)

    # fused policy + action-value heads: two matmuls instead of four
    pv = jnp.tanh(lin(h3, hw1, hb1))                         # (bt, 128) = [pi | vf] latent
    out_ref[...] = lin(pv, hw2, hb2).astype(out_ref.dtype)   # (bt, 128) = [logits | q | 0]


# ----------------------------------------------------------------------------
# Wrapper
# ----------------------------------------------------------------------------
_ARG_ORDER = [
    "w1", "b1", "w2", "b2", "w3", "b3", "w4", "b4", "w5", "b5",
    "hw1", "hb1", "hw2", "hb2",
]


def _batch_tiling(B):
    """Pad batch to a sublane multiple; split big batches into >=2 ~512-row tiles."""
    pb = max(8, ((B + 7) // 8) * 8)
    if pb <= 256:
        return pb, pb                          # single step; weight-streaming bound anyway
    n = max(2, -(-pb // 512))                  # >=2 parallel steps (v7x), ~512-row tiles
    bt = ((-(-pb // n) + 7) // 8) * 8          # ceil tile to a sublane multiple
    return bt * n, bt


@functools.partial(jax.jit, static_argnums=(2,))
def neurd_forward(features, kparams, action_dim):
    """features: (B, feature_dim) f32. kparams: dict from prepare_kernel_params."""
    B, feat_dim = features.shape
    kfeat = kparams["w1"].shape[0]             # feature dim padded to a lane multiple
    pb, bt = _batch_tiling(B)
    if pb != B or kfeat != feat_dim:
        features = jnp.pad(features, ((0, pb - B), (0, kfeat - feat_dim)))

    args = [features] + [kparams[k] for k in _ARG_ORDER]

    in_specs = [pl.BlockSpec((bt, kfeat), lambda i: (i, 0))]
    for k in _ARG_ORDER:
        shp = kparams[k].shape
        # Constant blocks: resident across batch tiles, single-buffered.
        in_specs.append(pl.BlockSpec(shp, lambda i: (0, 0),
                                     pipeline_mode=pl.Buffered(1)))

    out = pl.pallas_call(
        neurd_kernel,
        out_shape=jax.ShapeDtypeStruct((pb, OUT_W), jnp.float32),
        grid=(pb // bt,),
        in_specs=in_specs,
        out_specs=pl.BlockSpec((bt, OUT_W), lambda i: (i, 0)),
        compiler_params=pltpu.CompilerParams(
            dimension_semantics=("parallel",),
            vmem_limit_bytes=48 << 20,
        ),
    )(*args)

    logits = out[:B, :action_dim]
    q = out[:B, action_dim:2 * action_dim]
    return logits, q


# ----------------------------------------------------------------------------
# Deterministic parameter construction (orthogonal init like the module)
# ----------------------------------------------------------------------------
def orthogonal(key, out_dim, in_dim, gain):
    """Matches torch.nn.init.orthogonal_ semantics for a 2-D (out, in) weight."""
    rows, cols = out_dim, in_dim
    big, small = max(rows, cols), min(rows, cols)
    a = jax.random.normal(key, (big, small), dtype=jnp.float32)
    q, r = jnp.linalg.qr(a)
    d = jnp.diagonal(r)
    q = q * jnp.where(d >= 0.0, 1.0, -1.0)     # sign convention, sign(0) -> +1
    if rows < cols:
        q = q.T
    return gain * q[:rows, :cols]


def make_params(key, feature_dim, action_dim, hidden_pi=64, hidden_vf=64):
    """Torch-style parameters, stored transposed (in, out); biases (1, out)."""
    ks = jax.random.split(key, 9)
    sqrt2 = jnp.sqrt(2.0)
    p = {}

    # shared trunk (gain sqrt(2), biases 0)
    shapes = [(512, feature_dim), (512, 512), (512, 512), (512, 512), (512, 512)]
    for i, (o, ii) in enumerate(shapes, start=1):
        w = orthogonal(ks[i - 1], o, ii, sqrt2)
        p[f"w{i}"] = w.T
        p[f"b{i}"] = jnp.zeros((1, o), jnp.float32)

    # policy net (gain 0.01)
    p["pw1"] = orthogonal(ks[5], hidden_pi, 512, 0.01).T
    p["pb1"] = jnp.zeros((1, hidden_pi), jnp.float32)
    p["pw2"] = orthogonal(ks[6], action_dim, hidden_pi, 0.01).T
    p["pb2"] = jnp.zeros((1, action_dim), jnp.float32)

    # action-value net (gain 1)
    p["vw1"] = orthogonal(ks[7], hidden_vf, 512, 1.0).T
    p["vb1"] = jnp.zeros((1, hidden_vf), jnp.float32)
    p["vw2"] = orthogonal(ks[8], action_dim, hidden_vf, 1.0).T
    p["vb2"] = jnp.zeros((1, action_dim), jnp.float32)
    return p


def prepare_kernel_params(p, action_dim):
    """Fuse the two heads, pad w1's K to a lane multiple, cast matmul weights to bf16."""
    hp = p["pw1"].shape[1]
    hv = p["vw1"].shape[1]
    assert hp + hv == HEAD_W, "fused head assumes hidden_pi + hidden_vf == 128"
    assert 2 * action_dim <= OUT_W

    feat = p["w1"].shape[0]
    kfeat = ((feat + 127) // 128) * 128
    w1 = jnp.pad(p["w1"], ((0, kfeat - feat), (0, 0)))           # zero K-rows (exact)

    hw1 = jnp.concatenate([p["pw1"], p["vw1"]], axis=1)          # (512, 128)
    hb1 = jnp.concatenate([p["pb1"], p["vb1"]], axis=1)          # (1, 128)

    hw2 = jnp.zeros((HEAD_W, OUT_W), jnp.float32)                # block-diagonal head-2
    hw2 = hw2.at[:hp, :action_dim].set(p["pw2"])
    hw2 = hw2.at[hp:, action_dim:2 * action_dim].set(p["vw2"])
    hb2 = jnp.zeros((1, OUT_W), jnp.float32)
    hb2 = hb2.at[:, :action_dim].set(p["pb2"])
    hb2 = hb2.at[:, action_dim:2 * action_dim].set(p["vb2"])

    kp = {"w1": w1.astype(jnp.bfloat16), "b1": p["b1"]}
    for i in range(2, 6):
        kp[f"w{i}"] = p[f"w{i}"].astype(jnp.bfloat16)
        kp[f"b{i}"] = p[f"b{i}"]
    kp["hw1"] = hw1.astype(jnp.bfloat16)
    kp["hb1"] = hb1
    kp["hw2"] = hw2.astype(jnp.bfloat16)
    kp["hb2"] = hb2
    return kp


# ----------------------------------------------------------------------------
# Pure-JAX reference (same bf16-operand matmuls, f32 accumulation) for checks
# ----------------------------------------------------------------------------
def reference_forward(x, p):
    b16 = lambda a: a.astype(jnp.bfloat16)
    def lin(h, w, b):
        return jnp.dot(b16(h), b16(w), preferred_element_type=jnp.float32) + b
    relu = lambda z: jnp.maximum(z, 0.0)
    h1 = relu(lin(x, p["w1"], p["b1"]))
    h2 = relu(lin(relu(lin(h1, p["w2"], p["b2"])), p["w3"], p["b3"]) + h1)
    h3 = relu(lin(relu(lin(h2, p["w4"], p["b4"])), p["w5"], p["b5"]) + h2 + h1)
    logits = lin(jnp.tanh(lin(h3, p["pw1"], p["pb1"])), p["pw2"], p["pb2"])
    q = lin(jnp.tanh(lin(h3, p["vw1"], p["vb1"])), p["vw2"], p["vb2"])
    return logits, q


if __name__ == "__main__":
    key = jax.random.PRNGKey(0)
    k_param, k_x = jax.random.split(key)

    batch, feature_dim, action_dim = 2, 32, 8
    params = make_params(k_param, feature_dim, action_dim)
    kparams = prepare_kernel_params(params, action_dim)
    x = jax.random.normal(k_x, (batch, feature_dim), dtype=jnp.float32)

    logits, q = neurd_forward(x, kparams, action_dim)
    jax.block_until_ready((logits, q))

    ref_logits, ref_q = reference_forward(x, params)
    assert logits.shape == (batch, action_dim) and q.shape == (batch, action_dim)
    assert jnp.allclose(logits, ref_logits, atol=2e-3, rtol=2e-2)
    assert jnp.allclose(q, ref_q, atol=2e-3, rtol=2e-2)

    print("KERNEL_OK")
</pallas_src>

<mosaic_0001>
module attributes {stable_mosaic.version = 11 : i64} {
  func.func @neurd_kernel(%arg0: i32, %arg1: memref<8x128xf32, #tpu.memory_space<vmem>>, %arg2: memref<128x512xbf16, #tpu.memory_space<vmem>>, %arg3: memref<1x512xf32, #tpu.memory_space<vmem>>, %arg4: memref<512x512xbf16, #tpu.memory_space<vmem>>, %arg5: memref<1x512xf32, #tpu.memory_space<vmem>>, %arg6: memref<512x512xbf16, #tpu.memory_space<vmem>>, %arg7: memref<1x512xf32, #tpu.memory_space<vmem>>, %arg8: memref<512x512xbf16, #tpu.memory_space<vmem>>, %arg9: memref<1x512xf32, #tpu.memory_space<vmem>>, %arg10: memref<512x512xbf16, #tpu.memory_space<vmem>>, %arg11: memref<1x512xf32, #tpu.memory_space<vmem>>, %arg12: memref<512x128xbf16, #tpu.memory_space<vmem>>, %arg13: memref<1x128xf32, #tpu.memory_space<vmem>>, %arg14: memref<128x128xbf16, #tpu.memory_space<vmem>>, %arg15: memref<1x128xf32, #tpu.memory_space<vmem>>, %arg16: memref<8x128xf32, #tpu.memory_space<vmem>>) attributes {dimension_semantics = [#tpu.dimension_semantics<parallel>], iteration_bounds = array<i64: 1>, scalar_prefetch = 0 : i64, scratch_operands = 0 : i64, tpu.core_type = #tpu.core_type<tc>, window_params = [{transform_indices = @transform_0, window_bounds = array<i64: 8, 128>}, {pipeline_mode = #tpu.pipeline_mode<synchronous>, transform_indices = @transform_1, window_bounds = array<i64: 128, 512>}, {pipeline_mode = #tpu.pipeline_mode<synchronous>, transform_indices = @transform_2, window_bounds = array<i64: 1, 512>}, {pipeline_mode = #tpu.pipeline_mode<synchronous>, transform_indices = @transform_3, window_bounds = array<i64: 512, 512>}, {pipeline_mode = #tpu.pipeline_mode<synchronous>, transform_indices = @transform_4, window_bounds = array<i64: 1, 512>}, {pipeline_mode = #tpu.pipeline_mode<synchronous>, transform_indices = @transform_5, window_bounds = array<i64: 512, 512>}, {pipeline_mode = #tpu.pipeline_mode<synchronous>, transform_indices = @transform_6, window_bounds = array<i64: 1, 512>}, {pipeline_mode = #tpu.pipeline_mode<synchronous>, transform_indices = @transform_7, window_bounds = array<i64: 512, 512>}, {pipeline_mode = #tpu.pipeline_mode<synchronous>, transform_indices = @transform_8, window_bounds = array<i64: 1, 512>}, {pipeline_mode = #tpu.pipeline_mode<synchronous>, transform_indices = @transform_9, window_bounds = array<i64: 512, 512>}, {pipeline_mode = #tpu.pipeline_mode<synchronous>, transform_indices = @transform_10, window_bounds = array<i64: 1, 512>}, {pipeline_mode = #tpu.pipeline_mode<synchronous>, transform_indices = @transform_11, window_bounds = array<i64: 512, 128>}, {pipeline_mode = #tpu.pipeline_mode<synchronous>, transform_indices = @transform_12, window_bounds = array<i64: 1, 128>}, {pipeline_mode = #tpu.pipeline_mode<synchronous>, transform_indices = @transform_13, window_bounds = array<i64: 128, 128>}, {pipeline_mode = #tpu.pipeline_mode<synchronous>, transform_indices = @transform_14, window_bounds = array<i64: 1, 128>}, {transform_indices = @transform_15, window_bounds = array<i64: 8, 128>}]} {
    %c0 = arith.constant 0 : index
    %c0_0 = arith.constant 0 : index
    %0 = vector.load %arg1[%c0, %c0_0] : memref<8x128xf32, #tpu.memory_space<vmem>>, vector<8x128xf32>
    %1 = arith.truncf %0 : vector<8x128xf32> to vector<8x128xbf16>
    %c0_1 = arith.constant 0 : index
    %c0_2 = arith.constant 0 : index
    %2 = vector.load %arg2[%c0_1, %c0_2] : memref<128x512xbf16, #tpu.memory_space<vmem>>, vector<128x512xbf16>
    %cst = arith.constant dense<0.000000e+00> : vector<8x512xf32>
    %3 = tpu.matmul %1, %2, %cst {dimension_numbers = #tpu.dot_dimension_numbers<[1], [0], [0], [1], [0, 0, 1, 1], [], []>} : vector<8x128xbf16>, vector<128x512xbf16>, vector<8x512xf32> -> vector<8x512xf32>
    %c0_3 = arith.constant 0 : index
    %c0_4 = arith.constant 0 : index
    %4 = vector.load %arg3[%c0_3, %c0_4] : memref<1x512xf32, #tpu.memory_space<vmem>>, vector<1x512xf32>
    %5 = vector.broadcast %4 : vector<1x512xf32> to vector<8x512xf32>
    %6 = arith.addf %3, %5 : vector<8x512xf32>
    %cst_5 = arith.constant 0.000000e+00 : f32
    %7 = vector.broadcast %cst_5 : f32 to vector<8x512xf32>
    %8 = arith.maximumf %6, %7 : vector<8x512xf32>
    %9 = arith.truncf %8 : vector<8x512xf32> to vector<8x512xbf16>
    %c0_6 = arith.constant 0 : index
    %c0_7 = arith.constant 0 : index
    %10 = vector.load %arg4[%c0_6, %c0_7] : memref<512x512xbf16, #tpu.memory_space<vmem>>, vector<512x512xbf16>
    %cst_8 = arith.constant dense<0.000000e+00> : vector<8x512xf32>
    %11 = tpu.matmul %9, %10, %cst_8 {dimension_numbers = #tpu.dot_dimension_numbers<[1], [0], [0], [1], [0, 0, 1, 1], [], []>} : vector<8x512xbf16>, vector<512x512xbf16>, vector<8x512xf32> -> vector<8x512xf32>
    %c0_9 = arith.constant 0 : index
    %c0_10 = arith.constant 0 : index
    %12 = vector.load %arg5[%c0_9, %c0_10] : memref<1x512xf32, #tpu.memory_space<vmem>>, vector<1x512xf32>
    %13 = vector.broadcast %12 : vector<1x512xf32> to vector<8x512xf32>
    %14 = arith.addf %11, %13 : vector<8x512xf32>
    %cst_11 = arith.constant 0.000000e+00 : f32
    %15 = vector.broadcast %cst_11 : f32 to vector<8x512xf32>
    %16 = arith.maximumf %14, %15 : vector<8x512xf32>
    %17 = arith.truncf %16 : vector<8x512xf32> to vector<8x512xbf16>
    %c0_12 = arith.constant 0 : index
    %c0_13 = arith.constant 0 : index
    %18 = vector.load %arg6[%c0_12, %c0_13] : memref<512x512xbf16, #tpu.memory_space<vmem>>, vector<512x512xbf16>
    %cst_14 = arith.constant dense<0.000000e+00> : vector<8x512xf32>
    %19 = tpu.matmul %17, %18, %cst_14 {dimension_numbers = #tpu.dot_dimension_numbers<[1], [0], [0], [1], [0, 0, 1, 1], [], []>} : vector<8x512xbf16>, vector<512x512xbf16>, vector<8x512xf32> -> vector<8x512xf32>
    %c0_15 = arith.constant 0 : index
    %c0_16 = arith.constant 0 : index
    %20 = vector.load %arg7[%c0_15, %c0_16] : memref<1x512xf32, #tpu.memory_space<vmem>>, vector<1x512xf32>
    %21 = vector.broadcast %20 : vector<1x512xf32> to vector<8x512xf32>
    %22 = arith.addf %19, %21 : vector<8x512xf32>
    %23 = arith.addf %22, %8 : vector<8x512xf32>
    %cst_17 = arith.constant 0.000000e+00 : f32
    %24 = vector.broadcast %cst_17 : f32 to vector<8x512xf32>
    %25 = arith.maximumf %23, %24 : vector<8x512xf32>
    %26 = arith.truncf %25 : vector<8x512xf32> to vector<8x512xbf16>
    %c0_18 = arith.constant 0 : index
    %c0_19 = arith.constant 0 : index
    %27 = vector.load %arg8[%c0_18, %c0_19] : memref<512x512xbf16, #tpu.memory_space<vmem>>, vector<512x512xbf16>
    %cst_20 = arith.constant dense<0.000000e+00> : vector<8x512xf32>
    %28 = tpu.matmul %26, %27, %cst_20 {dimension_numbers = #tpu.dot_dimension_numbers<[1], [0], [0], [1], [0, 0, 1, 1], [], []>} : vector<8x512xbf16>, vector<512x512xbf16>, vector<8x512xf32> -> vector<8x512xf32>
    %c0_21 = arith.constant 0 : index
    %c0_22 = arith.constant 0 : index
    %29 = vector.load %arg9[%c0_21, %c0_22] : memref<1x512xf32, #tpu.memory_space<vmem>>, vector<1x512xf32>
    %30 = vector.broadcast %29 : vector<1x512xf32> to vector<8x512xf32>
    %31 = arith.addf %28, %30 : vector<8x512xf32>
    %cst_23 = arith.constant 0.000000e+00 : f32
    %32 = vector.broadcast %cst_23 : f32 to vector<8x512xf32>
    %33 = arith.maximumf %31, %32 : vector<8x512xf32>
    %34 = arith.truncf %33 : vector<8x512xf32> to vector<8x512xbf16>
    %c0_24 = arith.constant 0 : index
    %c0_25 = arith.constant 0 : index
    %35 = vector.load %arg10[%c0_24, %c0_25] : memref<512x512xbf16, #tpu.memory_space<vmem>>, vector<512x512xbf16>
    %cst_26 = arith.constant dense<0.000000e+00> : vector<8x512xf32>
    %36 = tpu.matmul %34, %35, %cst_26 {dimension_numbers = #tpu.dot_dimension_numbers<[1], [0], [0], [1], [0, 0, 1, 1], [], []>} : vector<8x512xbf16>, vector<512x512xbf16>, vector<8x512xf32> -> vector<8x512xf32>
    %c0_27 = arith.constant 0 : index
    %c0_28 = arith.constant 0 : index
    %37 = vector.load %arg11[%c0_27, %c0_28] : memref<1x512xf32, #tpu.memory_space<vmem>>, vector<1x512xf32>
    %38 = vector.broadcast %37 : vector<1x512xf32> to vector<8x512xf32>
    %39 = arith.addf %36, %38 : vector<8x512xf32>
    %40 = arith.addf %39, %25 : vector<8x512xf32>
    %41 = arith.addf %40, %8 : vector<8x512xf32>
    %cst_29 = arith.constant 0.000000e+00 : f32
    %42 = vector.broadcast %cst_29 : f32 to vector<8x512xf32>
    %43 = arith.maximumf %41, %42 : vector<8x512xf32>
    %44 = arith.truncf %43 : vector<8x512xf32> to vector<8x512xbf16>
    %c0_30 = arith.constant 0 : index
    %c0_31 = arith.constant 0 : index
    %45 = vector.load %arg12[%c0_30, %c0_31] : memref<512x128xbf16, #tpu.memory_space<vmem>>, vector<512x128xbf16>
    %cst_32 = arith.constant dense<0.000000e+00> : vector<8x128xf32>
    %46 = tpu.matmul %44, %45, %cst_32 {dimension_numbers = #tpu.dot_dimension_numbers<[1], [0], [0], [1], [0, 0, 1, 1], [], []>} : vector<8x512xbf16>, vector<512x128xbf16>, vector<8x128xf32> -> vector<8x128xf32>
    %c0_33 = arith.constant 0 : index
    %c0_34 = arith.constant 0 : index
    %47 = vector.load %arg13[%c0_33, %c0_34] : memref<1x128xf32, #tpu.memory_space<vmem>>, vector<1x128xf32>
    %48 = vector.broadcast %47 : vector<1x128xf32> to vector<8x128xf32>
    %49 = arith.addf %46, %48 : vector<8x128xf32>
    %50 = math.tanh %49 : vector<8x128xf32>
    %51 = arith.truncf %50 : vector<8x128xf32> to vector<8x128xbf16>
    %c0_35 = arith.constant 0 : index
    %c0_36 = arith.constant 0 : index
    %52 = vector.load %arg14[%c0_35, %c0_36] : memref<128x128xbf16, #tpu.memory_space<vmem>>, vector<128x128xbf16>
    %cst_37 = arith.constant dense<0.000000e+00> : vector<8x128xf32>
    %53 = tpu.matmul %51, %52, %cst_37 {dimension_numbers = #tpu.dot_dimension_numbers<[1], [0], [0], [1], [0, 0, 1, 1], [], []>} : vector<8x128xbf16>, vector<128x128xbf16>, vector<8x128xf32> -> vector<8x128xf32>
    %c0_38 = arith.constant 0 : index
    %c0_39 = arith.constant 0 : index
    %54 = vector.load %arg15[%c0_38, %c0_39] : memref<1x128xf32, #tpu.memory_space<vmem>>, vector<1x128xf32>
    %55 = vector.broadcast %54 : vector<1x128xf32> to vector<8x128xf32>
    %56 = arith.addf %53, %55 : vector<8x128xf32>
    %c0_40 = arith.constant 0 : index
    %c0_41 = arith.constant 0 : index
    %57 = vector.load %arg16[%c0_40, %c0_41] : memref<8x128xf32, #tpu.memory_space<vmem>>, vector<8x128xf32>
    tpu.vector_store %arg16[%c0_40, %c0_41], %56 {strides = array<i32>} : memref<8x128xf32, #tpu.memory_space<vmem>>, vector<8x128xf32>,
    return
  }
  func.func @transform_0(%arg0: i32) -> (i32, i32) {
    %c0_i32 = arith.constant 0 : i32
    %c0_i32_0 = arith.constant 0 : i32
    return %arg0, %c0_i32 : i32, i32
  }
  func.func @transform_1(%arg0: i32) -> (i32, i32) {
    %c0_i32 = arith.constant 0 : i32
    %c0_i32_0 = arith.constant 0 : i32
    %c0_i32_1 = arith.constant 0 : i32
    return %c0_i32, %c0_i32_0 : i32, i32
  }
  func.func @transform_2(%arg0: i32) -> (i32, i32) {
    %c0_i32 = arith.constant 0 : i32
    %c0_i32_0 = arith.constant 0 : i32
    %c0_i32_1 = arith.constant 0 : i32
    return %c0_i32, %c0_i32_0 : i32, i32
  }
  func.func @transform_3(%arg0: i32) -> (i32, i32) {
    %c0_i32 = arith.constant 0 : i32
    %c0_i32_0 = arith.constant 0 : i32
    %c0_i32_1 = arith.constant 0 : i32
    return %c0_i32, %c0_i32_0 : i32, i32
  }
  func.func @transform_4(%arg0: i32) -> (i32, i32) {
    %c0_i32 = arith.constant 0 : i32
    %c0_i32_0 = arith.constant 0 : i32
    %c0_i32_1 = arith.constant 0 : i32
    return %c0_i32, %c0_i32_0 : i32, i32
  }
  func.func @transform_5(%arg0: i32) -> (i32, i32) {
    %c0_i32 = arith.constant 0 : i32
    %c0_i32_0 = arith.constant 0 : i32
    %c0_i32_1 = arith.constant 0 : i32
    return %c0_i32, %c0_i32_0 : i32, i32
  }
  func.func @transform_6(%arg0: i32) -> (i32, i32) {
    %c0_i32 = arith.constant 0 : i32
    %c0_i32_0 = arith.constant 0 : i32
    %c0_i32_1 = arith.constant 0 : i32
    return %c0_i32, %c0_i32_0 : i32, i32
  }
  func.func @transform_7(%arg0: i32) -> (i32, i32) {
    %c0_i32 = arith.constant 0 : i32
    %c0_i32_0 = arith.constant 0 : i32
    %c0_i32_1 = arith.constant 0 : i32
    return %c0_i32, %c0_i32_0 : i32, i32
  }
  func.func @transform_8(%arg0: i32) -> (i32, i32) {
    %c0_i32 = arith.constant 0 : i32
    %c0_i32_0 = arith.constant 0 : i32
    %c0_i32_1 = arith.constant 0 : i32
    return %c0_i32, %c0_i32_0 : i32, i32
  }
  func.func @transform_9(%arg0: i32) -> (i32, i32) {
    %c0_i32 = arith.constant 0 : i32
    %c0_i32_0 = arith.constant 0 : i32
    %c0_i32_1 = arith.constant 0 : i32
    return %c0_i32, %c0_i32_0 : i32, i32
  }
  func.func @transform_10(%arg0: i32) -> (i32, i32) {
    %c0_i32 = arith.constant 0 : i32
    %c0_i32_0 = arith.constant 0 : i32
    %c0_i32_1 = arith.constant 0 : i32
    return %c0_i32, %c0_i32_0 : i32, i32
  }
  func.func @transform_11(%arg0: i32) -> (i32, i32) {
    %c0_i32 = arith.constant 0 : i32
    %c0_i32_0 = arith.constant 0 : i32
    %c0_i32_1 = arith.constant 0 : i32
    return %c0_i32, %c0_i32_0 : i32, i32
  }
  func.func @transform_12(%arg0: i32) -> (i32, i32) {
    %c0_i32 = arith.constant 0 : i32
    %c0_i32_0 = arith.constant 0 : i32
    %c0_i32_1 = arith.constant 0 : i32
    return %c0_i32, %c0_i32_0 : i32, i32
  }
  func.func @transform_13(%arg0: i32) -> (i32, i32) {
    %c0_i32 = arith.constant 0 : i32
    %c0_i32_0 = arith.constant 0 : i32
    %c0_i32_1 = arith.constant 0 : i32
    return %c0_i32, %c0_i32_0 : i32, i32
  }
  func.func @transform_14(%arg0: i32) -> (i32, i32) {
    %c0_i32 = arith.constant 0 : i32
    %c0_i32_0 = arith.constant 0 : i32
    %c0_i32_1 = arith.constant 0 : i32
    return %c0_i32, %c0_i32_0 : i32, i32
  }
  func.func @transform_15(%arg0: i32) -> (i32, i32) {
    %c0_i32 = arith.constant 0 : i32
    %c0_i32_0 = arith.constant 0 : i32
    return %arg0, %c0_i32 : i32, i32
  }
}

</mosaic_0001>

<llo_original>
// kernel: neurd_forward.1
$region0: #{neurd_forward.1}
  #allocation0 [shape = 'u32[]', space=smem, size = 0x4, offset = 0x4, fixed_abs, tag = 'smem constant byte address 0x4 - core index']
  #allocation1 [shape = 'u32[144,128]{1,0:T(1,128)}', space=vmem, size = 0x12000, scoped, tag = 'internal scratch']
  %s0 = inlined_call_operand.vmem [shape: f32[8,128], index: 0, kind: input, shape index: {}]
  %s1 = inlined_call_operand.hbm [shape: bf16[128,512], index: 1, kind: input, shape index: {}]
  %s2 = inlined_call_operand.vmem [shape: f32[1,512], index: 2, kind: input, shape index: {}]
  %s3 = inlined_call_operand.hbm [shape: bf16[512,512], index: 3, kind: input, shape index: {}]
  %s4 = inlined_call_operand.vmem [shape: f32[1,512], index: 4, kind: input, shape index: {}]
  %s5 = inlined_call_operand.hbm [shape: bf16[512,512], index: 5, kind: input, shape index: {}]
  %s6 = inlined_call_operand.vmem [shape: f32[1,512], index: 6, kind: input, shape index: {}]
  %s7 = inlined_call_operand.hbm [shape: bf16[512,512], index: 7, kind: input, shape index: {}]
  %s8 = inlined_call_operand.vmem [shape: f32[1,512], index: 8, kind: input, shape index: {}]
  %s9 = inlined_call_operand.hbm [shape: bf16[512,512], index: 9, kind: input, shape index: {}]
  %s10 = inlined_call_operand.vmem [shape: f32[1,512], index: 10, kind: input, shape index: {}]
  %s11 = inlined_call_operand.hbm [shape: bf16[512,128], index: 11, kind: input, shape index: {}]
  %s12 = inlined_call_operand.vmem [shape: f32[1,128], index: 12, kind: input, shape index: {}]
  %s13 = inlined_call_operand.hbm [shape: bf16[128,128], index: 13, kind: input, shape index: {}]
  %s14 = inlined_call_operand.vmem [shape: f32[1,128], index: 14, kind: input, shape index: {}]
  %s15 = inlined_call_operand.vmem [shape: f32[8,128], index: 15, kind: output, shape index: {}]
  %s16 = sld [smem:[#allocation0]]
  $region98: #{neurd_forward.1} parent=0
    _
  %s18 = ssub.s32 1, %s16
  %s19 = scalar_select 0, %s18, %s16
  $region1: #{neurd_forward.1} parent=0
    #allocation2 [shape = 'u8[131072]{0}', space=vmem, size = 0x20000, scoped, tag = 'input window, operand 1, single buffered']
    #allocation3 [shape = 's32[1]{0}', space=sflag, size = 0x4, scoped, tag = 'scoped memory for neurd_forward.1']
    #allocation4 [shape = 'u8[524288]{0}', space=vmem, size = 0x80000, scoped, tag = 'input window, operand 3, single buffered']
    #allocation5 [shape = 's32[1]{0}', space=sflag, size = 0x4, scoped, tag = 'scoped memory for neurd_forward.1']
    #allocation6 [shape = 'u8[524288]{0}', space=vmem, size = 0x80000, scoped, tag = 'input window, operand 5, single buffered']
    #allocation7 [shape = 'u8[524288]{0}', space=vmem, size = 0x80000, scoped, tag = 'input window, operand 7, single buffered']
    #allocation8 [shape = 's32[1]{0}', space=sflag, size = 0x4, scoped, tag = 'scoped memory for neurd_forward.1']
    #allocation9 [shape = 'u8[524288]{0}', space=vmem, size = 0x80000, scoped, tag = 'input window, operand 9, single buffered']
    #allocation10 [shape = 'u8[131072]{0}', space=vmem, size = 0x20000, scoped, tag = 'input window, operand 11, single buffered']
    #allocation11 [shape = 's32[1]{0}', space=sflag, size = 0x4, scoped, tag = 'scoped memory for neurd_forward.1']
    #allocation12 [shape = 'u8[32768]{0}', space=vmem, size = 0x8000, scoped, tag = 'input window, operand 13, single buffered']
    %20 = vsyncpa [#allocation3], 0
    %21 = vsyncpa [#allocation5], 0
    %22 = vsyncpa [#allocation8], 0
    %23 = vsyncpa [#allocation11], 0
    // Predicated region
    $region2: #{neurd_forward.1} parent=1 // pred_check
      _
    $region3: #{neurd_forward.1} parent=1 // pred_check_branch
      %25 = sbr.rel (0) target = $region5
    $region4: #{neurd_forward.1} parent=1 // pred_region
      _
    $region5: #{neurd_forward.1} parent=1 // pred_fallthru
      _
    // Predicated region
    $region6: #{neurd_forward.1} parent=1 // pred_check
      _
    $region7: #{neurd_forward.1} parent=1 // pred_check_branch
      %27 = sbr.rel (0) target = $region9
    $region8: #{neurd_forward.1} parent=1 // pred_region
      %s29 = ssub.s32 4096, 4096
      %30 = vsyncadd [#allocation3], %s29
      %s31 = sshll.u32 [#allocation2], 4
      %s32 = int_to_ptr.vmem [resolvable:$true] %s31
      %37 = dma.hbm_to_vmem [thread:$0]  %s1, 4096, %s32, [#allocation3], 256, 256, 16
    $region9: #{neurd_forward.1} parent=1 // pred_fallthru
      _
    // Predicated region
    $region10: #{neurd_forward.1} parent=1 // pred_check
      _
    $region11: #{neurd_forward.1} parent=1 // pred_check_branch
      %39 = sbr.rel (0) target = $region13
    $region12: #{neurd_forward.1} parent=1 // pred_region
      _
    $region13: #{neurd_forward.1} parent=1 // pred_fallthru
      _
    // Predicated region
    $region14: #{neurd_forward.1} parent=1 // pred_check
      _
    $region15: #{neurd_forward.1} parent=1 // pred_check_branch
      %41 = sbr.rel (0) target = $region17
    $region16: #{neurd_forward.1} parent=1 // pred_region
      %s43 = ssub.s32 16384, 16384
      %44 = vsyncadd [#allocation5], %s43
      %s45 = sshll.u32 [#allocation4], 4
      %s46 = int_to_ptr.vmem [resolvable:$true] %s45
      %51 = dma.hbm_to_vmem [thread:$0]  %s3, 16384, %s46, [#allocation5], 256, 256, 16
    $region17: #{neurd_forward.1} parent=1 // pred_fallthru
      _
    // Predicated region
    $region18: #{neurd_forward.1} parent=1 // pred_check
      _
    $region19: #{neurd_forward.1} parent=1 // pred_check_branch
      %53 = sbr.rel (0) target = $region21
    $region20: #{neurd_forward.1} parent=1 // pred_region
      _
    $region21: #{neurd_forward.1} parent=1 // pred_fallthru
      _
    // Predicated region
    $region22: #{neurd_forward.1} parent=1 // pred_check
      _
    $region23: #{neurd_forward.1} parent=1 // pred_check_branch
      %55 = sbr.rel (0) target = $region25
    $region24: #{neurd_forward.1} parent=1 // pred_region
      %s57 = ssub.s32 16384, 16384
      %58 = vsyncadd [#allocation5], %s57
      %s59 = sshll.u32 [#allocation6], 4
      %s60 = int_to_ptr.vmem [resolvable:$true] %s59
      %65 = dma.hbm_to_vmem [thread:$0]  %s5, 16384, %s60, [#allocation5], 256, 256, 16
    $region25: #{neurd_forward.1} parent=1 // pred_fallthru
      _
    // Predicated region
    $region26: #{neurd_forward.1} parent=1 // pred_check
      _
    $region27: #{neurd_forward.1} parent=1 // pred_check_branch
      %67 = sbr.rel (0) target = $region29
    $region28: #{neurd_forward.1} parent=1 // pred_region
      _
    $region29: #{neurd_forward.1} parent=1 // pred_fallthru
      _
    // Predicated region
    $region30: #{neurd_forward.1} parent=1 // pred_check
      _
    $region31: #{neurd_forward.1} parent=1 // pred_check_branch
      %69 = sbr.rel (0) target = $region33
    $region32: #{neurd_forward.1} parent=1 // pred_region
      %s71 = ssub.s32 16384, 16384
      %72 = vsyncadd [#allocation8], %s71
      %s73 = sshll.u32 [#allocation7], 4
      %s74 = int_to_ptr.vmem [resolvable:$true] %s73
      %79 = dma.hbm_to_vmem [thread:$0]  %s7, 16384, %s74, [#allocation8], 256, 256, 16
    $region33: #{neurd_forward.1} parent=1 // pred_fallthru
      _
    // Predicated region
    $region34: #{neurd_forward.1} parent=1 // pred_check
      _
    $region35: #{neurd_forward.1} parent=1 // pred_check_branch
      %81 = sbr.rel (0) target = $region37
    $region36: #{neurd_forward.1} parent=1 // pred_region
      _
    $region37: #{neurd_forward.1} parent=1 // pred_fallthru
      _
    // Predicated region
    $region38: #{neurd_forward.1} parent=1 // pred_check
      _
    $region39: #{neurd_forward.1} parent=1 // pred_check_branch
      %83 = sbr.rel (0) target = $region41
    $region40: #{neurd_forward.1} parent=1 // pred_region
      %s85 = ssub.s32 16384, 16384
      %86 = vsyncadd [#allocation8], %s85
      %s87 = sshll.u32 [#allocation9], 4
      %s88 = int_to_ptr.vmem [resolvable:$true] %s87
      %93 = dma.hbm_to_vmem [thread:$0]  %s9, 16384, %s88, [#allocation8], 256, 256, 16
    $region41: #{neurd_forward.1} parent=1 // pred_fallthru
      _
    // Predicated region
    $region42: #{neurd_forward.1} parent=1 // pred_check
      _
    $region43: #{neurd_forward.1} parent=1 // pred_check_branch
      %95 = sbr.rel (0) target = $region45
    $region44: #{neurd_forward.1} parent=1 // pred_region
      _
    $region45: #{neurd_forward.1} parent=1 // pred_fallthru
      _
    // Predicated region
    $region46: #{neurd_forward.1} parent=1 // pred_check
      _
    $region47: #{neurd_forward.1} parent=1 // pred_check_branch
      %97 = sbr.rel (0) target = $region49
    $region48: #{neurd_forward.1} parent=1 // pred_region
      %s99 = ssub.s32 4096, 4096
      %100 = vsyncadd [#allocation11], %s99
      %s101 = sshll.u32 [#allocation10], 4
      %s102 = int_to_ptr.vmem [resolvable:$true] %s101
      %107 = dma.hbm_to_vmem [thread:$0]  %s11, 4096, %s102, [#allocation11], 64, 64, 4
    $region49: #{neurd_forward.1} parent=1 // pred_fallthru
      _
    // Predicated region
    $region50: #{neurd_forward.1} parent=1 // pred_check
      _
    $region51: #{neurd_forward.1} parent=1 // pred_check_branch
      %109 = sbr.rel (0) target = $region53
    $region52: #{neurd_forward.1} parent=1 // pred_region
      _
    $region53: #{neurd_forward.1} parent=1 // pred_fallthru
      _
    // Predicated region
    $region54: #{neurd_forward.1} parent=1 // pred_check
      _
    $region55: #{neurd_forward.1} parent=1 // pred_check_branch
      %111 = sbr.rel (0) target = $region57
    $region56: #{neurd_forward.1} parent=1 // pred_region
      %s113 = ssub.s32 1024, 1024
      %114 = vsyncadd [#allocation11], %s113
      %s115 = sshll.u32 [#allocation12], 4
      %s116 = int_to_ptr.vmem [resolvable:$true] %s115
      %121 = dma.hbm_to_vmem [thread:$0]  %s13, 1024, %s116, [#allocation11], 64, 64, 4
    $region57: #{neurd_forward.1} parent=1 // pred_fallthru
      _
    // Predicated region
    $region58: #{neurd_forward.1} parent=1 // pred_check
      _
    $region59: #{neurd_forward.1} parent=1 // pred_check_branch
      %123 = sbr.rel (0) target = $region61
    $region60: #{neurd_forward.1} parent=1 // pred_region
      _
    $region61: #{neurd_forward.1} parent=1 // pred_fallthru
      _
    // Predicated region
    $region62: #{neurd_forward.1} parent=1 // pred_check
      _
    $region63: #{neurd_forward.1} parent=1 // pred_check_branch
      %125 = sbr.rel (0) target = $region65
    $region64: #{neurd_forward.1} parent=1 // pred_region
      %126 = dma.done [#allocation3], 4096
    $region65: #{neurd_forward.1} parent=1 // pred_fallthru
      _
    // Predicated region
    $region66: #{neurd_forward.1} parent=1 // pred_check
      _
    $region67: #{neurd_forward.1} parent=1 // pred_check_branch
      %128 = sbr.rel (0) target = $region69
    $region68: #{neurd_forward.1} parent=1 // pred_region
      %129 = dma.done [#allocation5], 16384
    $region69: #{neurd_forward.1} parent=1 // pred_fallthru
      _
    // Predicated region
    $region70: #{neurd_forward.1} parent=1 // pred_check
      _
    $region71: #{neurd_forward.1} parent=1 // pred_check_branch
      %131 = sbr.rel (0) target = $region73
    $region72: #{neurd_forward.1} parent=1 // pred_region
      %132 = dma.done [#allocation5], 16384
    $region73: #{neurd_forward.1} parent=1 // pred_fallthru
      _
    // Predicated region
    $region74: #{neurd_forward.1} parent=1 // pred_check
      _
    $region75: #{neurd_forward.1} parent=1 // pred_check_branch
      %134 = sbr.rel (0) target = $region77
    $region76: #{neurd_forward.1} parent=1 // pred_region
      %135 = dma.done [#allocation8], 16384
    $region77: #{neurd_forward.1} parent=1 // pred_fallthru
      _
    // Predicated region
    $region78: #{neurd_forward.1} parent=1 // pred_check
      _
    $region79: #{neurd_forward.1} parent=1 // pred_check_branch
      %137 = sbr.rel (0) target = $region81
    $region80: #{neurd_forward.1} parent=1 // pred_region
      %138 = dma.done [#allocation8], 16384
    $region81: #{neurd_forward.1} parent=1 // pred_fallthru
      _
    // Predicated region
    $region82: #{neurd_forward.1} parent=1 // pred_check
      _
    $region83: #{neurd_forward.1} parent=1 // pred_check_branch
      %140 = sbr.rel (0) target = $region85
    $region84: #{neurd_forward.1} parent=1 // pred_region
      %141 = dma.done [#allocation11], 4096
    $region85: #{neurd_forward.1} parent=1 // pred_fallthru
      _
    // Predicated region
    $region86: #{neurd_forward.1} parent=1 // pred_check
      _
    $region87: #{neurd_forward.1} parent=1 // pred_check_branch
      %143 = sbr.rel (0) target = $region89
    $region88: #{neurd_forward.1} parent=1 // pred_region
      %144 = dma.done [#allocation11], 1024
    $region89: #{neurd_forward.1} parent=1 // pred_fallthru
      _
    %v146 = vld [vmem:[%s0] sm:$0xff]
    %v147 = vpack.c.bf16 %v146, %v146
    %v148 = vld [vmem:[#allocation2] sm:$0xff]
    %v149 = vld [vmem:[#allocation2 + $0x8] sm:$0xff]
    %v150 = vld [vmem:[#allocation2 + $0x10] sm:$0xff]
    %v151 = vld [vmem:[#allocation2 + $0x18] sm:$0xff]
    %v152 = vld [vmem:[#allocation2 + $0x20] sm:$0xff]
    %v153 = vld [vmem:[#allocation2 + $0x28] sm:$0xff]
    %v154 = vld [vmem:[#allocation2 + $0x30] sm:$0xff]
    %v155 = vld [vmem:[#allocation2 + $0x38] sm:$0xff]
    %v156 = vld [vmem:[#allocation2 + $0x40] sm:$0xff]
    %v157 = vld [vmem:[#allocation2 + $0x48] sm:$0xff]
    %v158 = vld [vmem:[#allocation2 + $0x50] sm:$0xff]
    %v159 = vld [vmem:[#allocation2 + $0x58] sm:$0xff]
    %v160 = vld [vmem:[#allocation2 + $0x60] sm:$0xff]
    %v161 = vld [vmem:[#allocation2 + $0x68] sm:$0xff]
    %v162 = vld [vmem:[#allocation2 + $0x70] sm:$0xff]
    %v163 = vld [vmem:[#allocation2 + $0x78] sm:$0xff]
    %v164 = vld [vmem:[#allocation2 + $0x80] sm:$0xff]
    %v165 = vld [vmem:[#allocation2 + $0x88] sm:$0xff]
    %v166 = vld [vmem:[#allocation2 + $0x90] sm:$0xff]
    %v167 = vld [vmem:[#allocation2 + $0x98] sm:$0xff]
    %v168 = vld [vmem:[#allocation2 + $0xa0] sm:$0xff]
    %v169 = vld [vmem:[#allocation2 + $0xa8] sm:$0xff]
    %v170 = vld [vmem:[#allocation2 + $0xb0] sm:$0xff]
    %v171 = vld [vmem:[#allocation2 + $0xb8] sm:$0xff]
    %v172 = vld [vmem:[#allocation2 + $0xc0] sm:$0xff]
    %v173 = vld [vmem:[#allocation2 + $0xc8] sm:$0xff]
    %v174 = vld [vmem:[#allocation2 + $0xd0] sm:$0xff]
    %v175 = vld [vmem:[#allocation2 + $0xd8] sm:$0xff]
    %v176 = vld [vmem:[#allocation2 + $0xe0] sm:$0xff]
    %v177 = vld [vmem:[#allocation2 + $0xe8] sm:$0xff]
    %v178 = vld [vmem:[#allocation2 + $0xf0] sm:$0xff]
    %v179 = vld [vmem:[#allocation2 + $0xf8] sm:$0xff]
    %v180 = vld [vmem:[%s2] sm:$0xf]
    %v182 = vlaneseq
    %v183 = vshrl.u32 %v182, 7
    %v184 = vsub.s32 0, %v183
    %v185 = vrot.slane %v180, %v184
    %v186 = vlaneseq
    %v187 = vshrl.u32 %v186, 7
    %v188 = vsub.s32 1, %v187
    %v189 = vrot.slane %v180, %v188
    %v190 = vlaneseq
    %v191 = vshrl.u32 %v190, 7
    %v192 = vsub.s32 2, %v191
    %v193 = vrot.slane %v180, %v192
    %v194 = vlaneseq
    %v195 = vshrl.u32 %v194, 7
    %v196 = vsub.s32 3, %v195
    %v197 = vrot.slane %v180, %v196
    %v234 = vunpack.c.l.b16 %v148
    %v235 = vunpack.c.h.b16 %v148
    %v236 = vunpack.c.l.b16 %v149
    %v237 = vunpack.c.h.b16 %v149
    %v238 = vunpack.c.l.b16 %v150
    %v239 = vunpack.c.h.b16 %v150
    %v240 = vunpack.c.l.b16 %v151
    %v241 = vunpack.c.h.b16 %v151
    %v242 = vunpack.c.l.b16 %v152
    %v243 = vunpack.c.h.b16 %v152
    %v244 = vunpack.c.l.b16 %v153
    %v245 = vunpack.c.h.b16 %v153
    %v246 = vunpack.c.l.b16 %v154
    %v247 = vunpack.c.h.b16 %v154
    %v248 = vunpack.c.l.b16 %v155
    %v249 = vunpack.c.h.b16 %v155
    %v250 = vunpack.c.l.b16 %v156
    %v251 = vunpack.c.h.b16 %v156
    %v252 = vunpack.c.l.b16 %v157
    %v253 = vunpack.c.h.b16 %v157
    %v254 = vunpack.c.l.b16 %v158
    %v255 = vunpack.c.h.b16 %v158
    %v256 = vunpack.c.l.b16 %v159
    %v257 = vunpack.c.h.b16 %v159
    %v258 = vunpack.c.l.b16 %v160
    %v259 = vunpack.c.h.b16 %v160
    %v260 = vunpack.c.l.b16 %v161
    %v261 = vunpack.c.h.b16 %v161
    %v262 = vunpack.c.l.b16 %v162
    %v263 = vunpack.c.h.b16 %v162
    %v264 = vunpack.c.l.b16 %v163
    %v265 = vunpack.c.h.b16 %v163
    %v266 = vunpack.c.l.b16 %v164
    %v267 = vunpack.c.h.b16 %v164
    %v268 = vunpack.c.l.b16 %v165
    %v269 = vunpack.c.h.b16 %v165
    %v270 = vunpack.c.l.b16 %v166
    %v271 = vunpack.c.h.b16 %v166
    %v272 = vunpack.c.l.b16 %v167
    %v273 = vunpack.c.h.b16 %v167
    %v274 = vunpack.c.l.b16 %v168
    %v275 = vunpack.c.h.b16 %v168
    %v276 = vunpack.c.l.b16 %v169
    %v277 = vunpack.c.h.b16 %v169
    %v278 = vunpack.c.l.b16 %v170
    %v279 = vunpack.c.h.b16 %v170
    %v280 = vunpack.c.l.b16 %v171
    %v281 = vunpack.c.h.b16 %v171
    %v282 = vunpack.c.l.b16 %v172
    %v283 = vunpack.c.h.b16 %v172
    %v284 = vunpack.c.l.b16 %v173
    %v285 = vunpack.c.h.b16 %v173
    %v286 = vunpack.c.l.b16 %v174
    %v287 = vunpack.c.h.b16 %v174
    %v288 = vunpack.c.l.b16 %v175
    %v289 = vunpack.c.h.b16 %v175
    %v290 = vunpack.c.l.b16 %v176
    %v291 = vunpack.c.h.b16 %v176
    %v292 = vunpack.c.l.b16 %v177
    %v293 = vunpack.c.h.b16 %v177
    %v294 = vunpack.c.l.b16 %v178
    %v295 = vunpack.c.h.b16 %v178
    %v296 = vunpack.c.l.b16 %v179
    %v297 = vunpack.c.h.b16 %v179
    %v298 = vpack.c.b16 %v238, %v234
    %v299 = vpack.c.b16 %v239, %v235
    %v300 = vpack.c.b16 %v240, %v236
    %v301 = vpack.c.b16 %v241, %v237
    %v302 = vpack.c.b16 %v246, %v242
    %v303 = vpack.c.b16 %v247, %v243
    %v304 = vpack.c.b16 %v248, %v244
    %v305 = vpack.c.b16 %v249, %v245
    %v306 = vpack.c.b16 %v254, %v250
    %v307 = vpack.c.b16 %v255, %v251
    %v308 = vpack.c.b16 %v256, %v252
    %v309 = vpack.c.b16 %v257, %v253
    %v310 = vpack.c.b16 %v262, %v258
    %v311 = vpack.c.b16 %v263, %v259
    %v312 = vpack.c.b16 %v264, %v260
    %v313 = vpack.c.b16 %v265, %v261
    %v314 = vpack.c.b16 %v270, %v266
    %v315 = vpack.c.b16 %v271, %v267
    %v316 = vpack.c.b16 %v272, %v268
    %v317 = vpack.c.b16 %v273, %v269
    %v318 = vpack.c.b16 %v278, %v274
    %v319 = vpack.c.b16 %v279, %v275
    %v320 = vpack.c.b16 %v280, %v276
    %v321 = vpack.c.b16 %v281, %v277
    %v322 = vpack.c.b16 %v286, %v282
    %v323 = vpack.c.b16 %v287, %v283
    %v324 = vpack.c.b16 %v288, %v284
    %v325 = vpack.c.b16 %v289, %v285
    %v326 = vpack.c.b16 %v294, %v290
    %v327 = vpack.c.b16 %v295, %v291
    %v328 = vpack.c.b16 %v296, %v292
    %v329 = vpack.c.b16 %v297, %v293
    %362 = vmatprep.subr.bf16.mxu0 %v327
    %363 = vmatpush1.bf16.msra.mxu0 %v326
    %364 = vmatprep.subr.bf16.mxu0 %v323
    %365 = vmatpush1.bf16.msra.mxu0 %v322
    %366 = vmatprep.subr.bf16.mxu0 %v319
    %367 = vmatpush1.bf16.msra.mxu0 %v318
    %368 = vmatprep.subr.bf16.mxu0 %v315
    %369 = vmatpush1.bf16.msra.mxu0 %v314
    %370 = vmatprep.subr.bf16.mxu0 %v311
    %371 = vmatpush1.bf16.msra.mxu0 %v310
    %372 = vmatprep.subr.bf16.mxu0 %v307
    %373 = vmatpush1.bf16.msra.mxu0 %v306
    %374 = vmatprep.subr.bf16.mxu0 %v303
    %375 = vmatpush1.bf16.msra.mxu0 %v302
    %376 = vmatprep.subr.bf16.mxu0 %v299
    %377 = vmatpush1.bf16.msra.mxu0 %v298
    %378 = vmatprep.subr.bf16.mxu0 0
    %379 = vmatpush2.bf16.msra.mxu0 0
    %380 = vmatprep.subr.bf16.mxu0 0
    %381 = vmatpush2.bf16.msra.mxu0 0
    %382 = vmatprep.subr.bf16.mxu0 0
    %383 = vmatpush2.bf16.msra.mxu0 0
    %384 = vmatprep.subr.bf16.mxu0 0
    %385 = vmatpush2.bf16.msra.mxu0 0
    %386 = vmatprep.subr.bf16.mxu0 0
    %387 = vmatpush2.bf16.msra.mxu0 0
    %388 = vmatprep.subr.bf16.mxu0 0
    %389 = vmatpush2.bf16.msra.mxu0 0
    %390 = vmatprep.subr.bf16.mxu0 0
    %391 = vmatpush2.bf16.msra.mxu0 0
    %392 = vmatprep.subr.bf16.mxu0 0
    %393 = vmatpush2.bf16.msra.mxu0 0
    %394 = vmatprep.mubr.bf16.mxu0 0
    %395 = vmatmul.mubr.bf16.gmra.mxu0 %v147
    %v396 = vpop.f32.mrf.mxu0
    %v397 = vadd.f32 %v185, %v396
    %v398 = vpop.f32.mrf.mxu0
    %v399 = vadd.f32 %v189, %v398
    %v400 = vpop.f32.mrf.mxu0
    %v401 = vpop.f32.mrf.mxu0
    %402 = vdwg.mxu0
    %403 = vmatprep.subr.bf16.mxu0 %v329
    %404 = vmatpush1.bf16.msra.mxu0 %v328
    %405 = vmatprep.subr.bf16.mxu0 %v325
    %406 = vmatpush1.bf16.msra.mxu0 %v324
    %407 = vmatprep.subr.bf16.mxu0 %v321
    %408 = vmatpush1.bf16.msra.mxu0 %v320
    %409 = vmatprep.subr.bf16.mxu0 %v317
    %410 = vmatpush1.bf16.msra.mxu0 %v316
    %411 = vmatprep.subr.bf16.mxu0 %v313
    %412 = vmatpush1.bf16.msra.mxu0 %v312
    %413 = vmatprep.subr.bf16.mxu0 %v309
    %414 = vmatpush1.bf16.msra.mxu0 %v308
    %415 = vmatprep.subr.bf16.mxu0 %v305
    %416 = vmatpush1.bf16.msra.mxu0 %v304
    %417 = vmatprep.subr.bf16.mxu0 %v301
    %418 = vmatpush1.bf16.msra.mxu0 %v300
    %419 = vmatprep.subr.bf16.mxu0 0
    %420 = vmatpush2.bf16.msra.mxu0 0
    %421 = vmatprep.subr.bf16.mxu0 0
    %422 = vmatpush2.bf16.msra.mxu0 0
    %423 = vmatprep.subr.bf16.mxu0 0
    %424 = vmatpush2.bf16.msra.mxu0 0
    %425 = vmatprep.subr.bf16.mxu0 0
    %426 = vmatpush2.bf16.msra.mxu0 0
    %427 = vmatprep.subr.bf16.mxu0 0
    %428 = vmatpush2.bf16.msra.mxu0 0
    %429 = vmatprep.subr.bf16.mxu0 0
    %430 = vmatpush2.bf16.msra.mxu0 0
    %431 = vmatprep.subr.bf16.mxu0 0
    %432 = vmatpush2.bf16.msra.mxu0 0
    %433 = vmatprep.subr.bf16.mxu0 0
    %434 = vmatpush2.bf16.msra.mxu0 0
    %435 = vmatprep.mubr.bf16.mxu0 0
    %436 = vmatmul.mubr.bf16.gmra.mxu0 %v147
    %v437 = vpop.f32.mrf.mxu0
    %v438 = vadd.f32 %v193, %v437
    %v439 = vpop.f32.mrf.mxu0
    %v440 = vadd.f32 %v197, %v439
    %v441 = vpop.f32.mrf.mxu0
    %v442 = vpop.f32.mrf.mxu0
    %443 = vdwg.mxu0
    %v444 = vmax.f32 %v397, 0.0
    %v445 = vmax.f32 %v399, 0.0
    %v446 = vmax.f32 %v438, 0.0
    %v447 = vmax.f32 %v440, 0.0
    %v448 = vpack.c.bf16 %v444, %v444
    %v449 = vpack.c.bf16 %v445, %v445
    %v450 = vpack.c.bf16 %v446, %v446
    %v451 = vpack.c.bf16 %v447, %v447
    %v452 = vld [vmem:[#allocation4] sm:$0xff]
    %v453 = vld [vmem:[#allocation4 + $0x8] sm:$0xff]
    %v454 = vld [vmem:[#allocation4 + $0x10] sm:$0xff]
    %v455 = vld [vmem:[#allocation4 + $0x18] sm:$0xff]
    %v456 = vld [vmem:[#allocation4 + $0x20] sm:$0xff]
    %v457 = vld [vmem:[#allocation4 + $0x28] sm:$0xff]
    %v458 = vld [vmem:[#allocation4 + $0x30] sm:$0xff]
    %v459 = vld [vmem:[#allocation4 + $0x38] sm:$0xff]
    %v460 = vld [vmem:[#allocation4 + $0x40] sm:$0xff]
    %v461 = vld [vmem:[#allocation4 + $0x48] sm:$0xff]
    %v462 = vld [vmem:[#allocation4 + $0x50] sm:$0xff]
    %v463 = vld [vmem:[#allocation4 + $0x58] sm:$0xff]
    %v464 = vld [vmem:[#allocation4 + $0x60] sm:$0xff]
    %v465 = vld [vmem:[#allocation4 + $0x68] sm:$0xff]
    %v466 = vld [vmem:[#allocation4 + $0x70] sm:$0xff]
    %v467 = vld [vmem:[#allocation4 + $0x78] sm:$0xff]
    %v468 = vld [vmem:[#allocation4 + $0x80] sm:$0xff]
    %v469 = vld [vmem:[#allocation4 + $0x88] sm:$0xff]
    %v470 = vld [vmem:[#allocation4 + $0x90] sm:$0xff]
    %v471 = vld [vmem:[#allocation4 + $0x98] sm:$0xff]
    %v472 = vld [vmem:[#allocation4 + $0xa0] sm:$0xff]
    %v473 = vld [vmem:[#allocation4 + $0xa8] sm:$0xff]
    %v474 = vld [vmem:[#allocation4 + $0xb0] sm:$0xff]
    %v475 = vld [vmem:[#allocation4 + $0xb8] sm:$0xff]
    %v476 = vld [vmem:[#allocation4 + $0xc0] sm:$0xff]
    %v477 = vld [vmem:[#allocation4 + $0xc8] sm:$0xff]
    %v478 = vld [vmem:[#allocation4 + $0xd0] sm:$0xff]
    %v479 = vld [vmem:[#allocation4 + $0xd8] sm:$0xff]
    %v480 = vld [vmem:[#allocation4 + $0xe0] sm:$0xff]
    %v481 = vld [vmem:[#allocation4 + $0xe8] sm:$0xff]
    %v482 = vld [vmem:[#allocation4 + $0xf0] sm:$0xff]
    %v483 = vld [vmem:[#allocation4 + $0xf8] sm:$0xff]
    %v484 = vld [vmem:[#allocation4 + $0x100] sm:$0xff]
    %v485 = vld [vmem:[#allocation4 + $0x108] sm:$0xff]
    %v486 = vld [vmem:[#allocation4 + $0x110] sm:$0xff]
    %v487 = vld [vmem:[#allocation4 + $0x118] sm:$0xff]
    %v488 = vld [vmem:[#allocation4 + $0x120] sm:$0xff]
    %v489 = vld [vmem:[#allocation4 + $0x128] sm:$0xff]
    %v490 = vld [vmem:[#allocation4 + $0x130] sm:$0xff]
    %v491 = vld [vmem:[#allocation4 + $0x138] sm:$0xff]
    %v492 = vld [vmem:[#allocation4 + $0x140] sm:$0xff]
    %v493 = vld [vmem:[#allocation4 + $0x148] sm:$0xff]
    %v494 = vld [vmem:[#allocation4 + $0x150] sm:$0xff]
    %v495 = vld [vmem:[#allocation4 + $0x158] sm:$0xff]
    %v496 = vld [vmem:[#allocation4 + $0x160] sm:$0xff]
    %v497 = vld [vmem:[#allocation4 + $0x168] sm:$0xff]
    %v498 = vld [vmem:[#allocation4 + $0x170] sm:$0xff]
    %v499 = vld [vmem:[#allocation4 + $0x178] sm:$0xff]
    %v500 = vld [vmem:[#allocation4 + $0x180] sm:$0xff]
    %v501 = vld [vmem:[#allocation4 + $0x188] sm:$0xff]
    %v502 = vld [vmem:[#allocation4 + $0x190] sm:$0xff]
    %v503 = vld [vmem:[#allocation4 + $0x198] sm:$0xff]
    %v504 = vld [vmem:[#allocation4 + $0x1a0] sm:$0xff]
    %v505 = vld [vmem:[#allocation4 + $0x1a8] sm:$0xff]
    %v506 = vld [vmem:[#allocation4 + $0x1b0] sm:$0xff]
    %v507 = vld [vmem:[#allocation4 + $0x1b8] sm:$0xff]
    %v508 = vld [vmem:[#allocation4 + $0x1c0] sm:$0xff]
    %v509 = vld [vmem:[#allocation4 + $0x1c8] sm:$0xff]
    %v510 = vld [vmem:[#allocation4 + $0x1d0] sm:$0xff]
    %v511 = vld [vmem:[#allocation4 + $0x1d8] sm:$0xff]
    %v512 = vld [vmem:[#allocation4 + $0x1e0] sm:$0xff]
    %v513 = vld [vmem:[#allocation4 + $0x1e8] sm:$0xff]
    %v514 = vld [vmem:[#allocation4 + $0x1f0] sm:$0xff]
    %v515 = vld [vmem:[#allocation4 + $0x1f8] sm:$0xff]
    %v516 = vld [vmem:[#allocation4 + $0x200] sm:$0xff]
    %v517 = vld [vmem:[#allocation4 + $0x208] sm:$0xff]
    %v518 = vld [vmem:[#allocation4 + $0x210] sm:$0xff]
    %v519 = vld [vmem:[#allocation4 + $0x218] sm:$0xff]
    %v520 = vld [vmem:[#allocation4 + $0x220] sm:$0xff]
    %v521 = vld [vmem:[#allocation4 + $0x228] sm:$0xff]
    %v522 = vld [vmem:[#allocation4 + $0x230] sm:$0xff]
    %v523 = vld [vmem:[#allocation4 + $0x238] sm:$0xff]
    %v524 = vld [vmem:[#allocation4 + $0x240] sm:$0xff]
    %v525 = vld [vmem:[#allocation4 + $0x248] sm:$0xff]
    %v526 = vld [vmem:[#allocation4 + $0x250] sm:$0xff]
    %v527 = vld [vmem:[#allocation4 + $0x258] sm:$0xff]
    %v528 = vld [vmem:[#allocation4 + $0x260] sm:$0xff]
    %v529 = vld [vmem:[#allocation4 + $0x268] sm:$0xff]
    %v530 = vld [vmem:[#allocation4 + $0x270] sm:$0xff]
    %v531 = vld [vmem:[#allocation4 + $0x278] sm:$0xff]
    %v532 = vld [vmem:[#allocation4 + $0x280] sm:$0xff]
    %v533 = vld [vmem:[#allocation4 + $0x288] sm:$0xff]
    %v534 = vld [vmem:[#allocation4 + $0x290] sm:$0xff]
    %v535 = vld [vmem:[#allocation4 + $0x298] sm:$0xff]
    %v536 = vld [vmem:[#allocation4 + $0x2a0] sm:$0xff]
    %v537 = vld [vmem:[#allocation4 + $0x2a8] sm:$0xff]
    %v538 = vld [vmem:[#allocation4 + $0x2b0] sm:$0xff]
    %v539 = vld [vmem:[#allocation4 + $0x2b8] sm:$0xff]
    %v540 = vld [vmem:[#allocation4 + $0x2c0] sm:$0xff]
    %v541 = vld [vmem:[#allocation4 + $0x2c8] sm:$0xff]
    %v542 = vld [vmem:[#allocation4 + $0x2d0] sm:$0xff]
    %v543 = vld [vmem:[#allocation4 + $0x2d8] sm:$0xff]
    %v544 = vld [vmem:[#allocation4 + $0x2e0] sm:$0xff]
    %v545 = vld [vmem:[#allocation4 + $0x2e8] sm:$0xff]
    %v546 = vld [vmem:[#allocation4 + $0x2f0] sm:$0xff]
    %v547 = vld [vmem:[#allocation4 + $0x2f8] sm:$0xff]
    %v548 = vld [vmem:[#allocation4 + $0x300] sm:$0xff]
    %v549 = vld [vmem:[#allocation4 + $0x308] sm:$0xff]
    %v550 = vld [vmem:[#allocation4 + $0x310] sm:$0xff]
    %v551 = vld [vmem:[#allocation4 + $0x318] sm:$0xff]
    %v552 = vld [vmem:[#allocation4 + $0x320] sm:$0xff]
    %v553 = vld [vmem:[#allocation4 + $0x328] sm:$0xff]
    %v554 = vld [vmem:[#allocation4 + $0x330] sm:$0xff]
    %v555 = vld [vmem:[#allocation4 + $0x338] sm:$0xff]
    %v556 = vld [vmem:[#allocation4 + $0x340] sm:$0xff]
    %v557 = vld [vmem:[#allocation4 + $0x348] sm:$0xff]
    %v558 = vld [vmem:[#allocation4 + $0x350] sm:$0xff]
    %v559 = vld [vmem:[#allocation4 + $0x358] sm:$0xff]
    %v560 = vld [vmem:[#allocation4 + $0x360] sm:$0xff]
    %v561 = vld [vmem:[#allocation4 + $0x368] sm:$0xff]
    %v562 = vld [vmem:[#allocation4 + $0x370] sm:$0xff]
    %v563 = vld [vmem:[#allocation4 + $0x378] sm:$0xff]
    %v564 = vld [vmem:[#allocation4 + $0x380] sm:$0xff]
    %v565 = vld [vmem:[#allocation4 + $0x388] sm:$0xff]
    %v566 = vld [vmem:[#allocation4 + $0x390] sm:$0xff]
    %v567 = vld [vmem:[#allocation4 + $0x398] sm:$0xff]
    %v568 = vld [vmem:[#allocation4 + $0x3a0] sm:$0xff]
    %v569 = vld [vmem:[#allocation4 + $0x3a8] sm:$0xff]
    %v570 = vld [vmem:[#allocation4 + $0x3b0] sm:$0xff]
    %v571 = vld [vmem:[#allocation4 + $0x3b8] sm:$0xff]
    %v572 = vld [vmem:[#allocation4 + $0x3c0] sm:$0xff]
    %v573 = vld [vmem:[#allocation4 + $0x3c8] sm:$0xff]
    %v574 = vld [vmem:[#allocation4 + $0x3d0] sm:$0xff]
    %v575 = vld [vmem:[#allocation4 + $0x3d8] sm:$0xff]
    %v576 = vld [vmem:[#allocation4 + $0x3e0] sm:$0xff]
    %v577 = vld [vmem:[#allocation4 + $0x3e8] sm:$0xff]
    %v578 = vld [vmem:[#allocation4 + $0x3f0] sm:$0xff]
    %v579 = vld [vmem:[#allocation4 + $0x3f8] sm:$0xff]
    %v580 = vld [vmem:[%s4] sm:$0xf]
    %v582 = vlaneseq
    %v583 = vshrl.u32 %v582, 7
    %v584 = vsub.s32 0, %v583
    %v585 = vrot.slane %v580, %v584
    %v586 = vlaneseq
    %v587 = vshrl.u32 %v586, 7
    %v588 = vsub.s32 1, %v587
    %v589 = vrot.slane %v580, %v588
    %v590 = vlaneseq
    %v591 = vshrl.u32 %v590, 7
    %v592 = vsub.s32 2, %v591
    %v593 = vrot.slane %v580, %v592
    %v594 = vlaneseq
    %v595 = vshrl.u32 %v594, 7
    %v596 = vsub.s32 3, %v595
    %v597 = vrot.slane %v580, %v596
    %v730 = vunpack.c.l.b16 %v452
    %v731 = vunpack.c.h.b16 %v452
    %v732 = vunpack.c.l.b16 %v453
    %v733 = vunpack.c.h.b16 %v453
    %v734 = vunpack.c.l.b16 %v454
    %v735 = vunpack.c.h.b16 %v454
    %v736 = vunpack.c.l.b16 %v455
    %v737 = vunpack.c.h.b16 %v455
    %v738 = vunpack.c.l.b16 %v456
    %v739 = vunpack.c.h.b16 %v456
    %v740 = vunpack.c.l.b16 %v457
    %v741 = vunpack.c.h.b16 %v457
    %v742 = vunpack.c.l.b16 %v458
    %v743 = vunpack.c.h.b16 %v458
    %v744 = vunpack.c.l.b16 %v459
    %v745 = vunpack.c.h.b16 %v459
    %v746 = vunpack.c.l.b16 %v460
    %v747 = vunpack.c.h.b16 %v460
    %v748 = vunpack.c.l.b16 %v461
    %v749 = vunpack.c.h.b16 %v461
    %v750 = vunpack.c.l.b16 %v462
    %v751 = vunpack.c.h.b16 %v462
    %v752 = vunpack.c.l.b16 %v463
    %v753 = vunpack.c.h.b16 %v463
    %v754 = vunpack.c.l.b16 %v464
    %v755 = vunpack.c.h.b16 %v464
    %v756 = vunpack.c.l.b16 %v465
    %v757 = vunpack.c.h.b16 %v465
    %v758 = vunpack.c.l.b16 %v466
    %v759 = vunpack.c.h.b16 %v466
    %v760 = vunpack.c.l.b16 %v467
    %v761 = vunpack.c.h.b16 %v467
    %v762 = vunpack.c.l.b16 %v468
    %v763 = vunpack.c.h.b16 %v468
    %v764 = vunpack.c.l.b16 %v469
    %v765 = vunpack.c.h.b16 %v469
    %v766 = vunpack.c.l.b16 %v470
    %v767 = vunpack.c.h.b16 %v470
    %v768 = vunpack.c.l.b16 %v471
    %v769 = vunpack.c.h.b16 %v471
    %v770 = vunpack.c.l.b16 %v472
    %v771 = vunpack.c.h.b16 %v472
    %v772 = vunpack.c.l.b16 %v473
    %v773 = vunpack.c.h.b16 %v473
    %v774 = vunpack.c.l.b16 %v474
    %v775 = vunpack.c.h.b16 %v474
    %v776 = vunpack.c.l.b16 %v475
    %v777 = vunpack.c.h.b16 %v475
    %v778 = vunpack.c.l.b16 %v476
    %v779 = vunpack.c.h.b16 %v476
    %v780 = vunpack.c.l.b16 %v477
    %v781 = vunpack.c.h.b16 %v477
    %v782 = vunpack.c.l.b16 %v478
    %v783 = vunpack.c.h.b16 %v478
    %v784 = vunpack.c.l.b16 %v479
    %v785 = vunpack.c.h.b16 %v479
    %v786 = vunpack.c.l.b16 %v480
    %v787 = vunpack.c.h.b16 %v480
    %v788 = vunpack.c.l.b16 %v481
    %v789 = vunpack.c.h.b16 %v481
    %v790 = vunpack.c.l.b16 %v482
    %v791 = vunpack.c.h.b16 %v482
    %v792 = vunpack.c.l.b16 %v483
    %v793 = vunpack.c.h.b16 %v483
    %v794 = vunpack.c.l.b16 %v484
    %v795 = vunpack.c.h.b16 %v484
    %v796 = vunpack.c.l.b16 %v485
    %v797 = vunpack.c.h.b16 %v485
    %v798 = vunpack.c.l.b16 %v486
    %v799 = vunpack.c.h.b16 %v486
    %v800 = vunpack.c.l.b16 %v487
    %v801 = vunpack.c.h.b16 %v487
    %v802 = vunpack.c.l.b16 %v488
    %v803 = vunpack.c.h.b16 %v488
    %v804 = vunpack.c.l.b16 %v489
    %v805 = vunpack.c.h.b16 %v489
    %v806 = vunpack.c.l.b16 %v490
    %v807 = vunpack.c.h.b16 %v490
    %v808 = vunpack.c.l.b16 %v491
    %v809 = vunpack.c.h.b16 %v491
    %v810 = vunpack.c.l.b16 %v492
    %v811 = vunpack.c.h.b16 %v492
    %v812 = vunpack.c.l.b16 %v493
    %v813 = vunpack.c.h.b16 %v493
    %v814 = vunpack.c.l.b16 %v494
    %v815 = vunpack.c.h.b16 %v494
    %v816 = vunpack.c.l.b16 %v495
    %v817 = vunpack.c.h.b16 %v495
    %v818 = vunpack.c.l.b16 %v496
    %v819 = vunpack.c.h.b16 %v496
    %v820 = vunpack.c.l.b16 %v497
    %v821 = vunpack.c.h.b16 %v497
    %v822 = vunpack.c.l.b16 %v498
    %v823 = vunpack.c.h.b16 %v498
    %v824 = vunpack.c.l.b16 %v499
    %v825 = vunpack.c.h.b16 %v499
    %v826 = vunpack.c.l.b16 %v500
    %v827 = vunpack.c.h.b16 %v500
    %v828 = vunpack.c.l.b16 %v501
    %v829 = vunpack.c.h.b16 %v501
    %v830 = vunpack.c.l.b16 %v502
    %v831 = vunpack.c.h.b16 %v502
    %v832 = vunpack.c.l.b16 %v503
    %v833 = vunpack.c.h.b16 %v503
    %v834 = vunpack.c.l.b16 %v504
    %v835 = vunpack.c.h.b16 %v504
    %v836 = vunpack.c.l.b16 %v505
    %v837 = vunpack.c.h.b16 %v505
    %v838 = vunpack.c.l.b16 %v506
    %v839 = vunpack.c.h.b16 %v506
    %v840 = vunpack.c.l.b16 %v507
    %v841 = vunpack.c.h.b16 %v507
    %v842 = vunpack.c.l.b16 %v508
    %v843 = vunpack.c.h.b16 %v508
    %v844 = vunpack.c.l.b16 %v509
    %v845 = vunpack.c.h.b16 %v509
    %v846 = vunpack.c.l.b16 %v510
    %v847 = vunpack.c.h.b16 %v510
    %v848 = vunpack.c.l.b16 %v511
    %v849 = vunpack.c.h.b16 %v511
    %v850 = vunpack.c.l.b16 %v512
    %v851 = vunpack.c.h.b16 %v512
    %v852 = vunpack.c.l.b16 %v513
    %v853 = vunpack.c.h.b16 %v513
    %v854 = vunpack.c.l.b16 %v514
    %v855 = vunpack.c.h.b16 %v514
    %v856 = vunpack.c.l.b16 %v515
    %v857 = vunpack.c.h.b16 %v515
    %v858 = vunpack.c.l.b16 %v516
    %v859 = vunpack.c.h.b16 %v516
    %v860 = vunpack.c.l.b16 %v517
    %v861 = vunpack.c.h.b16 %v517
    %v862 = vunpack.c.l.b16 %v518
    %v863 = vunpack.c.h.b16 %v518
    %v864 = vunpack.c.l.b16 %v519
    %v865 = vunpack.c.h.b16 %v519
    %v866 = vunpack.c.l.b16 %v520
    %v867 = vunpack.c.h.b16 %v520
    %v868 = vunpack.c.l.b16 %v521
    %v869 = vunpack.c.h.b16 %v521
    %v870 = vunpack.c.l.b16 %v522
    %v871 = vunpack.c.h.b16 %v522
    %v872 = vunpack.c.l.b16 %v523
    %v873 = vunpack.c.h.b16 %v523
    %v874 = vunpack.c.l.b16 %v524
    %v875 = vunpack.c.h.b16 %v524
    %v876 = vunpack.c.l.b16 %v525
    %v877 = vunpack.c.h.b16 %v525
    %v878 = vunpack.c.l.b16 %v526
    %v879 = vunpack.c.h.b16 %v526
    %v880 = vunpack.c.l.b16 %v527
    %v881 = vunpack.c.h.b16 %v527
    %v882 = vunpack.c.l.b16 %v528
    %v883 = vunpack.c.h.b16 %v528
    %v884 = vunpack.c.l.b16 %v529
    %v885 = vunpack.c.h.b16 %v529
    %v886 = vunpack.c.l.b16 %v530
    %v887 = vunpack.c.h.b16 %v530
    %v888 = vunpack.c.l.b16 %v531
    %v889 = vunpack.c.h.b16 %v531
    %v890 = vunpack.c.l.b16 %v532
    %v891 = vunpack.c.h.b16 %v532
    %v892 = vunpack.c.l.b16 %v533
    %v893 = vunpack.c.h.b16 %v533
    %v894 = vunpack.c.l.b16 %v534
    %v895 = vunpack.c.h.b16 %v534
    %v896 = vunpack.c.l.b16 %v535
    %v897 = vunpack.c.h.b16 %v535
    %v898 = vunpack.c.l.b16 %v536
    %v899 = vunpack.c.h.b16 %v536
    %v900 = vunpack.c.l.b16 %v537
    %v901 = vunpack.c.h.b16 %v537
    %v902 = vunpack.c.l.b16 %v538
    %v903 = vunpack.c.h.b16 %v538
    %v904 = vunpack.c.l.b16 %v539
    %v905 = vunpack.c.h.b16 %v539
    %v906 = vunpack.c.l.b16 %v540
    %v907 = vunpack.c.h.b16 %v540
    %v908 = vunpack.c.l.b16 %v541
    %v909 = vunpack.c.h.b16 %v541
    %v910 = vunpack.c.l.b16 %v542
    %v911 = vunpack.c.h.b16 %v542
    %v912 = vunpack.c.l.b16 %v543
    %v913 = vunpack.c.h.b16 %v543
    %v914 = vunpack.c.l.b16 %v544
    %v915 = vunpack.c.h.b16 %v544
    %v916 = vunpack.c.l.b16 %v545
    %v917 = vunpack.c.h.b16 %v545
    %v918 = vunpack.c.l.b16 %v546
    %v919 = vunpack.c.h.b16 %v546
    %v920 = vunpack.c.l.b16 %v547
    %v921 = vunpack.c.h.b16 %v547
    %v922 = vunpack.c.l.b16 %v548
    %v923 = vunpack.c.h.b16 %v548
    %v924 = vunpack.c.l.b16 %v549
    %v925 = vunpack.c.h.b16 %v549
    %v926 = vunpack.c.l.b16 %v550
    %v927 = vunpack.c.h.b16 %v550
    %v928 = vunpack.c.l.b16 %v551
    %v929 = vunpack.c.h.b16 %v551
    %v930 = vunpack.c.l.b16 %v552
    %v931 = vunpack.c.h.b16 %v552
    %v932 = vunpack.c.l.b16 %v553
    %v933 = vunpack.c.h.b16 %v553
    %v934 = vunpack.c.l.b16 %v554
    %v935 = vunpack.c.h.b16 %v554
    %v936 = vunpack.c.l.b16 %v555
    %v937 = vunpack.c.h.b16 %v555
    %v938 = vunpack.c.l.b16 %v556
    %v939 = vunpack.c.h.b16 %v556
    %v940 = vunpack.c.l.b16 %v557
    %v941 = vunpack.c.h.b16 %v557
    %v942 = vunpack.c.l.b16 %v558
    %v943 = vunpack.c.h.b16 %v558
    %v944 = vunpack.c.l.b16 %v559
    %v945 = vunpack.c.h.b16 %v559
    %v946 = vunpack.c.l.b16 %v560
    %v947 = vunpack.c.h.b16 %v560
    %v948 = vunpack.c.l.b16 %v561
    %v949 = vunpack.c.h.b16 %v561
    %v950 = vunpack.c.l.b16 %v562
    %v951 = vunpack.c.h.b16 %v562
    %v952 = vunpack.c.l.b16 %v563
    %v953 = vunpack.c.h.b16 %v563
    %v954 = vunpack.c.l.b16 %v564
    %v955 = vunpack.c.h.b16 %v564
    %v956 = vunpack.c.l.b16 %v565
    %v957 = vunpack.c.h.b16 %v565
    %v958 = vunpack.c.l.b16 %v566
    %v959 = vunpack.c.h.b16 %v566
    %v960 = vunpack.c.l.b16 %v567
    %v961 = vunpack.c.h.b16 %v567
    %v962 = vunpack.c.l.b16 %v568
    %v963 = vunpack.c.h.b16 %v568
    %v964 = vunpack.c.l.b16 %v569
    %v965 = vunpack.c.h.b16 %v569
    %v966 = vunpack.c.l.b16 %v570
    %v967 = vunpack.c.h.b16 %v570
    %v968 = vunpack.c.l.b16 %v571
    %v969 = vunpack.c.h.b16 %v571
    %v970 = vunpack.c.l.b16 %v572
    %v971 = vunpack.c.h.b16 %v572
    %v972 = vunpack.c.l.b16 %v573
    %v973 = vunpack.c.h.b16 %v573
    %v974 = vunpack.c.l.b16 %v574
    %v975 = vunpack.c.h.b16 %v574
    %v976 = vunpack.c.l.b16 %v575
    %v977 = vunpack.c.h.b16 %v575
    %v978 = vunpack.c.l.b16 %v576
    %v979 = vunpack.c.h.b16 %v576
    %v980 = vunpack.c.l.b16 %v577
    %v981 = vunpack.c.h.b16 %v577
    %v982 = vunpack.c.l.b16 %v578
    %v983 = vunpack.c.h.b16 %v578
    %v984 = vunpack.c.l.b16 %v579
    %v985 = vunpack.c.h.b16 %v579
    %v986 = vpack.c.b16 %v734, %v730
    %v987 = vpack.c.b16 %v735, %v731
    %v988 = vpack.c.b16 %v736, %v732
    %v989 = vpack.c.b16 %v737, %v733
    %v990 = vpack.c.b16 %v742, %v738
    %v991 = vpack.c.b16 %v743, %v739
    %v992 = vpack.c.b16 %v744, %v740
    %v993 = vpack.c.b16 %v745, %v741
    %v994 = vpack.c.b16 %v750, %v746
    %v995 = vpack.c.b16 %v751, %v747
    %v996 = vpack.c.b16 %v752, %v748
    %v997 = vpack.c.b16 %v753, %v749
    %v998 = vpack.c.b16 %v758, %v754
    %v999 = vpack.c.b16 %v759, %v755
    %v1000 = vpack.c.b16 %v760, %v756
    %v1001 = vpack.c.b16 %v761, %v757
    %v1002 = vpack.c.b16 %v766, %v762
    %v1003 = vpack.c.b16 %v767, %v763
    %v1004 = vpack.c.b16 %v768, %v764
    %v1005 = vpack.c.b16 %v769, %v765
    %v1006 = vpack.c.b16 %v774, %v770
    %v1007 = vpack.c.b16 %v775, %v771
    %v1008 = vpack.c.b16 %v776, %v772
    %v1009 = vpack.c.b16 %v777, %v773
    %v1010 = vpack.c.b16 %v782, %v778
    %v1011 = vpack.c.b16 %v783, %v779
    %v1012 = vpack.c.b16 %v784, %v780
    %v1013 = vpack.c.b16 %v785, %v781
    %v1014 = vpack.c.b16 %v790, %v786
    %v1015 = vpack.c.b16 %v791, %v787
    %v1016 = vpack.c.b16 %v792, %v788
    %v1017 = vpack.c.b16 %v793, %v789
    %v1018 = vpack.c.b16 %v798, %v794
    %v1019 = vpack.c.b16 %v799, %v795
    %v1020 = vpack.c.b16 %v800, %v796
    %v1021 = vpack.c.b16 %v801, %v797
    %v1022 = vpack.c.b16 %v806, %v802
    %v1023 = vpack.c.b16 %v807, %v803
    %v1024 = vpack.c.b16 %v808, %v804
    %v1025 = vpack.c.b16 %v809, %v805
    %v1026 = vpack.c.b16 %v814, %v810
    %v1027 = vpack.c.b16 %v815, %v811
    %v1028 = vpack.c.b16 %v816, %v812
    %v1029 = vpack.c.b16 %v817, %v813
    %v1030 = vpack.c.b16 %v822, %v818
    %v1031 = vpack.c.b16 %v823, %v819
    %v1032 = vpack.c.b16 %v824, %v820
    %v1033 = vpack.c.b16 %v825, %v821
    %v1034 = vpack.c.b16 %v830, %v826
    %v1035 = vpack.c.b16 %v831, %v827
    %v1036 = vpack.c.b16 %v832, %v828
    %v1037 = vpack.c.b16 %v833, %v829
    %v1038 = vpack.c.b16 %v838, %v834
    %v1039 = vpack.c.b16 %v839, %v835
    %v1040 = vpack.c.b16 %v840, %v836
    %v1041 = vpack.c.b16 %v841, %v837
    %v1042 = vpack.c.b16 %v846, %v842
    %v1043 = vpack.c.b16 %v847, %v843
    %v1044 = vpack.c.b16 %v848, %v844
    %v1045 = vpack.c.b16 %v849, %v845
    %v1046 = vpack.c.b16 %v854, %v850
    %v1047 = vpack.c.b16 %v855, %v851
    %v1048 = vpack.c.b16 %v856, %v852
    %v1049 = vpack.c.b16 %v857, %v853
    %v1050 = vpack.c.b16 %v862, %v858
    %v1051 = vpack.c.b16 %v863, %v859
    %v1052 = vpack.c.b16 %v864, %v860
    %v1053 = vpack.c.b16 %v865, %v861
    %v1054 = vpack.c.b16 %v870, %v866
    %v1055 = vpack.c.b16 %v871, %v867
    %v1056 = vpack.c.b16 %v872, %v868
    %v1057 = vpack.c.b16 %v873, %v869
    %v1058 = vpack.c.b16 %v878, %v874
    %v1059 = vpack.c.b16 %v879, %v875
    %v1060 = vpack.c.b16 %v880, %v876
    %v1061 = vpack.c.b16 %v881, %v877
    %v1062 = vpack.c.b16 %v886, %v882
    %v1063 = vpack.c.b16 %v887, %v883
    %v1064 = vpack.c.b16 %v888, %v884
    %v1065 = vpack.c.b16 %v889, %v885
    %v1066 = vpack.c.b16 %v894, %v890
    %v1067 = vpack.c.b16 %v895, %v891
    %v1068 = vpack.c.b16 %v896, %v892
    %v1069 = vpack.c.b16 %v897, %v893
    %v1070 = vpack.c.b16 %v902, %v898
    %v1071 = vpack.c.b16 %v903, %v899
    %v1072 = vpack.c.b16 %v904, %v900
    %v1073 = vpack.c.b16 %v905, %v901
    %v1074 = vpack.c.b16 %v910, %v906
    %v1075 = vpack.c.b16 %v911, %v907
    %v1076 = vpack.c.b16 %v912, %v908
    %v1077 = vpack.c.b16 %v913, %v909
    %v1078 = vpack.c.b16 %v918, %v914
    %v1079 = vpack.c.b16 %v919, %v915
    %v1080 = vpack.c.b16 %v920, %v916
    %v1081 = vpack.c.b16 %v921, %v917
    %v1082 = vpack.c.b16 %v926, %v922
    %v1083 = vpack.c.b16 %v927, %v923
    %v1084 = vpack.c.b16 %v928, %v924
    %v1085 = vpack.c.b16 %v929, %v925
    %v1086 = vpack.c.b16 %v934, %v930
    %v1087 = vpack.c.b16 %v935, %v931
    %v1088 = vpack.c.b16 %v936, %v932
    %v1089 = vpack.c.b16 %v937, %v933
    %v1090 = vpack.c.b16 %v942, %v938
    %v1091 = vpack.c.b16 %v943, %v939
    %v1092 = vpack.c.b16 %v944, %v940
    %v1093 = vpack.c.b16 %v945, %v941
    %v1094 = vpack.c.b16 %v950, %v946
    %v1095 = vpack.c.b16 %v951, %v947
    %v1096 = vpack.c.b16 %v952, %v948
    %v1097 = vpack.c.b16 %v953, %v949
    %v1098 = vpack.c.b16 %v958, %v954
    %v1099 = vpack.c.b16 %v959, %v955
    %v1100 = vpack.c.b16 %v960, %v956
    %v1101 = vpack.c.b16 %v961, %v957
    %v1102 = vpack.c.b16 %v966, %v962
    %v1103 = vpack.c.b16 %v967, %v963
    %v1104 = vpack.c.b16 %v968, %v964
    %v1105 = vpack.c.b16 %v969, %v965
    %v1106 = vpack.c.b16 %v974, %v970
    %v1107 = vpack.c.b16 %v975, %v971
    %v1108 = vpack.c.b16 %v976, %v972
    %v1109 = vpack.c.b16 %v977, %v973
    %v1110 = vpack.c.b16 %v982, %v978
    %v1111 = vpack.c.b16 %v983, %v979
    %v1112 = vpack.c.b16 %v984, %v980
    %v1113 = vpack.c.b16 %v985, %v981
    %1242 = vmatprep.subr.bf16.mxu0 %v1015
    %1243 = vmatpush1.bf16.msra.mxu0 %v1014
    %1244 = vmatprep.subr.bf16.mxu0 %v1011
    %1245 = vmatpush1.bf16.msra.mxu0 %v1010
    %1246 = vmatprep.subr.bf16.mxu0 %v1007
    %1247 = vmatpush1.bf16.msra.mxu0 %v1006
    %1248 = vmatprep.subr.bf16.mxu0 %v1003
    %1249 = vmatpush1.bf16.msra.mxu0 %v1002
    %1250 = vmatprep.subr.bf16.mxu0 %v999
    %1251 = vmatpush1.bf16.msra.mxu0 %v998
    %1252 = vmatprep.subr.bf16.mxu0 %v995
    %1253 = vmatpush1.bf16.msra.mxu0 %v994
    %1254 = vmatprep.subr.bf16.mxu0 %v991
    %1255 = vmatpush1.bf16.msra.mxu0 %v990
    %1256 = vmatprep.subr.bf16.mxu0 %v987
    %1257 = vmatpush1.bf16.msra.mxu0 %v986
    %1258 = vmatprep.subr.bf16.mxu0 %v1047
    %1259 = vmatpush2.bf16.msra.mxu0 %v1046
    %1260 = vmatprep.subr.bf16.mxu0 %v1043
    %1261 = vmatpush2.bf16.msra.mxu0 %v1042
    %1262 = vmatprep.subr.bf16.mxu0 %v1039
    %1263 = vmatpush2.bf16.msra.mxu0 %v1038
    %1264 = vmatprep.subr.bf16.mxu0 %v1035
    %1265 = vmatpush2.bf16.msra.mxu0 %v1034
    %1266 = vmatprep.subr.bf16.mxu0 %v1031
    %1267 = vmatpush2.bf16.msra.mxu0 %v1030
    %1268 = vmatprep.subr.bf16.mxu0 %v1027
    %1269 = vmatpush2.bf16.msra.mxu0 %v1026
    %1270 = vmatprep.subr.bf16.mxu0 %v1023
    %1271 = vmatpush2.bf16.msra.mxu0 %v1022
    %1272 = vmatprep.subr.bf16.mxu0 %v1019
    %1273 = vmatpush2.bf16.msra.mxu0 %v1018
    %1274 = vmatprep.mubr.bf16.mxu0 %v449
    %1275 = vmatmul.mubr.bf16.gmra.mxu0 %v448
    %v1276 = vpop.f32.mrf.mxu0
    %v1277 = vadd.f32 %v585, %v1276
    %v1278 = vpop.f32.mrf.mxu0
    %v1279 = vadd.f32 %v589, %v1278
    %v1280 = vpop.f32.mrf.mxu0
    %v1281 = vpop.f32.mrf.mxu0
    %1282 = vdwg.mxu0
    %1283 = vmatprep.subr.bf16.mxu0 %v1079
    %1284 = vmatpush1.bf16.msra.mxu0 %v1078
    %1285 = vmatprep.subr.bf16.mxu0 %v1075
    %1286 = vmatpush1.bf16.msra.mxu0 %v1074
    %1287 = vmatprep.subr.bf16.mxu0 %v1071
    %1288 = vmatpush1.bf16.msra.mxu0 %v1070
    %1289 = vmatprep.subr.bf16.mxu0 %v1067
    %1290 = vmatpush1.bf16.msra.mxu0 %v1066
    %1291 = vmatprep.subr.bf16.mxu0 %v1063
    %1292 = vmatpush1.bf16.msra.mxu0 %v1062
    %1293 = vmatprep.subr.bf16.mxu0 %v1059
    %1294 = vmatpush1.bf16.msra.mxu0 %v1058
    %1295 = vmatprep.subr.bf16.mxu0 %v1055
    %1296 = vmatpush1.bf16.msra.mxu0 %v1054
    %1297 = vmatprep.subr.bf16.mxu0 %v1051
    %1298 = vmatpush1.bf16.msra.mxu0 %v1050
    %1299 = vmatprep.subr.bf16.mxu0 %v1111
    %1300 = vmatpush2.bf16.msra.mxu0 %v1110
    %1301 = vmatprep.subr.bf16.mxu0 %v1107
    %1302 = vmatpush2.bf16.msra.mxu0 %v1106
    %1303 = vmatprep.subr.bf16.mxu0 %v1103
    %1304 = vmatpush2.bf16.msra.mxu0 %v1102
    %1305 = vmatprep.subr.bf16.mxu0 %v1099
    %1306 = vmatpush2.bf16.msra.mxu0 %v1098
    %1307 = vmatprep.subr.bf16.mxu0 %v1095
    %1308 = vmatpush2.bf16.msra.mxu0 %v1094
    %1309 = vmatprep.subr.bf16.mxu0 %v1091
    %1310 = vmatpush2.bf16.msra.mxu0 %v1090
    %1311 = vmatprep.subr.bf16.mxu0 %v1087
    %1312 = vmatpush2.bf16.msra.mxu0 %v1086
    %1313 = vmatprep.subr.bf16.mxu0 %v1083
    %1314 = vmatpush2.bf16.msra.mxu0 %v1082
    %1315 = vmatprep.mubr.bf16.mxu0 %v451
    %1316 = vmatmul.mubr.bf16.gmra.mxu0 %v450
    %v1317 = vpop.f32.mrf.mxu0
    %v1318 = vadd.f32 %v1277, %v1317
    %v1319 = vpop.f32.mrf.mxu0
    %v1320 = vadd.f32 %v1279, %v1319
    %v1321 = vpop.f32.mrf.mxu0
    %v1322 = vpop.f32.mrf.mxu0
    %1323 = vdwg.mxu0
    %1324 = vmatprep.subr.bf16.mxu0 %v1017
    %1325 = vmatpush1.bf16.msra.mxu0 %v1016
    %1326 = vmatprep.subr.bf16.mxu0 %v1013
    %1327 = vmatpush1.bf16.msra.mxu0 %v1012
    %1328 = vmatprep.subr.bf16.mxu0 %v1009
    %1329 = vmatpush1.bf16.msra.mxu0 %v1008
    %1330 = vmatprep.subr.bf16.mxu0 %v1005
    %1331 = vmatpush1.bf16.msra.mxu0 %v1004
    %1332 = vmatprep.subr.bf16.mxu0 %v1001
    %1333 = vmatpush1.bf16.msra.mxu0 %v1000
    %1334 = vmatprep.subr.bf16.mxu0 %v997
    %1335 = vmatpush1.bf16.msra.mxu0 %v996
    %1336 = vmatprep.subr.bf16.mxu0 %v993
    %1337 = vmatpush1.bf16.msra.mxu0 %v992
    %1338 = vmatprep.subr.bf16.mxu0 %v989
    %1339 = vmatpush1.bf16.msra.mxu0 %v988
    %1340 = vmatprep.subr.bf16.mxu0 %v1049
    %1341 = vmatpush2.bf16.msra.mxu0 %v1048
    %1342 = vmatprep.subr.bf16.mxu0 %v1045
    %1343 = vmatpush2.bf16.msra.mxu0 %v1044
    %1344 = vmatprep.subr.bf16.mxu0 %v1041
    %1345 = vmatpush2.bf16.msra.mxu0 %v1040
    %1346 = vmatprep.subr.bf16.mxu0 %v1037
    %1347 = vmatpush2.bf16.msra.mxu0 %v1036
    %1348 = vmatprep.subr.bf16.mxu0 %v1033
    %1349 = vmatpush2.bf16.msra.mxu0 %v1032
    %1350 = vmatprep.subr.bf16.mxu0 %v1029
    %1351 = vmatpush2.bf16.msra.mxu0 %v1028
    %1352 = vmatprep.subr.bf16.mxu0 %v1025
    %1353 = vmatpush2.bf16.msra.mxu0 %v1024
    %1354 = vmatprep.subr.bf16.mxu0 %v1021
    %1355 = vmatpush2.bf16.msra.mxu0 %v1020
    %1356 = vmatprep.mubr.bf16.mxu0 %v449
    %1357 = vmatmul.mubr.bf16.gmra.mxu0 %v448
    %v1358 = vpop.f32.mrf.mxu0
    %v1359 = vadd.f32 %v593, %v1358
    %v1360 = vpop.f32.mrf.mxu0
    %v1361 = vadd.f32 %v597, %v1360
    %v1362 = vpop.f32.mrf.mxu0
    %v1363 = vpop.f32.mrf.mxu0
    %1364 = vdwg.mxu0
    %1365 = vmatprep.subr.bf16.mxu0 %v1081
    %1366 = vmatpush1.bf16.msra.mxu0 %v1080
    %1367 = vmatprep.subr.bf16.mxu0 %v1077
    %1368 = vmatpush1.bf16.msra.mxu0 %v1076
    %1369 = vmatprep.subr.bf16.mxu0 %v1073
    %1370 = vmatpush1.bf16.msra.mxu0 %v1072
    %1371 = vmatprep.subr.bf16.mxu0 %v1069
    %1372 = vmatpush1.bf16.msra.mxu0 %v1068
    %1373 = vmatprep.subr.bf16.mxu0 %v1065
    %1374 = vmatpush1.bf16.msra.mxu0 %v1064
    %1375 = vmatprep.subr.bf16.mxu0 %v1061
    %1376 = vmatpush1.bf16.msra.mxu0 %v1060
    %1377 = vmatprep.subr.bf16.mxu0 %v1057
    %1378 = vmatpush1.bf16.msra.mxu0 %v1056
    %1379 = vmatprep.subr.bf16.mxu0 %v1053
    %1380 = vmatpush1.bf16.msra.mxu0 %v1052
    %1381 = vmatprep.subr.bf16.mxu0 %v1113
    %1382 = vmatpush2.bf16.msra.mxu0 %v1112
    %1383 = vmatprep.subr.bf16.mxu0 %v1109
    %1384 = vmatpush2.bf16.msra.mxu0 %v1108
    %1385 = vmatprep.subr.bf16.mxu0 %v1105
    %1386 = vmatpush2.bf16.msra.mxu0 %v1104
    %1387 = vmatprep.subr.bf16.mxu0 %v1101
    %1388 = vmatpush2.bf16.msra.mxu0 %v1100
    %1389 = vmatprep.subr.bf16.mxu0 %v1097
    %1390 = vmatpush2.bf16.msra.mxu0 %v1096
    %1391 = vmatprep.subr.bf16.mxu0 %v1093
    %1392 = vmatpush2.bf16.msra.mxu0 %v1092
    %1393 = vmatprep.subr.bf16.mxu0 %v1089
    %1394 = vmatpush2.bf16.msra.mxu0 %v1088
    %1395 = vmatprep.subr.bf16.mxu0 %v1085
    %1396 = vmatpush2.bf16.msra.mxu0 %v1084
    %1397 = vmatprep.mubr.bf16.mxu0 %v451
    %1398 = vmatmul.mubr.bf16.gmra.mxu0 %v450
    %v1399 = vpop.f32.mrf.mxu0
    %v1400 = vadd.f32 %v1359, %v1399
    %v1401 = vpop.f32.mrf.mxu0
    %v1402 = vadd.f32 %v1361, %v1401
    %v1403 = vpop.f32.mrf.mxu0
    %v1404 = vpop.f32.mrf.mxu0
    %1405 = vdwg.mxu0
    %v1406 = vmax.f32 %v1318, 0.0
    %v1407 = vmax.f32 %v1320, 0.0
    %v1408 = vmax.f32 %v1400, 0.0
    %v1409 = vmax.f32 %v1402, 0.0
    %v1410 = vpack.c.bf16 %v1406, %v1406
    %v1411 = vpack.c.bf16 %v1407, %v1407
    %v1412 = vpack.c.bf16 %v1408, %v1408
    %v1413 = vpack.c.bf16 %v1409, %v1409
    %v1414 = vld [vmem:[#allocation6] sm:$0xff]
    %v1415 = vld [vmem:[#allocation6 + $0x8] sm:$0xff]
    %v1416 = vld [vmem:[#allocation6 + $0x10] sm:$0xff]
    %v1417 = vld [vmem:[#allocation6 + $0x18] sm:$0xff]
    %v1418 = vld [vmem:[#allocation6 + $0x20] sm:$0xff]
    %v1419 = vld [vmem:[#allocation6 + $0x28] sm:$0xff]
    %v1420 = vld [vmem:[#allocation6 + $0x30] sm:$0xff]
    %v1421 = vld [vmem:[#allocation6 + $0x38] sm:$0xff]
    %v1422 = vld [vmem:[#allocation6 + $0x40] sm:$0xff]
    %v1423 = vld [vmem:[#allocation6 + $0x48] sm:$0xff]
    %v1424 = vld [vmem:[#allocation6 + $0x50] sm:$0xff]
    %v1425 = vld [vmem:[#allocation6 + $0x58] sm:$0xff]
    %v1426 = vld [vmem:[#allocation6 + $0x60] sm:$0xff]
    %v1427 = vld [vmem:[#allocation6 + $0x68] sm:$0xff]
    %v1428 = vld [vmem:[#allocation6 + $0x70] sm:$0xff]
    %v1429 = vld [vmem:[#allocation6 + $0x78] sm:$0xff]
    %v1430 = vld [vmem:[#allocation6 + $0x80] sm:$0xff]
    %v1431 = vld [vmem:[#allocation6 + $0x88] sm:$0xff]
    %v1432 = vld [vmem:[#allocation6 + $0x90] sm:$0xff]
    %v1433 = vld [vmem:[#allocation6 + $0x98] sm:$0xff]
    %v1434 = vld [vmem:[#allocation6 + $0xa0] sm:$0xff]
    %v1435 = vld [vmem:[#allocation6 + $0xa8] sm:$0xff]
    %v1436 = vld [vmem:[#allocation6 + $0xb0] sm:$0xff]
    %v1437 = vld [vmem:[#allocation6 + $0xb8] sm:$0xff]
    %v1438 = vld [vmem:[#allocation6 + $0xc0] sm:$0xff]
    %v1439 = vld [vmem:[#allocation6 + $0xc8] sm:$0xff]
    %v1440 = vld [vmem:[#allocation6 + $0xd0] sm:$0xff]
    %v1441 = vld [vmem:[#allocation6 + $0xd8] sm:$0xff]
    %v1442 = vld [vmem:[#allocation6 + $0xe0] sm:$0xff]
    %v1443 = vld [vmem:[#allocation6 + $0xe8] sm:$0xff]
    %v1444 = vld [vmem:[#allocation6 + $0xf0] sm:$0xff]
    %v1445 = vld [vmem:[#allocation6 + $0xf8] sm:$0xff]
    %v1446 = vld [vmem:[#allocation6 + $0x100] sm:$0xff]
    %v1447 = vld [vmem:[#allocation6 + $0x108] sm:$0xff]
    %v1448 = vld [vmem:[#allocation6 + $0x110] sm:$0xff]
    %v1449 = vld [vmem:[#allocation6 + $0x118] sm:$0xff]
    %v1450 = vld [vmem:[#allocation6 + $0x120] sm:$0xff]
    %v1451 = vld [vmem:[#allocation6 + $0x128] sm:$0xff]
    %v1452 = vld [vmem:[#allocation6 + $0x130] sm:$0xff]
    %v1453 = vld [vmem:[#allocation6 + $0x138] sm:$0xff]
    %v1454 = vld [vmem:[#allocation6 + $0x140] sm:$0xff]
    %v1455 = vld [vmem:[#allocation6 + $0x148] sm:$0xff]
    %v1456 = vld [vmem:[#allocation6 + $0x150] sm:$0xff]
    %v1457 = vld [vmem:[#allocation6 + $0x158] sm:$0xff]
    %v1458 = vld [vmem:[#allocation6 + $0x160] sm:$0xff]
    %v1459 = vld [vmem:[#allocation6 + $0x168] sm:$0xff]
    %v1460 = vld [vmem:[#allocation6 + $0x170] sm:$0xff]
    %v1461 = vld [vmem:[#allocation6 + $0x178] sm:$0xff]
    %v1462 = vld [vmem:[#allocation6 + $0x180] sm:$0xff]
    %v1463 = vld [vmem:[#allocation6 + $0x188] sm:$0xff]
    %v1464 = vld [vmem:[#allocation6 + $0x190] sm:$0xff]
    %v1465 = vld [vmem:[#allocation6 + $0x198] sm:$0xff]
    %v1466 = vld [vmem:[#allocation6 + $0x1a0] sm:$0xff]
    %v1467 = vld [vmem:[#allocation6 + $0x1a8] sm:$0xff]
    %v1468 = vld [vmem:[#allocation6 + $0x1b0] sm:$0xff]
    %v1469 = vld [vmem:[#allocation6 + $0x1b8] sm:$0xff]
    %v1470 = vld [vmem:[#allocation6 + $0x1c0] sm:$0xff]
    %v1471 = vld [vmem:[#allocation6 + $0x1c8] sm:$0xff]
    %v1472 = vld [vmem:[#allocation6 + $0x1d0] sm:$0xff]
    %v1473 = vld [vmem:[#allocation6 + $0x1d8] sm:$0xff]
    %v1474 = vld [vmem:[#allocation6 + $0x1e0] sm:$0xff]
    %v1475 = vld [vmem:[#allocation6 + $0x1e8] sm:$0xff]
    %v1476 = vld [vmem:[#allocation6 + $0x1f0] sm:$0xff]
    %v1477 = vld [vmem:[#allocation6 + $0x1f8] sm:$0xff]
    %v1478 = vld [vmem:[#allocation6 + $0x200] sm:$0xff]
    %v1479 = vld [vmem:[#allocation6 + $0x208] sm:$0xff]
    %v1480 = vld [vmem:[#allocation6 + $0x210] sm:$0xff]
    %v1481 = vld [vmem:[#allocation6 + $0x218] sm:$0xff]
    %v1482 = vld [vmem:[#allocation6 + $0x220] sm:$0xff]
    %v1483 = vld [vmem:[#allocation6 + $0x228] sm:$0xff]
    %v1484 = vld [vmem:[#allocation6 + $0x230] sm:$0xff]
    %v1485 = vld [vmem:[#allocation6 + $0x238] sm:$0xff]
    %v1486 = vld [vmem:[#allocation6 + $0x240] sm:$0xff]
    %v1487 = vld [vmem:[#allocation6 + $0x248] sm:$0xff]
    %v1488 = vld [vmem:[#allocation6 + $0x250] sm:$0xff]
    %v1489 = vld [vmem:[#allocation6 + $0x258] sm:$0xff]
    %v1490 = vld [vmem:[#allocation6 + $0x260] sm:$0xff]
    %v1491 = vld [vmem:[#allocation6 + $0x268] sm:$0xff]
    %v1492 = vld [vmem:[#allocation6 + $0x270] sm:$0xff]
    %v1493 = vld [vmem:[#allocation6 + $0x278] sm:$0xff]
    %v1494 = vld [vmem:[#allocation6 + $0x280] sm:$0xff]
    %v1495 = vld [vmem:[#allocation6 + $0x288] sm:$0xff]
    %v1496 = vld [vmem:[#allocation6 + $0x290] sm:$0xff]
    %v1497 = vld [vmem:[#allocation6 + $0x298] sm:$0xff]
    %v1498 = vld [vmem:[#allocation6 + $0x2a0] sm:$0xff]
    %v1499 = vld [vmem:[#allocation6 + $0x2a8] sm:$0xff]
    %v1500 = vld [vmem:[#allocation6 + $0x2b0] sm:$0xff]
    %v1501 = vld [vmem:[#allocation6 + $0x2b8] sm:$0xff]
    %v1502 = vld [vmem:[#allocation6 + $0x2c0] sm:$0xff]
    %v1503 = vld [vmem:[#allocation6 + $0x2c8] sm:$0xff]
    %v1504 = vld [vmem:[#allocation6 + $0x2d0] sm:$0xff]
    %v1505 = vld [vmem:[#allocation6 + $0x2d8] sm:$0xff]
    %v1506 = vld [vmem:[#allocation6 + $0x2e0] sm:$0xff]
    %v1507 = vld [vmem:[#allocation6 + $0x2e8] sm:$0xff]
    %v1508 = vld [vmem:[#allocation6 + $0x2f0] sm:$0xff]
    %v1509 = vld [vmem:[#allocation6 + $0x2f8] sm:$0xff]
    %v1510 = vld [vmem:[#allocation6 + $0x300] sm:$0xff]
    %v1511 = vld [vmem:[#allocation6 + $0x308] sm:$0xff]
    %v1512 = vld [vmem:[#allocation6 + $0x310] sm:$0xff]
    %v1513 = vld [vmem:[#allocation6 + $0x318] sm:$0xff]
    %v1514 = vld [vmem:[#allocation6 + $0x320] sm:$0xff]
    %v1515 = vld [vmem:[#allocation6 + $0x328] sm:$0xff]
    %v1516 = vld [vmem:[#allocation6 + $0x330] sm:$0xff]
    %v1517 = vld [vmem:[#allocation6 + $0x338] sm:$0xff]
    %v1518 = vld [vmem:[#allocation6 + $0x340] sm:$0xff]
    %v1519 = vld [vmem:[#allocation6 + $0x348] sm:$0xff]
    %v1520 = vld [vmem:[#allocation6 + $0x350] sm:$0xff]
    %v1521 = vld [vmem:[#allocation6 + $0x358] sm:$0xff]
    %v1522 = vld [vmem:[#allocation6 + $0x360] sm:$0xff]
    %v1523 = vld [vmem:[#allocation6 + $0x368] sm:$0xff]
    %v1524 = vld [vmem:[#allocation6 + $0x370] sm:$0xff]
    %v1525 = vld [vmem:[#allocation6 + $0x378] sm:$0xff]
    %v1526 = vld [vmem:[#allocation6 + $0x380] sm:$0xff]
    %v1527 = vld [vmem:[#allocation6 + $0x388] sm:$0xff]
    %v1528 = vld [vmem:[#allocation6 + $0x390] sm:$0xff]
    %v1529 = vld [vmem:[#allocation6 + $0x398] sm:$0xff]
    %v1530 = vld [vmem:[#allocation6 + $0x3a0] sm:$0xff]
    %v1531 = vld [vmem:[#allocation6 + $0x3a8] sm:$0xff]
    %v1532 = vld [vmem:[#allocation6 + $0x3b0] sm:$0xff]
    %v1533 = vld [vmem:[#allocation6 + $0x3b8] sm:$0xff]
    %v1534 = vld [vmem:[#allocation6 + $0x3c0] sm:$0xff]
    %v1535 = vld [vmem:[#allocation6 + $0x3c8] sm:$0xff]
    %v1536 = vld [vmem:[#allocation6 + $0x3d0] sm:$0xff]
    %v1537 = vld [vmem:[#allocation6 + $0x3d8] sm:$0xff]
    %v1538 = vld [vmem:[#allocation6 + $0x3e0] sm:$0xff]
    %v1539 = vld [vmem:[#allocation6 + $0x3e8] sm:$0xff]
    %v1540 = vld [vmem:[#allocation6 + $0x3f0] sm:$0xff]
    %v1541 = vld [vmem:[#allocation6 + $0x3f8] sm:$0xff]
    %v1542 = vld [vmem:[%s6] sm:$0xf]
    %v1544 = vlaneseq
    %v1545 = vshrl.u32 %v1544, 7
    %v1546 = vsub.s32 0, %v1545
    %v1547 = vrot.slane %v1542, %v1546
    %v1548 = vlaneseq
    %v1549 = vshrl.u32 %v1548, 7
    %v1550 = vsub.s32 1, %v1549
    %v1551 = vrot.slane %v1542, %v1550
    %v1552 = vlaneseq
    %v1553 = vshrl.u32 %v1552, 7
    %v1554 = vsub.s32 2, %v1553
    %v1555 = vrot.slane %v1542, %v1554
    %v1556 = vlaneseq
    %v1557 = vshrl.u32 %v1556, 7
    %v1558 = vsub.s32 3, %v1557
    %v1559 = vrot.slane %v1542, %v1558
    %v1692 = vunpack.c.l.b16 %v1414
    %v1693 = vunpack.c.h.b16 %v1414
    %v1694 = vunpack.c.l.b16 %v1415
    %v1695 = vunpack.c.h.b16 %v1415
    %v1696 = vunpack.c.l.b16 %v1416
    %v1697 = vunpack.c.h.b16 %v1416
    %v1698 = vunpack.c.l.b16 %v1417
    %v1699 = vunpack.c.h.b16 %v1417
    %v1700 = vunpack.c.l.b16 %v1418
    %v1701 = vunpack.c.h.b16 %v1418
    %v1702 = vunpack.c.l.b16 %v1419
    %v1703 = vunpack.c.h.b16 %v1419
    %v1704 = vunpack.c.l.b16 %v1420
    %v1705 = vunpack.c.h.b16 %v1420
    %v1706 = vunpack.c.l.b16 %v1421
    %v1707 = vunpack.c.h.b16 %v1421
    %v1708 = vunpack.c.l.b16 %v1422
    %v1709 = vunpack.c.h.b16 %v1422
    %v1710 = vunpack.c.l.b16 %v1423
    %v1711 = vunpack.c.h.b16 %v1423
    %v1712 = vunpack.c.l.b16 %v1424
    %v1713 = vunpack.c.h.b16 %v1424
    %v1714 = vunpack.c.l.b16 %v1425
    %v1715 = vunpack.c.h.b16 %v1425
    %v1716 = vunpack.c.l.b16 %v1426
    %v1717 = vunpack.c.h.b16 %v1426
    %v1718 = vunpack.c.l.b16 %v1427
    %v1719 = vunpack.c.h.b16 %v1427
    %v1720 = vunpack.c.l.b16 %v1428
    %v1721 = vunpack.c.h.b16 %v1428
    %v1722 = vunpack.c.l.b16 %v1429
    %v1723 = vunpack.c.h.b16 %v1429
    %v1724 = vunpack.c.l.b16 %v1430
    %v1725 = vunpack.c.h.b16 %v1430
    %v1726 = vunpack.c.l.b16 %v1431
    %v1727 = vunpack.c.h.b16 %v1431
    %v1728 = vunpack.c.l.b16 %v1432
    %v1729 = vunpack.c.h.b16 %v1432
    %v1730 = vunpack.c.l.b16 %v1433
    %v1731 = vunpack.c.h.b16 %v1433
    %v1732 = vunpack.c.l.b16 %v1434
    %v1733 = vunpack.c.h.b16 %v1434
    %v1734 = vunpack.c.l.b16 %v1435
    %v1735 = vunpack.c.h.b16 %v1435
    %v1736 = vunpack.c.l.b16 %v1436
    %v1737 = vunpack.c.h.b16 %v1436
    %v1738 = vunpack.c.l.b16 %v1437
    %v1739 = vunpack.c.h.b16 %v1437
    %v1740 = vunpack.c.l.b16 %v1438
    %v1741 = vunpack.c.h.b16 %v1438
    %v1742 = vunpack.c.l.b16 %v1439
    %v1743 = vunpack.c.h.b16 %v1439
    %v1744 = vunpack.c.l.b16 %v1440
    %v1745 = vunpack.c.h.b16 %v1440
    %v1746 = vunpack.c.l.b16 %v1441
    %v1747 = vunpack.c.h.b16 %v1441
    %v1748 = vunpack.c.l.b16 %v1442
    %v1749 = vunpack.c.h.b16 %v1442
    %v1750 = vunpack.c.l.b16 %v1443
    %v1751 = vunpack.c.h.b16 %v1443
    %v1752 = vunpack.c.l.b16 %v1444
    %v1753 = vunpack.c.h.b16 %v1444
    %v1754 = vunpack.c.l.b16 %v1445
    %v1755 = vunpack.c.h.b16 %v1445
    %v1756 = vunpack.c.l.b16 %v1446
    %v1757 = vunpack.c.h.b16 %v1446
    %v1758 = vunpack.c.l.b16 %v1447
    %v1759 = vunpack.c.h.b16 %v1447
    %v1760 = vunpack.c.l.b16 %v1448
    %v1761 = vunpack.c.h.b16 %v1448
    %v1762 = vunpack.c.l.b16 %v1449
    %v1763 = vunpack.c.h.b16 %v1449
    %v1764 = vunpack.c.l.b16 %v1450
    %v1765 = vunpack.c.h.b16 %v1450
    %v1766 = vunpack.c.l.b16 %v1451
    %v1767 = vunpack.c.h.b16 %v1451
    %v1768 = vunpack.c.l.b16 %v1452
    %v1769 = vunpack.c.h.b16 %v1452
    %v1770 = vunpack.c.l.b16 %v1453
    %v1771 = vunpack.c.h.b16 %v1453
    %v1772 = vunpack.c.l.b16 %v1454
    %v1773 = vunpack.c.h.b16 %v1454
    %v1774 = vunpack.c.l.b16 %v1455
    %v1775 = vunpack.c.h.b16 %v1455
    %v1776 = vunpack.c.l.b16 %v1456
    %v1777 = vunpack.c.h.b16 %v1456
    %v1778 = vunpack.c.l.b16 %v1457
    %v1779 = vunpack.c.h.b16 %v1457
    %v1780 = vunpack.c.l.b16 %v1458
    %v1781 = vunpack.c.h.b16 %v1458
    %v1782 = vunpack.c.l.b16 %v1459
    %v1783 = vunpack.c.h.b16 %v1459
    %v1784 = vunpack.c.l.b16 %v1460
    %v1785 = vunpack.c.h.b16 %v1460
    %v1786 = vunpack.c.l.b16 %v1461
    %v1787 = vunpack.c.h.b16 %v1461
    %v1788 = vunpack.c.l.b16 %v1462
    %v1789 = vunpack.c.h.b16 %v1462
    %v1790 = vunpack.c.l.b16 %v1463
    %v1791 = vunpack.c.h.b16 %v1463
    %v1792 = vunpack.c.l.b16 %v1464
    %v1793 = vunpack.c.h.b16 %v1464
    %v1794 = vunpack.c.l.b16 %v1465
    %v1795 = vunpack.c.h.b16 %v1465
    %v1796 = vunpack.c.l.b16 %v1466
    %v1797 = vunpack.c.h.b16 %v1466
    %v1798 = vunpack.c.l.b16 %v1467
    %v1799 = vunpack.c.h.b16 %v1467
    %v1800 = vunpack.c.l.b16 %v1468
    %v1801 = vunpack.c.h.b16 %v1468
    %v1802 = vunpack.c.l.b16 %v1469
    %v1803 = vunpack.c.h.b16 %v1469
    %v1804 = vunpack.c.l.b16 %v1470
    %v1805 = vunpack.c.h.b16 %v1470
    %v1806 = vunpack.c.l.b16 %v1471
    %v1807 = vunpack.c.h.b16 %v1471
    %v1808 = vunpack.c.l.b16 %v1472
    %v1809 = vunpack.c.h.b16 %v1472
    %v1810 = vunpack.c.l.b16 %v1473
    %v1811 = vunpack.c.h.b16 %v1473
    %v1812 = vunpack.c.l.b16 %v1474
    %v1813 = vunpack.c.h.b16 %v1474
    %v1814 = vunpack.c.l.b16 %v1475
    %v1815 = vunpack.c.h.b16 %v1475
    %v1816 = vunpack.c.l.b16 %v1476
    %v1817 = vunpack.c.h.b16 %v1476
    %v1818 = vunpack.c.l.b16 %v1477
    %v1819 = vunpack.c.h.b16 %v1477
    %v1820 = vunpack.c.l.b16 %v1478
    %v1821 = vunpack.c.h.b16 %v1478
    %v1822 = vunpack.c.l.b16 %v1479
    %v1823 = vunpack.c.h.b16 %v1479
    %v1824 = vunpack.c.l.b16 %v1480
    %v1825 = vunpack.c.h.b16 %v1480
    %v1826 = vunpack.c.l.b16 %v1481
    %v1827 = vunpack.c.h.b16 %v1481
    %v1828 = vunpack.c.l.b16 %v1482
    %v1829 = vunpack.c.h.b16 %v1482
    %v1830 = vunpack.c.l.b16 %v1483
    %v1831 = vunpack.c.h.b16 %v1483
    %v1832 = vunpack.c.l.b16 %v1484
    %v1833 = vunpack.c.h.b16 %v1484
    %v1834 = vunpack.c.l.b16 %v1485
    %v1835 = vunpack.c.h.b16 %v1485
    %v1836 = vunpack.c.l.b16 %v1486
    %v1837 = vunpack.c.h.b16 %v1486
    %v1838 = vunpack.c.l.b16 %v1487
    %v1839 = vunpack.c.h.b16 %v1487
    %v1840 = vunpack.c.l.b16 %v1488
    %v1841 = vunpack.c.h.b16 %v1488
    %v1842 = vunpack.c.l.b16 %v1489
    %v1843 = vunpack.c.h.b16 %v1489
    %v1844 = vunpack.c.l.b16 %v1490
    %v1845 = vunpack.c.h.b16 %v1490
    %v1846 = vunpack.c.l.b16 %v1491
    %v1847 = vunpack.c.h.b16 %v1491
    %v1848 = vunpack.c.l.b16 %v1492
    %v1849 = vunpack.c.h.b16 %v1492
    %v1850 = vunpack.c.l.b16 %v1493
    %v1851 = vunpack.c.h.b16 %v1493
    %v1852 = vunpack.c.l.b16 %v1494
    %v1853 = vunpack.c.h.b16 %v1494
    %v1854 = vunpack.c.l.b16 %v1495
    %v1855 = vunpack.c.h.b16 %v1495
    %v1856 = vunpack.c.l.b16 %v1496
    %v1857 = vunpack.c.h.b16 %v1496
    %v1858 = vunpack.c.l.b16 %v1497
    %v1859 = vunpack.c.h.b16 %v1497
    %v1860 = vunpack.c.l.b16 %v1498
    %v1861 = vunpack.c.h.b16 %v1498
    %v1862 = vunpack.c.l.b16 %v1499
    %v1863 = vunpack.c.h.b16 %v1499
    %v1864 = vunpack.c.l.b16 %v1500
    %v1865 = vunpack.c.h.b16 %v1500
    %v1866 = vunpack.c.l.b16 %v1501
    %v1867 = vunpack.c.h.b16 %v1501
    %v1868 = vunpack.c.l.b16 %v1502
    %v1869 = vunpack.c.h.b16 %v1502
    %v1870 = vunpack.c.l.b16 %v1503
    %v1871 = vunpack.c.h.b16 %v1503
    %v1872 = vunpack.c.l.b16 %v1504
    %v1873 = vunpack.c.h.b16 %v1504
    %v1874 = vunpack.c.l.b16 %v1505
    %v1875 = vunpack.c.h.b16 %v1505
    %v1876 = vunpack.c.l.b16 %v1506
    %v1877 = vunpack.c.h.b16 %v1506
    %v1878 = vunpack.c.l.b16 %v1507
    %v1879 = vunpack.c.h.b16 %v1507
    %v1880 = vunpack.c.l.b16 %v1508
    %v1881 = vunpack.c.h.b16 %v1508
    %v1882 = vunpack.c.l.b16 %v1509
    %v1883 = vunpack.c.h.b16 %v1509
    %v1884 = vunpack.c.l.b16 %v1510
    %v1885 = vunpack.c.h.b16 %v1510
    %v1886 = vunpack.c.l.b16 %v1511
    %v1887 = vunpack.c.h.b16 %v1511
    %v1888 = vunpack.c.l.b16 %v1512
    %v1889 = vunpack.c.h.b16 %v1512
    %v1890 = vunpack.c.l.b16 %v1513
    %v1891 = vunpack.c.h.b16 %v1513
    %v1892 = vunpack.c.l.b16 %v1514
    %v1893 = vunpack.c.h.b16 %v1514
    %v1894 = vunpack.c.l.b16 %v1515
    %v1895 = vunpack.c.h.b16 %v1515
    %v1896 = vunpack.c.l.b16 %v1516
    %v1897 = vunpack.c.h.b16 %v1516
    %v1898 = vunpack.c.l.b16 %v1517
    %v1899 = vunpack.c.h.b16 %v1517
    %v1900 = vunpack.c.l.b16 %v1518
    %v1901 = vunpack.c.h.b16 %v1518
    %v1902 = vunpack.c.l.b16 %v1519
    %v1903 = vunpack.c.h.b16 %v1519
    %v1904 = vunpack.c.l.b16 %v1520
    %v1905 = vunpack.c.h.b16 %v1520
    %v1906 = vunpack.c.l.b16 %v1521
    %v1907 = vunpack.c.h.b16 %v1521
    %v1908 = vunpack.c.l.b16 %v1522
    %v1909 = vunpack.c.h.b16 %v1522
    %v1910 = vunpack.c.l.b16 %v1523
    %v1911 = vunpack.c.h.b16 %v1523
    %v1912 = vunpack.c.l.b16 %v1524
    %v1913 = vunpack.c.h.b16 %v1524
    %v1914 = vunpack.c.l.b16 %v1525
    %v1915 = vunpack.c.h.b16 %v1525
    %v1916 = vunpack.c.l.b16 %v1526
    %v1917 = vunpack.c.h.b16 %v1526
    %v1918 = vunpack.c.l.b16 %v1527
    %v1919 = vunpack.c.h.b16 %v1527
    %v1920 = vunpack.c.l.b16 %v1528
    %v1921 = vunpack.c.h.b16 %v1528
    %v1922 = vunpack.c.l.b16 %v1529
    %v1923 = vunpack.c.h.b16 %v1529
    %v1924 = vunpack.c.l.b16 %v1530
    %v1925 = vunpack.c.h.b16 %v1530
    %v1926 = vunpack.c.l.b16 %v1531
    %v1927 = vunpack.c.h.b16 %v1531
    %v1928 = vunpack.c.l.b16 %v1532
    %v1929 = vunpack.c.h.b16 %v1532
    %v1930 = vunpack.c.l.b16 %v1533
    %v1931 = vunpack.c.h.b16 %v1533
    %v1932 = vunpack.c.l.b16 %v1534
    %v1933 = vunpack.c.h.b16 %v1534
    %v1934 = vunpack.c.l.b16 %v1535
    %v1935 = vunpack.c.h.b16 %v1535
    %v1936 = vunpack.c.l.b16 %v1536
    %v1937 = vunpack.c.h.b16 %v1536
    %v1938 = vunpack.c.l.b16 %v1537
    %v1939 = vunpack.c.h.b16 %v1537
    %v1940 = vunpack.c.l.b16 %v1538
    %v1941 = vunpack.c.h.b16 %v1538
    %v1942 = vunpack.c.l.b16 %v1539
    %v1943 = vunpack.c.h.b16 %v1539
    %v1944 = vunpack.c.l.b16 %v1540
    %v1945 = vunpack.c.h.b16 %v1540
    %v1946 = vunpack.c.l.b16 %v1541
    %v1947 = vunpack.c.h.b16 %v1541
    %v1948 = vpack.c.b16 %v1696, %v1692
    %v1949 = vpack.c.b16 %v1697, %v1693
    %v1950 = vpack.c.b16 %v1698, %v1694
    %v1951 = vpack.c.b16 %v1699, %v1695
    %v1952 = vpack.c.b16 %v1704, %v1700
    %v1953 = vpack.c.b16 %v1705, %v1701
    %v1954 = vpack.c.b16 %v1706, %v1702
    %v1955 = vpack.c.b16 %v1707, %v1703
    %v1956 = vpack.c.b16 %v1712, %v1708
    %v1957 = vpack.c.b16 %v1713, %v1709
    %v1958 = vpack.c.b16 %v1714, %v1710
    %v1959 = vpack.c.b16 %v1715, %v1711
    %v1960 = vpack.c.b16 %v1720, %v1716
    %v1961 = vpack.c.b16 %v1721, %v1717
    %v1962 = vpack.c.b16 %v1722, %v1718
    %v1963 = vpack.c.b16 %v1723, %v1719
    %v1964 = vpack.c.b16 %v1728, %v1724
    %v1965 = vpack.c.b16 %v1729, %v1725
    %v1966 = vpack.c.b16 %v1730, %v1726
    %v1967 = vpack.c.b16 %v1731, %v1727
    %v1968 = vpack.c.b16 %v1736, %v1732
    %v1969 = vpack.c.b16 %v1737, %v1733
    %v1970 = vpack.c.b16 %v1738, %v1734
    %v1971 = vpack.c.b16 %v1739, %v1735
    %v1972 = vpack.c.b16 %v1744, %v1740
    %v1973 = vpack.c.b16 %v1745, %v1741
    %v1974 = vpack.c.b16 %v1746, %v1742
    %v1975 = vpack.c.b16 %v1747, %v1743
    %v1976 = vpack.c.b16 %v1752, %v1748
    %v1977 = vpack.c.b16 %v1753, %v1749
    %v1978 = vpack.c.b16 %v1754, %v1750
    %v1979 = vpack.c.b16 %v1755, %v1751
    %v1980 = vpack.c.b16 %v1760, %v1756
    %v1981 = vpack.c.b16 %v1761, %v1757
    %v1982 = vpack.c.b16 %v1762, %v1758
    %v1983 = vpack.c.b16 %v1763, %v1759
    %v1984 = vpack.c.b16 %v1768, %v1764
    %v1985 = vpack.c.b16 %v1769, %v1765
    %v1986 = vpack.c.b16 %v1770, %v1766
    %v1987 = vpack.c.b16 %v1771, %v1767
    %v1988 = vpack.c.b16 %v1776, %v1772
    %v1989 = vpack.c.b16 %v1777, %v1773
    %v1990 = vpack.c.b16 %v1778, %v1774
    %v1991 = vpack.c.b16 %v1779, %v1775
    %v1992 = vpack.c.b16 %v1784, %v1780
    %v1993 = vpack.c.b16 %v1785, %v1781
    %v1994 = vpack.c.b16 %v1786, %v1782
    %v1995 = vpack.c.b16 %v1787, %v1783
    %v1996 = vpack.c.b16 %v1792, %v1788
    %v1997 = vpack.c.b16 %v1793, %v1789
    %v1998 = vpack.c.b16 %v1794, %v1790
    %v1999 = vpack.c.b16 %v1795, %v1791
    %v2000 = vpack.c.b16 %v1800, %v1796
    %v2001 = vpack.c.b16 %v1801, %v1797
    %v2002 = vpack.c.b16 %v1802, %v1798
    %v2003 = vpack.c.b16 %v1803, %v1799
    %v2004 = vpack.c.b16 %v1808, %v1804
    %v2005 = vpack.c.b16 %v1809, %v1805
    %v2006 = vpack.c.b16 %v1810, %v1806
    %v2007 = vpack.c.b16 %v1811, %v1807
    %v2008 = vpack.c.b16 %v1816, %v1812
    %v2009 = vpack.c.b16 %v1817, %v1813
    %v2010 = vpack.c.b16 %v1818, %v1814
    %v2011 = vpack.c.b16 %v1819, %v1815
    %v2012 = vpack.c.b16 %v1824, %v1820
    %v2013 = vpack.c.b16 %v1825, %v1821
    %v2014 = vpack.c.b16 %v1826, %v1822
    %v2015 = vpack.c.b16 %v1827, %v1823
    %v2016 = vpack.c.b16 %v1832, %v1828
    %v2017 = vpack.c.b16 %v1833, %v1829
    %v2018 = vpack.c.b16 %v1834, %v1830
    %v2019 = vpack.c.b16 %v1835, %v1831
    %v2020 = vpack.c.b16 %v1840, %v1836
    %v2021 = vpack.c.b16 %v1841, %v1837
    %v2022 = vpack.c.b16 %v1842, %v1838
    %v2023 = vpack.c.b16 %v1843, %v1839
    %v2024 = vpack.c.b16 %v1848, %v1844
    %v2025 = vpack.c.b16 %v1849, %v1845
    %v2026 = vpack.c.b16 %v1850, %v1846
    %v2027 = vpack.c.b16 %v1851, %v1847
    %v2028 = vpack.c.b16 %v1856, %v1852
    %v2029 = vpack.c.b16 %v1857, %v1853
    %v2030 = vpack.c.b16 %v1858, %v1854
    %v2031 = vpack.c.b16 %v1859, %v1855
    %v2032 = vpack.c.b16 %v1864, %v1860
    %v2033 = vpack.c.b16 %v1865, %v1861
    %v2034 = vpack.c.b16 %v1866, %v1862
    %v2035 = vpack.c.b16 %v1867, %v1863
    %v2036 = vpack.c.b16 %v1872, %v1868
    %v2037 = vpack.c.b16 %v1873, %v1869
    %v2038 = vpack.c.b16 %v1874, %v1870
    %v2039 = vpack.c.b16 %v1875, %v1871
    %v2040 = vpack.c.b16 %v1880, %v1876
    %v2041 = vpack.c.b16 %v1881, %v1877
    %v2042 = vpack.c.b16 %v1882, %v1878
    %v2043 = vpack.c.b16 %v1883, %v1879
    %v2044 = vpack.c.b16 %v1888, %v1884
    %v2045 = vpack.c.b16 %v1889, %v1885
    %v2046 = vpack.c.b16 %v1890, %v1886
    %v2047 = vpack.c.b16 %v1891, %v1887
    %v2048 = vpack.c.b16 %v1896, %v1892
    %v2049 = vpack.c.b16 %v1897, %v1893
    %v2050 = vpack.c.b16 %v1898, %v1894
    %v2051 = vpack.c.b16 %v1899, %v1895
    %v2052 = vpack.c.b16 %v1904, %v1900
    %v2053 = vpack.c.b16 %v1905, %v1901
    %v2054 = vpack.c.b16 %v1906, %v1902
    %v2055 = vpack.c.b16 %v1907, %v1903
    %v2056 = vpack.c.b16 %v1912, %v1908
    %v2057 = vpack.c.b16 %v1913, %v1909
    %v2058 = vpack.c.b16 %v1914, %v1910
    %v2059 = vpack.c.b16 %v1915, %v1911
    %v2060 = vpack.c.b16 %v1920, %v1916
    %v2061 = vpack.c.b16 %v1921, %v1917
    %v2062 = vpack.c.b16 %v1922, %v1918
    %v2063 = vpack.c.b16 %v1923, %v1919
    %v2064 = vpack.c.b16 %v1928, %v1924
    %v2065 = vpack.c.b16 %v1929, %v1925
    %v2066 = vpack.c.b16 %v1930, %v1926
    %v2067 = vpack.c.b16 %v1931, %v1927
    %v2068 = vpack.c.b16 %v1936, %v1932
    %v2069 = vpack.c.b16 %v1937, %v1933
    %v2070 = vpack.c.b16 %v1938, %v1934
    %v2071 = vpack.c.b16 %v1939, %v1935
    %v2072 = vpack.c.b16 %v1944, %v1940
    %v2073 = vpack.c.b16 %v1945, %v1941
    %v2074 = vpack.c.b16 %v1946, %v1942
    %v2075 = vpack.c.b16 %v1947, %v1943
    %2204 = vmatprep.subr.bf16.mxu0 %v1977
    %2205 = vmatpush1.bf16.msra.mxu0 %v1976
    %2206 = vmatprep.subr.bf16.mxu0 %v1973
    %2207 = vmatpush1.bf16.msra.mxu0 %v1972
    %2208 = vmatprep.subr.bf16.mxu0 %v1969
    %2209 = vmatpush1.bf16.msra.mxu0 %v1968
    %2210 = vmatprep.subr.bf16.mxu0 %v1965
    %2211 = vmatpush1.bf16.msra.mxu0 %v1964
    %2212 = vmatprep.subr.bf16.mxu0 %v1961
    %2213 = vmatpush1.bf16.msra.mxu0 %v1960
    %2214 = vmatprep.subr.bf16.mxu0 %v1957
    %2215 = vmatpush1.bf16.msra.mxu0 %v1956
    %2216 = vmatprep.subr.bf16.mxu0 %v1953
    %2217 = vmatpush1.bf16.msra.mxu0 %v1952
    %2218 = vmatprep.subr.bf16.mxu0 %v1949
    %2219 = vmatpush1.bf16.msra.mxu0 %v1948
    %2220 = vmatprep.subr.bf16.mxu0 %v2009
    %2221 = vmatpush2.bf16.msra.mxu0 %v2008
    %2222 = vmatprep.subr.bf16.mxu0 %v2005
    %2223 = vmatpush2.bf16.msra.mxu0 %v2004
    %2224 = vmatprep.subr.bf16.mxu0 %v2001
    %2225 = vmatpush2.bf16.msra.mxu0 %v2000
    %2226 = vmatprep.subr.bf16.mxu0 %v1997
    %2227 = vmatpush2.bf16.msra.mxu0 %v1996
    %2228 = vmatprep.subr.bf16.mxu0 %v1993
    %2229 = vmatpush2.bf16.msra.mxu0 %v1992
    %2230 = vmatprep.subr.bf16.mxu0 %v1989
    %2231 = vmatpush2.bf16.msra.mxu0 %v1988
    %2232 = vmatprep.subr.bf16.mxu0 %v1985
    %2233 = vmatpush2.bf16.msra.mxu0 %v1984
    %2234 = vmatprep.subr.bf16.mxu0 %v1981
    %2235 = vmatpush2.bf16.msra.mxu0 %v1980
    %2236 = vmatprep.mubr.bf16.mxu0 %v1411
    %2237 = vmatmul.mubr.bf16.gmra.mxu0 %v1410
    %v2238 = vpop.f32.mrf.mxu0
    %v2239 = vadd.f32 %v1547, %v2238
    %v2240 = vpop.f32.mrf.mxu0
    %v2241 = vadd.f32 %v1551, %v2240
    %v2242 = vpop.f32.mrf.mxu0
    %v2243 = vpop.f32.mrf.mxu0
    %2244 = vdwg.mxu0
    %2245 = vmatprep.subr.bf16.mxu0 %v2041
    %2246 = vmatpush1.bf16.msra.mxu0 %v2040
    %2247 = vmatprep.subr.bf16.mxu0 %v2037
    %2248 = vmatpush1.bf16.msra.mxu0 %v2036
    %2249 = vmatprep.subr.bf16.mxu0 %v2033
    %2250 = vmatpush1.bf16.msra.mxu0 %v2032
    %2251 = vmatprep.subr.bf16.mxu0 %v2029
    %2252 = vmatpush1.bf16.msra.mxu0 %v2028
    %2253 = vmatprep.subr.bf16.mxu0 %v2025
    %2254 = vmatpush1.bf16.msra.mxu0 %v2024
    %2255 = vmatprep.subr.bf16.mxu0 %v2021
    %2256 = vmatpush1.bf16.msra.mxu0 %v2020
    %2257 = vmatprep.subr.bf16.mxu0 %v2017
    %2258 = vmatpush1.bf16.msra.mxu0 %v2016
    %2259 = vmatprep.subr.bf16.mxu0 %v2013
    %2260 = vmatpush1.bf16.msra.mxu0 %v2012
    %2261 = vmatprep.subr.bf16.mxu0 %v2073
    %2262 = vmatpush2.bf16.msra.mxu0 %v2072
    %2263 = vmatprep.subr.bf16.mxu0 %v2069
    %2264 = vmatpush2.bf16.msra.mxu0 %v2068
    %2265 = vmatprep.subr.bf16.mxu0 %v2065
    %2266 = vmatpush2.bf16.msra.mxu0 %v2064
    %2267 = vmatprep.subr.bf16.mxu0 %v2061
    %2268 = vmatpush2.bf16.msra.mxu0 %v2060
    %2269 = vmatprep.subr.bf16.mxu0 %v2057
    %2270 = vmatpush2.bf16.msra.mxu0 %v2056
    %2271 = vmatprep.subr.bf16.mxu0 %v2053
    %2272 = vmatpush2.bf16.msra.mxu0 %v2052
    %2273 = vmatprep.subr.bf16.mxu0 %v2049
    %2274 = vmatpush2.bf16.msra.mxu0 %v2048
    %2275 = vmatprep.subr.bf16.mxu0 %v2045
    %2276 = vmatpush2.bf16.msra.mxu0 %v2044
    %2277 = vmatprep.mubr.bf16.mxu0 %v1413
    %2278 = vmatmul.mubr.bf16.gmra.mxu0 %v1412
    %v2279 = vpop.f32.mrf.mxu0
    %v2280 = vadd.f32 %v2239, %v2279
    %v2281 = vpop.f32.mrf.mxu0
    %v2282 = vadd.f32 %v2241, %v2281
    %v2283 = vpop.f32.mrf.mxu0
    %v2284 = vpop.f32.mrf.mxu0
    %2285 = vdwg.mxu0
    %2286 = vmatprep.subr.bf16.mxu0 %v1979
    %2287 = vmatpush1.bf16.msra.mxu0 %v1978
    %2288 = vmatprep.subr.bf16.mxu0 %v1975
    %2289 = vmatpush1.bf16.msra.mxu0 %v1974
    %2290 = vmatprep.subr.bf16.mxu0 %v1971
    %2291 = vmatpush1.bf16.msra.mxu0 %v1970
    %2292 = vmatprep.subr.bf16.mxu0 %v1967
    %2293 = vmatpush1.bf16.msra.mxu0 %v1966
    %2294 = vmatprep.subr.bf16.mxu0 %v1963
    %2295 = vmatpush1.bf16.msra.mxu0 %v1962
    %2296 = vmatprep.subr.bf16.mxu0 %v1959
    %2297 = vmatpush1.bf16.msra.mxu0 %v1958
    %2298 = vmatprep.subr.bf16.mxu0 %v1955
    %2299 = vmatpush1.bf16.msra.mxu0 %v1954
    %2300 = vmatprep.subr.bf16.mxu0 %v1951
    %2301 = vmatpush1.bf16.msra.mxu0 %v1950
    %2302 = vmatprep.subr.bf16.mxu0 %v2011
    %2303 = vmatpush2.bf16.msra.mxu0 %v2010
    %2304 = vmatprep.subr.bf16.mxu0 %v2007
    %2305 = vmatpush2.bf16.msra.mxu0 %v2006
    %2306 = vmatprep.subr.bf16.mxu0 %v2003
    %2307 = vmatpush2.bf16.msra.mxu0 %v2002
    %2308 = vmatprep.subr.bf16.mxu0 %v1999
    %2309 = vmatpush2.bf16.msra.mxu0 %v1998
    %2310 = vmatprep.subr.bf16.mxu0 %v1995
    %2311 = vmatpush2.bf16.msra.mxu0 %v1994
    %2312 = vmatprep.subr.bf16.mxu0 %v1991
    %2313 = vmatpush2.bf16.msra.mxu0 %v1990
    %2314 = vmatprep.subr.bf16.mxu0 %v1987
    %2315 = vmatpush2.bf16.msra.mxu0 %v1986
    %2316 = vmatprep.subr.bf16.mxu0 %v1983
    %2317 = vmatpush2.bf16.msra.mxu0 %v1982
    %2318 = vmatprep.mubr.bf16.mxu0 %v1411
    %2319 = vmatmul.mubr.bf16.gmra.mxu0 %v1410
    %v2320 = vpop.f32.mrf.mxu0
    %v2321 = vadd.f32 %v1555, %v2320
    %v2322 = vpop.f32.mrf.mxu0
    %v2323 = vadd.f32 %v1559, %v2322
    %v2324 = vpop.f32.mrf.mxu0
    %v2325 = vpop.f32.mrf.mxu0
    %2326 = vdwg.mxu0
    %2327 = vmatprep.subr.bf16.mxu0 %v2043
    %2328 = vmatpush1.bf16.msra.mxu0 %v2042
    %2329 = vmatprep.subr.bf16.mxu0 %v2039
    %2330 = vmatpush1.bf16.msra.mxu0 %v2038
    %2331 = vmatprep.subr.bf16.mxu0 %v2035
    %2332 = vmatpush1.bf16.msra.mxu0 %v2034
    %2333 = vmatprep.subr.bf16.mxu0 %v2031
    %2334 = vmatpush1.bf16.msra.mxu0 %v2030
    %2335 = vmatprep.subr.bf16.mxu0 %v2027
    %2336 = vmatpush1.bf16.msra.mxu0 %v2026
    %2337 = vmatprep.subr.bf16.mxu0 %v2023
    %2338 = vmatpush1.bf16.msra.mxu0 %v2022
    %2339 = vmatprep.subr.bf16.mxu0 %v2019
    %2340 = vmatpush1.bf16.msra.mxu0 %v2018
    %2341 = vmatprep.subr.bf16.mxu0 %v2015
    %2342 = vmatpush1.bf16.msra.mxu0 %v2014
    %2343 = vmatprep.subr.bf16.mxu0 %v2075
    %2344 = vmatpush2.bf16.msra.mxu0 %v2074
    %2345 = vmatprep.subr.bf16.mxu0 %v2071
    %2346 = vmatpush2.bf16.msra.mxu0 %v2070
    %2347 = vmatprep.subr.bf16.mxu0 %v2067
    %2348 = vmatpush2.bf16.msra.mxu0 %v2066
    %2349 = vmatprep.subr.bf16.mxu0 %v2063
    %2350 = vmatpush2.bf16.msra.mxu0 %v2062
    %2351 = vmatprep.subr.bf16.mxu0 %v2059
    %2352 = vmatpush2.bf16.msra.mxu0 %v2058
    %2353 = vmatprep.subr.bf16.mxu0 %v2055
    %2354 = vmatpush2.bf16.msra.mxu0 %v2054
    %2355 = vmatprep.subr.bf16.mxu0 %v2051
    %2356 = vmatpush2.bf16.msra.mxu0 %v2050
    %2357 = vmatprep.subr.bf16.mxu0 %v2047
    %2358 = vmatpush2.bf16.msra.mxu0 %v2046
    %2359 = vmatprep.mubr.bf16.mxu0 %v1413
    %2360 = vmatmul.mubr.bf16.gmra.mxu0 %v1412
    %v2361 = vpop.f32.mrf.mxu0
    %v2362 = vadd.f32 %v2321, %v2361
    %v2363 = vpop.f32.mrf.mxu0
    %v2364 = vadd.f32 %v2323, %v2363
    %v2365 = vpop.f32.mrf.mxu0
    %v2366 = vpop.f32.mrf.mxu0
    %2367 = vdwg.mxu0
    %v2368 = vadd.f32 %v2280, %v444
    %v2369 = vadd.f32 %v2282, %v445
    %v2370 = vadd.f32 %v2362, %v446
    %v2371 = vadd.f32 %v2364, %v447
    %v2372 = vmax.f32 %v2368, 0.0
    %v2373 = vmax.f32 %v2369, 0.0
    %v2374 = vmax.f32 %v2370, 0.0
    %v2375 = vmax.f32 %v2371, 0.0
    %v2376 = vpack.c.bf16 %v2372, %v2372
    %v2377 = vpack.c.bf16 %v2373, %v2373
    %v2378 = vpack.c.bf16 %v2374, %v2374
    %v2379 = vpack.c.bf16 %v2375, %v2375
    %v2380 = vld [vmem:[#allocation7] sm:$0xff]
    %v2381 = vld [vmem:[#allocation7 + $0x8] sm:$0xff]
    %v2382 = vld [vmem:[#allocation7 + $0x10] sm:$0xff]
    %v2383 = vld [vmem:[#allocation7 + $0x18] sm:$0xff]
    %v2384 = vld [vmem:[#allocation7 + $0x20] sm:$0xff]
    %v2385 = vld [vmem:[#allocation7 + $0x28] sm:$0xff]
    %v2386 = vld [vmem:[#allocation7 + $0x30] sm:$0xff]
    %v2387 = vld [vmem:[#allocation7 + $0x38] sm:$0xff]
    %v2388 = vld [vmem:[#allocation7 + $0x40] sm:$0xff]
    %v2389 = vld [vmem:[#allocation7 + $0x48] sm:$0xff]
    %v2390 = vld [vmem:[#allocation7 + $0x50] sm:$0xff]
    %v2391 = vld [vmem:[#allocation7 + $0x58] sm:$0xff]
    %v2392 = vld [vmem:[#allocation7 + $0x60] sm:$0xff]
    %v2393 = vld [vmem:[#allocation7 + $0x68] sm:$0xff]
    %v2394 = vld [vmem:[#allocation7 + $0x70] sm:$0xff]
    %v2395 = vld [vmem:[#allocation7 + $0x78] sm:$0xff]
    %v2396 = vld [vmem:[#allocation7 + $0x80] sm:$0xff]
    %v2397 = vld [vmem:[#allocation7 + $0x88] sm:$0xff]
    %v2398 = vld [vmem:[#allocation7 + $0x90] sm:$0xff]
    %v2399 = vld [vmem:[#allocation7 + $0x98] sm:$0xff]
    %v2400 = vld [vmem:[#allocation7 + $0xa0] sm:$0xff]
    %v2401 = vld [vmem:[#allocation7 + $0xa8] sm:$0xff]
    %v2402 = vld [vmem:[#allocation7 + $0xb0] sm:$0xff]
    %v2403 = vld [vmem:[#allocation7 + $0xb8] sm:$0xff]
    %v2404 = vld [vmem:[#allocation7 + $0xc0] sm:$0xff]
    %v2405 = vld [vmem:[#allocation7 + $0xc8] sm:$0xff]
    %v2406 = vld [vmem:[#allocation7 + $0xd0] sm:$0xff]
    %v2407 = vld [vmem:[#allocation7 + $0xd8] sm:$0xff]
    %v2408 = vld [vmem:[#allocation7 + $0xe0] sm:$0xff]
    %v2409 = vld [vmem:[#allocation7 + $0xe8] sm:$0xff]
    %v2410 = vld [vmem:[#allocation7 + $0xf0] sm:$0xff]
    %v2411 = vld [vmem:[#allocation7 + $0xf8] sm:$0xff]
    %v2412 = vld [vmem:[#allocation7 + $0x100] sm:$0xff]
    %v2413 = vld [vmem:[#allocation7 + $0x108] sm:$0xff]
    %v2414 = vld [vmem:[#allocation7 + $0x110] sm:$0xff]
    %v2415 = vld [vmem:[#allocation7 + $0x118] sm:$0xff]
    %v2416 = vld [vmem:[#allocation7 + $0x120] sm:$0xff]
    %v2417 = vld [vmem:[#allocation7 + $0x128] sm:$0xff]
    %v2418 = vld [vmem:[#allocation7 + $0x130] sm:$0xff]
    %v2419 = vld [vmem:[#allocation7 + $0x138] sm:$0xff]
    %v2420 = vld [vmem:[#allocation7 + $0x140] sm:$0xff]
    %v2421 = vld [vmem:[#allocation7 + $0x148] sm:$0xff]
    %v2422 = vld [vmem:[#allocation7 + $0x150] sm:$0xff]
    %v2423 = vld [vmem:[#allocation7 + $0x158] sm:$0xff]
    %v2424 = vld [vmem:[#allocation7 + $0x160] sm:$0xff]
    %v2425 = vld [vmem:[#allocation7 + $0x168] sm:$0xff]
    %v2426 = vld [vmem:[#allocation7 + $0x170] sm:$0xff]
    %v2427 = vld [vmem:[#allocation7 + $0x178] sm:$0xff]
    %v2428 = vld [vmem:[#allocation7 + $0x180] sm:$0xff]
    %v2429 = vld [vmem:[#allocation7 + $0x188] sm:$0xff]
    %v2430 = vld [vmem:[#allocation7 + $0x190] sm:$0xff]
    %v2431 = vld [vmem:[#allocation7 + $0x198] sm:$0xff]
    %v2432 = vld [vmem:[#allocation7 + $0x1a0] sm:$0xff]
    %v2433 = vld [vmem:[#allocation7 + $0x1a8] sm:$0xff]
    %v2434 = vld [vmem:[#allocation7 + $0x1b0] sm:$0xff]
    %v2435 = vld [vmem:[#allocation7 + $0x1b8] sm:$0xff]
    %v2436 = vld [vmem:[#allocation7 + $0x1c0] sm:$0xff]
    %v2437 = vld [vmem:[#allocation7 + $0x1c8] sm:$0xff]
    %v2438 = vld [vmem:[#allocation7 + $0x1d0] sm:$0xff]
    %v2439 = vld [vmem:[#allocation7 + $0x1d8] sm:$0xff]
    %v2440 = vld [vmem:[#allocation7 + $0x1e0] sm:$0xff]
    %v2441 = vld [vmem:[#allocation7 + $0x1e8] sm:$0xff]
    %v2442 = vld [vmem:[#allocation7 + $0x1f0] sm:$0xff]
    %v2443 = vld [vmem:[#allocation7 + $0x1f8] sm:$0xff]
    %v2444 = vld [vmem:[#allocation7 + $0x200] sm:$0xff]
    %v2445 = vld [vmem:[#allocation7 + $0x208] sm:$0xff]
    %v2446 = vld [vmem:[#allocation7 + $0x210] sm:$0xff]
    %v2447 = vld [vmem:[#allocation7 + $0x218] sm:$0xff]
    %v2448 = vld [vmem:[#allocation7 + $0x220] sm:$0xff]
    %v2449 = vld [vmem:[#allocation7 + $0x228] sm:$0xff]
    %v2450 = vld [vmem:[#allocation7 + $0x230] sm:$0xff]
    %v2451 = vld [vmem:[#allocation7 + $0x238] sm:$0xff]
    %v2452 = vld [vmem:[#allocation7 + $0x240] sm:$0xff]
    %v2453 = vld [vmem:[#allocation7 + $0x248] sm:$0xff]
    %v2454 = vld [vmem:[#allocation7 + $0x250] sm:$0xff]
    %v2455 = vld [vmem:[#allocation7 + $0x258] sm:$0xff]
    %v2456 = vld [vmem:[#allocation7 + $0x260] sm:$0xff]
    %v2457 = vld [vmem:[#allocation7 + $0x268] sm:$0xff]
    %v2458 = vld [vmem:[#allocation7 + $0x270] sm:$0xff]
    %v2459 = vld [vmem:[#allocation7 + $0x278] sm:$0xff]
    %v2460 = vld [vmem:[#allocation7 + $0x280] sm:$0xff]
    %v2461 = vld [vmem:[#allocation7 + $0x288] sm:$0xff]
    %v2462 = vld [vmem:[#allocation7 + $0x290] sm:$0xff]
    %v2463 = vld [vmem:[#allocation7 + $0x298] sm:$0xff]
    %v2464 = vld [vmem:[#allocation7 + $0x2a0] sm:$0xff]
    %v2465 = vld [vmem:[#allocation7 + $0x2a8] sm:$0xff]
    %v2466 = vld [vmem:[#allocation7 + $0x2b0] sm:$0xff]
    %v2467 = vld [vmem:[#allocation7 + $0x2b8] sm:$0xff]
    %v2468 = vld [vmem:[#allocation7 + $0x2c0] sm:$0xff]
    %v2469 = vld [vmem:[#allocation7 + $0x2c8] sm:$0xff]
    %v2470 = vld [vmem:[#allocation7 + $0x2d0] sm:$0xff]
    %v2471 = vld [vmem:[#allocation7 + $0x2d8] sm:$0xff]
    %v2472 = vld [vmem:[#allocation7 + $0x2e0] sm:$0xff]
    %v2473 = vld [vmem:[#allocation7 + $0x2e8] sm:$0xff]
    %v2474 = vld [vmem:[#allocation7 + $0x2f0] sm:$0xff]
    %v2475 = vld [vmem:[#allocation7 + $0x2f8] sm:$0xff]
    %v2476 = vld [vmem:[#allocation7 + $0x300] sm:$0xff]
    %v2477 = vld [vmem:[#allocation7 + $0x308] sm:$0xff]
    %v2478 = vld [vmem:[#allocation7 + $0x310] sm:$0xff]
    %v2479 = vld [vmem:[#allocation7 + $0x318] sm:$0xff]
    %v2480 = vld [vmem:[#allocation7 + $0x320] sm:$0xff]
    %v2481 = vld [vmem:[#allocation7 + $0x328] sm:$0xff]
    %v2482 = vld [vmem:[#allocation7 + $0x330] sm:$0xff]
    %v2483 = vld [vmem:[#allocation7 + $0x338] sm:$0xff]
    %v2484 = vld [vmem:[#allocation7 + $0x340] sm:$0xff]
    %v2485 = vld [vmem:[#allocation7 + $0x348] sm:$0xff]
    %v2486 = vld [vmem:[#allocation7 + $0x350] sm:$0xff]
    %v2487 = vld [vmem:[#allocation7 + $0x358] sm:$0xff]
    %v2488 = vld [vmem:[#allocation7 + $0x360] sm:$0xff]
    %v2489 = vld [vmem:[#allocation7 + $0x368] sm:$0xff]
    %v2490 = vld [vmem:[#allocation7 + $0x370] sm:$0xff]
    %v2491 = vld [vmem:[#allocation7 + $0x378] sm:$0xff]
    %v2492 = vld [vmem:[#allocation7 + $0x380] sm:$0xff]
    %v2493 = vld [vmem:[#allocation7 + $0x388] sm:$0xff]
    %v2494 = vld [vmem:[#allocation7 + $0x390] sm:$0xff]
    %v2495 = vld [vmem:[#allocation7 + $0x398] sm:$0xff]
    %v2496 = vld [vmem:[#allocation7 + $0x3a0] sm:$0xff]
    %v2497 = vld [vmem:[#allocation7 + $0x3a8] sm:$0xff]
    %v2498 = vld [vmem:[#allocation7 + $0x3b0] sm:$0xff]
    %v2499 = vld [vmem:[#allocation7 + $0x3b8] sm:$0xff]
    %v2500 = vld [vmem:[#allocation7 + $0x3c0] sm:$0xff]
    %v2501 = vld [vmem:[#allocation7 + $0x3c8] sm:$0xff]
    %v2502 = vld [vmem:[#allocation7 + $0x3d0] sm:$0xff]
    %v2503 = vld [vmem:[#allocation7 + $0x3d8] sm:$0xff]
    %v2504 = vld [vmem:[#allocation7 + $0x3e0] sm:$0xff]
    %v2505 = vld [vmem:[#allocation7 + $0x3e8] sm:$0xff]
    %v2506 = vld [vmem:[#allocation7 + $0x3f0] sm:$0xff]
    %v2507 = vld [vmem:[#allocation7 + $0x3f8] sm:$0xff]
    %v2508 = vld [vmem:[%s8] sm:$0xf]
    %v2510 = vlaneseq
    %v2511 = vshrl.u32 %v2510, 7
    %v2512 = vsub.s32 0, %v2511
    %v2513 = vrot.slane %v2508, %v2512
    %v2514 = vlaneseq
    %v2515 = vshrl.u32 %v2514, 7
    %v2516 = vsub.s32 1, %v2515
    %v2517 = vrot.slane %v2508, %v2516
    %v2518 = vlaneseq
    %v2519 = vshrl.u32 %v2518, 7
    %v2520 = vsub.s32 2, %v2519
    %v2521 = vrot.slane %v2508, %v2520
    %v2522 = vlaneseq
    %v2523 = vshrl.u32 %v2522, 7
    %v2524 = vsub.s32 3, %v2523
    %v2525 = vrot.slane %v2508, %v2524
    %v2658 = vunpack.c.l.b16 %v2380
    %v2659 = vunpack.c.h.b16 %v2380
    %v2660 = vunpack.c.l.b16 %v2381
    %v2661 = vunpack.c.h.b16 %v2381
    %v2662 = vunpack.c.l.b16 %v2382
    %v2663 = vunpack.c.h.b16 %v2382
    %v2664 = vunpack.c.l.b16 %v2383
    %v2665 = vunpack.c.h.b16 %v2383
    %v2666 = vunpack.c.l.b16 %v2384
    %v2667 = vunpack.c.h.b16 %v2384
    %v2668 = vunpack.c.l.b16 %v2385
    %v2669 = vunpack.c.h.b16 %v2385
    %v2670 = vunpack.c.l.b16 %v2386
    %v2671 = vunpack.c.h.b16 %v2386
    %v2672 = vunpack.c.l.b16 %v2387
    %v2673 = vunpack.c.h.b16 %v2387
    %v2674 = vunpack.c.l.b16 %v2388
    %v2675 = vunpack.c.h.b16 %v2388
    %v2676 = vunpack.c.l.b16 %v2389
    %v2677 = vunpack.c.h.b16 %v2389
    %v2678 = vunpack.c.l.b16 %v2390
    %v2679 = vunpack.c.h.b16 %v2390
    %v2680 = vunpack.c.l.b16 %v2391
    %v2681 = vunpack.c.h.b16 %v2391
    %v2682 = vunpack.c.l.b16 %v2392
    %v2683 = vunpack.c.h.b16 %v2392
    %v2684 = vunpack.c.l.b16 %v2393
    %v2685 = vunpack.c.h.b16 %v2393
    %v2686 = vunpack.c.l.b16 %v2394
    %v2687 = vunpack.c.h.b16 %v2394
    %v2688 = vunpack.c.l.b16 %v2395
    %v2689 = vunpack.c.h.b16 %v2395
    %v2690 = vunpack.c.l.b16 %v2396
    %v2691 = vunpack.c.h.b16 %v2396
    %v2692 = vunpack.c.l.b16 %v2397
    %v2693 = vunpack.c.h.b16 %v2397
    %v2694 = vunpack.c.l.b16 %v2398
    %v2695 = vunpack.c.h.b16 %v2398
    %v2696 = vunpack.c.l.b16 %v2399
    %v2697 = vunpack.c.h.b16 %v2399
    %v2698 = vunpack.c.l.b16 %v2400
    %v2699 = vunpack.c.h.b16 %v2400
    %v2700 = vunpack.c.l.b16 %v2401
    %v2701 = vunpack.c.h.b16 %v2401
    %v2702 = vunpack.c.l.b16 %v2402
    %v2703 = vunpack.c.h.b16 %v2402
    %v2704 = vunpack.c.l.b16 %v2403
    %v2705 = vunpack.c.h.b16 %v2403
    %v2706 = vunpack.c.l.b16 %v2404
    %v2707 = vunpack.c.h.b16 %v2404
    %v2708 = vunpack.c.l.b16 %v2405
    %v2709 = vunpack.c.h.b16 %v2405
    %v2710 = vunpack.c.l.b16 %v2406
    %v2711 = vunpack.c.h.b16 %v2406
    %v2712 = vunpack.c.l.b16 %v2407
    %v2713 = vunpack.c.h.b16 %v2407
    %v2714 = vunpack.c.l.b16 %v2408
    %v2715 = vunpack.c.h.b16 %v2408
    %v2716 = vunpack.c.l.b16 %v2409
    %v2717 = vunpack.c.h.b16 %v2409
    %v2718 = vunpack.c.l.b16 %v2410
    %v2719 = vunpack.c.h.b16 %v2410
    %v2720 = vunpack.c.l.b16 %v2411
    %v2721 = vunpack.c.h.b16 %v2411
    %v2722 = vunpack.c.l.b16 %v2412
    %v2723 = vunpack.c.h.b16 %v2412
    %v2724 = vunpack.c.l.b16 %v2413
    %v2725 = vunpack.c.h.b16 %v2413
    %v2726 = vunpack.c.l.b16 %v2414
    %v2727 = vunpack.c.h.b16 %v2414
    %v2728 = vunpack.c.l.b16 %v2415
    %v2729 = vunpack.c.h.b16 %v2415
    %v2730 = vunpack.c.l.b16 %v2416
    %v2731 = vunpack.c.h.b16 %v2416
    %v2732 = vunpack.c.l.b16 %v2417
    %v2733 = vunpack.c.h.b16 %v2417
    %v2734 = vunpack.c.l.b16 %v2418
    %v2735 = vunpack.c.h.b16 %v2418
    %v2736 = vunpack.c.l.b16 %v2419
    %v2737 = vunpack.c.h.b16 %v2419
    %v2738 = vunpack.c.l.b16 %v2420
    %v2739 = vunpack.c.h.b16 %v2420
    %v2740 = vunpack.c.l.b16 %v2421
    %v2741 = vunpack.c.h.b16 %v2421
    %v2742 = vunpack.c.l.b16 %v2422
    %v2743 = vunpack.c.h.b16 %v2422
    %v2744 = vunpack.c.l.b16 %v2423
    %v2745 = vunpack.c.h.b16 %v2423
    %v2746 = vunpack.c.l.b16 %v2424
    %v2747 = vunpack.c.h.b16 %v2424
    %v2748 = vunpack.c.l.b16 %v2425
    %v2749 = vunpack.c.h.b16 %v2425
    %v2750 = vunpack.c.l.b16 %v2426
    %v2751 = vunpack.c.h.b16 %v2426
    %v2752 = vunpack.c.l.b16 %v2427
    %v2753 = vunpack.c.h.b16 %v2427
    %v2754 = vunpack.c.l.b16 %v2428
    %v2755 = vunpack.c.h.b16 %v2428
    %v2756 = vunpack.c.l.b16 %v2429
    %v2757 = vunpack.c.h.b16 %v2429
    %v2758 = vunpack.c.l.b16 %v2430
    %v2759 = vunpack.c.h.b16 %v2430
    %v2760 = vunpack.c.l.b16 %v2431
    %v2761 = vunpack.c.h.b16 %v2431
    %v2762 = vunpack.c.l.b16 %v2432
    %v2763 = vunpack.c.h.b16 %v2432
    %v2764 = vunpack.c.l.b16 %v2433
    %v2765 = vunpack.c.h.b16 %v2433
    %v2766 = vunpack.c.l.b16 %v2434
    %v2767 = vunpack.c.h.b16 %v2434
    %v2768 = vunpack.c.l.b16 %v2435
    %v2769 = vunpack.c.h.b16 %v2435
    %v2770 = vunpack.c.l.b16 %v2436
    %v2771 = vunpack.c.h.b16 %v2436
    %v2772 = vunpack.c.l.b16 %v2437
    %v2773 = vunpack.c.h.b16 %v2437
    %v2774 = vunpack.c.l.b16 %v2438
    %v2775 = vunpack.c.h.b16 %v2438
    %v2776 = vunpack.c.l.b16 %v2439
    %v2777 = vunpack.c.h.b16 %v2439
    %v2778 = vunpack.c.l.b16 %v2440
    %v2779 = vunpack.c.h.b16 %v2440
    %v2780 = vunpack.c.l.b16 %v2441
    %v2781 = vunpack.c.h.b16 %v2441
    %v2782 = vunpack.c.l.b16 %v2442
    %v2783 = vunpack.c.h.b16 %v2442
    %v2784 = vunpack.c.l.b16 %v2443
    %v2785 = vunpack.c.h.b16 %v2443
    %v2786 = vunpack.c.l.b16 %v2444
    %v2787 = vunpack.c.h.b16 %v2444
    %v2788 = vunpack.c.l.b16 %v2445
    %v2789 = vunpack.c.h.b16 %v2445
    %v2790 = vunpack.c.l.b16 %v2446
    %v2791 = vunpack.c.h.b16 %v2446
    %v2792 = vunpack.c.l.b16 %v2447
    %v2793 = vunpack.c.h.b16 %v2447
    %v2794 = vunpack.c.l.b16 %v2448
    %v2795 = vunpack.c.h.b16 %v2448
    %v2796 = vunpack.c.l.b16 %v2449
    %v2797 = vunpack.c.h.b16 %v2449
    %v2798 = vunpack.c.l.b16 %v2450
    %v2799 = vunpack.c.h.b16 %v2450
    %v2800 = vunpack.c.l.b16 %v2451
    %v2801 = vunpack.c.h.b16 %v2451
    %v2802 = vunpack.c.l.b16 %v2452
    %v2803 = vunpack.c.h.b16 %v2452
    %v2804 = vunpack.c.l.b16 %v2453
    %v2805 = vunpack.c.h.b16 %v2453
    %v2806 = vunpack.c.l.b16 %v2454
    %v2807 = vunpack.c.h.b16 %v2454
    %v2808 = vunpack.c.l.b16 %v2455
    %v2809 = vunpack.c.h.b16 %v2455
    %v2810 = vunpack.c.l.b16 %v2456
    %v2811 = vunpack.c.h.b16 %v2456
    %v2812 = vunpack.c.l.b16 %v2457
    %v2813 = vunpack.c.h.b16 %v2457
    %v2814 = vunpack.c.l.b16 %v2458
    %v2815 = vunpack.c.h.b16 %v2458
    %v2816 = vunpack.c.l.b16 %v2459
    %v2817 = vunpack.c.h.b16 %v2459
    %v2818 = vunpack.c.l.b16 %v2460
    %v2819 = vunpack.c.h.b16 %v2460
    %v2820 = vunpack.c.l.b16 %v2461
    %v2821 = vunpack.c.h.b16 %v2461
    %v2822 = vunpack.c.l.b16 %v2462
    %v2823 = vunpack.c.h.b16 %v2462
    %v2824 = vunpack.c.l.b16 %v2463
    %v2825 = vunpack.c.h.b16 %v2463
    %v2826 = vunpack.c.l.b16 %v2464
    %v2827 = vunpack.c.h.b16 %v2464
    %v2828 = vunpack.c.l.b16 %v2465
    %v2829 = vunpack.c.h.b16 %v2465
    %v2830 = vunpack.c.l.b16 %v2466
    %v2831 = vunpack.c.h.b16 %v2466
    %v2832 = vunpack.c.l.b16 %v2467
    %v2833 = vunpack.c.h.b16 %v2467
    %v2834 = vunpack.c.l.b16 %v2468
    %v2835 = vunpack.c.h.b16 %v2468
    %v2836 = vunpack.c.l.b16 %v2469
    %v2837 = vunpack.c.h.b16 %v2469
    %v2838 = vunpack.c.l.b16 %v2470
    %v2839 = vunpack.c.h.b16 %v2470
    %v2840 = vunpack.c.l.b16 %v2471
    %v2841 = vunpack.c.h.b16 %v2471
    %v2842 = vunpack.c.l.b16 %v2472
    %v2843 = vunpack.c.h.b16 %v2472
    %v2844 = vunpack.c.l.b16 %v2473
    %v2845 = vunpack.c.h.b16 %v2473
    %v2846 = vunpack.c.l.b16 %v2474
    %v2847 = vunpack.c.h.b16 %v2474
    %v2848 = vunpack.c.l.b16 %v2475
    %v2849 = vunpack.c.h.b16 %v2475
    %v2850 = vunpack.c.l.b16 %v2476
    %v2851 = vunpack.c.h.b16 %v2476
    %v2852 = vunpack.c.l.b16 %v2477
    %v2853 = vunpack.c.h.b16 %v2477
    %v2854 = vunpack.c.l.b16 %v2478
    %v2855 = vunpack.c.h.b16 %v2478
    %v2856 = vunpack.c.l.b16 %v2479
    %v2857 = vunpack.c.h.b16 %v2479
    %v2858 = vunpack.c.l.b16 %v2480
    %v2859 = vunpack.c.h.b16 %v2480
    %v2860 = vunpack.c.l.b16 %v2481
    %v2861 = vunpack.c.h.b16 %v2481
    %v2862 = vunpack.c.l.b16 %v2482
    %v2863 = vunpack.c.h.b16 %v2482
    %v2864 = vunpack.c.l.b16 %v2483
    %v2865 = vunpack.c.h.b16 %v2483
    %v2866 = vunpack.c.l.b16 %v2484
    %v2867 = vunpack.c.h.b16 %v2484
    %v2868 = vunpack.c.l.b16 %v2485
    %v2869 = vunpack.c.h.b16 %v2485
    %v2870 = vunpack.c.l.b16 %v2486
    %v2871 = vunpack.c.h.b16 %v2486
    %v2872 = vunpack.c.l.b16 %v2487
    %v2873 = vunpack.c.h.b16 %v2487
    %v2874 = vunpack.c.l.b16 %v2488
    %v2875 = vunpack.c.h.b16 %v2488
    %v2876 = vunpack.c.l.b16 %v2489
    %v2877 = vunpack.c.h.b16 %v2489
    %v2878 = vunpack.c.l.b16 %v2490
    %v2879 = vunpack.c.h.b16 %v2490
    %v2880 = vunpack.c.l.b16 %v2491
    %v2881 = vunpack.c.h.b16 %v2491
    %v2882 = vunpack.c.l.b16 %v2492
    %v2883 = vunpack.c.h.b16 %v2492
    %v2884 = vunpack.c.l.b16 %v2493
    %v2885 = vunpack.c.h.b16 %v2493
    %v2886 = vunpack.c.l.b16 %v2494
    %v2887 = vunpack.c.h.b16 %v2494
    %v2888 = vunpack.c.l.b16 %v2495
    %v2889 = vunpack.c.h.b16 %v2495
    %v2890 = vunpack.c.l.b16 %v2496
    %v2891 = vunpack.c.h.b16 %v2496
    %v2892 = vunpack.c.l.b16 %v2497
    %v2893 = vunpack.c.h.b16 %v2497
    %v2894 = vunpack.c.l.b16 %v2498
    %v2895 = vunpack.c.h.b16 %v2498
    %v2896 = vunpack.c.l.b16 %v2499
    %v2897 = vunpack.c.h.b16 %v2499
    %v2898 = vunpack.c.l.b16 %v2500
    %v2899 = vunpack.c.h.b16 %v2500
    %v2900 = vunpack.c.l.b16 %v2501
    %v2901 = vunpack.c.h.b16 %v2501
    %v2902 = vunpack.c.l.b16 %v2502
    %v2903 = vunpack.c.h.b16 %v2502
    %v2904 = vunpack.c.l.b16 %v2503
    %v2905 = vunpack.c.h.b16 %v2503
    %v2906 = vunpack.c.l.b16 %v2504
    %v2907 = vunpack.c.h.b16 %v2504
    %v2908 = vunpack.c.l.b16 %v2505
    %v2909 = vunpack.c.h.b16 %v2505
    %v2910 = vunpack.c.l.b16 %v2506
    %v2911 = vunpack.c.h.b16 %v2506
    %v2912 = vunpack.c.l.b16 %v2507
    %v2913 = vunpack.c.h.b16 %v2507
    %v2914 = vpack.c.b16 %v2662, %v2658
    %v2915 = vpack.c.b16 %v2663, %v2659
    %v2916 = vpack.c.b16 %v2664, %v2660
    %v2917 = vpack.c.b16 %v2665, %v2661
    %v2918 = vpack.c.b16 %v2670, %v2666
    %v2919 = vpack.c.b16 %v2671, %v2667
    %v2920 = vpack.c.b16 %v2672, %v2668
    %v2921 = vpack.c.b16 %v2673, %v2669
    %v2922 = vpack.c.b16 %v2678, %v2674
    %v2923 = vpack.c.b16 %v2679, %v2675
    %v2924 = vpack.c.b16 %v2680, %v2676
    %v2925 = vpack.c.b16 %v2681, %v2677
    %v2926 = vpack.c.b16 %v2686, %v2682
    %v2927 = vpack.c.b16 %v2687, %v2683
    %v2928 = vpack.c.b16 %v2688, %v2684
    %v2929 = vpack.c.b16 %v2689, %v2685
    %v2930 = vpack.c.b16 %v2694, %v2690
    %v2931 = vpack.c.b16 %v2695, %v2691
    %v2932 = vpack.c.b16 %v2696, %v2692
    %v2933 = vpack.c.b16 %v2697, %v2693
    %v2934 = vpack.c.b16 %v2702, %v2698
    %v2935 = vpack.c.b16 %v2703, %v2699
    %v2936 = vpack.c.b16 %v2704, %v2700
    %v2937 = vpack.c.b16 %v2705, %v2701
    %v2938 = vpack.c.b16 %v2710, %v2706
    %v2939 = vpack.c.b16 %v2711, %v2707
    %v2940 = vpack.c.b16 %v2712, %v2708
    %v2941 = vpack.c.b16 %v2713, %v2709
    %v2942 = vpack.c.b16 %v2718, %v2714
    %v2943 = vpack.c.b16 %v2719, %v2715
    %v2944 = vpack.c.b16 %v2720, %v2716
    %v2945 = vpack.c.b16 %v2721, %v2717
    %v2946 = vpack.c.b16 %v2726, %v2722
    %v2947 = vpack.c.b16 %v2727, %v2723
    %v2948 = vpack.c.b16 %v2728, %v2724
    %v2949 = vpack.c.b16 %v2729, %v2725
    %v2950 = vpack.c.b16 %v2734, %v2730
    %v2951 = vpack.c.b16 %v2735, %v2731
    %v2952 = vpack.c.b16 %v2736, %v2732
    %v2953 = vpack.c.b16 %v2737, %v2733
    %v2954 = vpack.c.b16 %v2742, %v2738
    %v2955 = vpack.c.b16 %v2743, %v2739
    %v2956 = vpack.c.b16 %v2744, %v2740
    %v2957 = vpack.c.b16 %v2745, %v2741
    %v2958 = vpack.c.b16 %v2750, %v2746
    %v2959 = vpack.c.b16 %v2751, %v2747
    %v2960 = vpack.c.b16 %v2752, %v2748
    %v2961 = vpack.c.b16 %v2753, %v2749
    %v2962 = vpack.c.b16 %v2758, %v2754
    %v2963 = vpack.c.b16 %v2759, %v2755
    %v2964 = vpack.c.b16 %v2760, %v2756
    %v2965 = vpack.c.b16 %v2761, %v2757
    %v2966 = vpack.c.b16 %v2766, %v2762
    %v2967 = vpack.c.b16 %v2767, %v2763
    %v2968 = vpack.c.b16 %v2768, %v2764
    %v2969 = vpack.c.b16 %v2769, %v2765
    %v2970 = vpack.c.b16 %v2774, %v2770
    %v2971 = vpack.c.b16 %v2775, %v2771
    %v2972 = vpack.c.b16 %v2776, %v2772
    %v2973 = vpack.c.b16 %v2777, %v2773
    %v2974 = vpack.c.b16 %v2782, %v2778
    %v2975 = vpack.c.b16 %v2783, %v2779
    %v2976 = vpack.c.b16 %v2784, %v2780
    %v2977 = vpack.c.b16 %v2785, %v2781
    %v2978 = vpack.c.b16 %v2790, %v2786
    %v2979 = vpack.c.b16 %v2791, %v2787
    %v2980 = vpack.c.b16 %v2792, %v2788
    %v2981 = vpack.c.b16 %v2793, %v2789
    %v2982 = vpack.c.b16 %v2798, %v2794
    %v2983 = vpack.c.b16 %v2799, %v2795
    %v2984 = vpack.c.b16 %v2800, %v2796
    %v2985 = vpack.c.b16 %v2801, %v2797
    %v2986 = vpack.c.b16 %v2806, %v2802
    %v2987 = vpack.c.b16 %v2807, %v2803
    %v2988 = vpack.c.b16 %v2808, %v2804
    %v2989 = vpack.c.b16 %v2809, %v2805
    %v2990 = vpack.c.b16 %v2814, %v2810
    %v2991 = vpack.c.b16 %v2815, %v2811
    %v2992 = vpack.c.b16 %v2816, %v2812
    %v2993 = vpack.c.b16 %v2817, %v2813
    %v2994 = vpack.c.b16 %v2822, %v2818
    %v2995 = vpack.c.b16 %v2823, %v2819
    %v2996 = vpack.c.b16 %v2824, %v2820
    %v2997 = vpack.c.b16 %v2825, %v2821
    %v2998 = vpack.c.b16 %v2830, %v2826
    %v2999 = vpack.c.b16 %v2831, %v2827
    %v3000 = vpack.c.b16 %v2832, %v2828
    %v3001 = vpack.c.b16 %v2833, %v2829
    %v3002 = vpack.c.b16 %v2838, %v2834
    %v3003 = vpack.c.b16 %v2839, %v2835
    %v3004 = vpack.c.b16 %v2840, %v2836
    %v3005 = vpack.c.b16 %v2841, %v2837
    %v3006 = vpack.c.b16 %v2846, %v2842
    %v3007 = vpack.c.b16 %v2847, %v2843
    %v3008 = vpack.c.b16 %v2848, %v2844
    %v3009 = vpack.c.b16 %v2849, %v2845
    %v3010 = vpack.c.b16 %v2854, %v2850
    %v3011 = vpack.c.b16 %v2855, %v2851
    %v3012 = vpack.c.b16 %v2856, %v2852
    %v3013 = vpack.c.b16 %v2857, %v2853
    %v3014 = vpack.c.b16 %v2862, %v2858
    %v3015 = vpack.c.b16 %v2863, %v2859
    %v3016 = vpack.c.b16 %v2864, %v2860
    %v3017 = vpack.c.b16 %v2865, %v2861
    %v3018 = vpack.c.b16 %v2870, %v2866
    %v3019 = vpack.c.b16 %v2871, %v2867
    %v3020 = vpack.c.b16 %v2872, %v2868
    %v3021 = vpack.c.b16 %v2873, %v2869
    %v3022 = vpack.c.b16 %v2878, %v2874
    %v3023 = vpack.c.b16 %v2879, %v2875
    %v3024 = vpack.c.b16 %v2880, %v2876
    %v3025 = vpack.c.b16 %v2881, %v2877
    %v3026 = vpack.c.b16 %v2886, %v2882
    %v3027 = vpack.c.b16 %v2887, %v2883
    %v3028 = vpack.c.b16 %v2888, %v2884
    %v3029 = vpack.c.b16 %v2889, %v2885
    %v3030 = vpack.c.b16 %v2894, %v2890
    %v3031 = vpack.c.b16 %v2895, %v2891
    %v3032 = vpack.c.b16 %v2896, %v2892
    %v3033 = vpack.c.b16 %v2897, %v2893
    %v3034 = vpack.c.b16 %v2902, %v2898
    %v3035 = vpack.c.b16 %v2903, %v2899
    %v3036 = vpack.c.b16 %v2904, %v2900
    %v3037 = vpack.c.b16 %v2905, %v2901
    %v3038 = vpack.c.b16 %v2910, %v2906
    %v3039 = vpack.c.b16 %v2911, %v2907
    %v3040 = vpack.c.b16 %v2912, %v2908
    %v3041 = vpack.c.b16 %v2913, %v2909
    %3170 = vmatprep.subr.bf16.mxu0 %v2943
    %3171 = vmatpush1.bf16.msra.mxu0 %v2942
    %3172 = vmatprep.subr.bf16.mxu0 %v2939
    %3173 = vmatpush1.bf16.msra.mxu0 %v2938
    %3174 = vmatprep.subr.bf16.mxu0 %v2935
    %3175 = vmatpush1.bf16.msra.mxu0 %v2934
    %3176 = vmatprep.subr.bf16.mxu0 %v2931
    %3177 = vmatpush1.bf16.msra.mxu0 %v2930
    %3178 = vmatprep.subr.bf16.mxu0 %v2927
    %3179 = vmatpush1.bf16.msra.mxu0 %v2926
    %3180 = vmatprep.subr.bf16.mxu0 %v2923
    %3181 = vmatpush1.bf16.msra.mxu0 %v2922
    %3182 = vmatprep.subr.bf16.mxu0 %v2919
    %3183 = vmatpush1.bf16.msra.mxu0 %v2918
    %3184 = vmatprep.subr.bf16.mxu0 %v2915
    %3185 = vmatpush1.bf16.msra.mxu0 %v2914
    %3186 = vmatprep.subr.bf16.mxu0 %v2975
    %3187 = vmatpush2.bf16.msra.mxu0 %v2974
    %3188 = vmatprep.subr.bf16.mxu0 %v2971
    %3189 = vmatpush2.bf16.msra.mxu0 %v2970
    %3190 = vmatprep.subr.bf16.mxu0 %v2967
    %3191 = vmatpush2.bf16.msra.mxu0 %v2966
    %3192 = vmatprep.subr.bf16.mxu0 %v2963
    %3193 = vmatpush2.bf16.msra.mxu0 %v2962
    %3194 = vmatprep.subr.bf16.mxu0 %v2959
    %3195 = vmatpush2.bf16.msra.mxu0 %v2958
    %3196 = vmatprep.subr.bf16.mxu0 %v2955
    %3197 = vmatpush2.bf16.msra.mxu0 %v2954
    %3198 = vmatprep.subr.bf16.mxu0 %v2951
    %3199 = vmatpush2.bf16.msra.mxu0 %v2950
    %3200 = vmatprep.subr.bf16.mxu0 %v2947
    %3201 = vmatpush2.bf16.msra.mxu0 %v2946
    %3202 = vmatprep.mubr.bf16.mxu0 %v2377
    %3203 = vmatmul.mubr.bf16.gmra.mxu0 %v2376
    %v3204 = vpop.f32.mrf.mxu0
    %v3205 = vadd.f32 %v2513, %v3204
    %v3206 = vpop.f32.mrf.mxu0
    %v3207 = vadd.f32 %v2517, %v3206
    %v3208 = vpop.f32.mrf.mxu0
    %v3209 = vpop.f32.mrf.mxu0
    %3210 = vdwg.mxu0
    %3211 = vmatprep.subr.bf16.mxu0 %v3007
    %3212 = vmatpush1.bf16.msra.mxu0 %v3006
    %3213 = vmatprep.subr.bf16.mxu0 %v3003
    %3214 = vmatpush1.bf16.msra.mxu0 %v3002
    %3215 = vmatprep.subr.bf16.mxu0 %v2999
    %3216 = vmatpush1.bf16.msra.mxu0 %v2998
    %3217 = vmatprep.subr.bf16.mxu0 %v2995
    %3218 = vmatpush1.bf16.msra.mxu0 %v2994
    %3219 = vmatprep.subr.bf16.mxu0 %v2991
    %3220 = vmatpush1.bf16.msra.mxu0 %v2990
    %3221 = vmatprep.subr.bf16.mxu0 %v2987
    %3222 = vmatpush1.bf16.msra.mxu0 %v2986
    %3223 = vmatprep.subr.bf16.mxu0 %v2983
    %3224 = vmatpush1.bf16.msra.mxu0 %v2982
    %3225 = vmatprep.subr.bf16.mxu0 %v2979
    %3226 = vmatpush1.bf16.msra.mxu0 %v2978
    %3227 = vmatprep.subr.bf16.mxu0 %v3039
    %3228 = vmatpush2.bf16.msra.mxu0 %v3038
    %3229 = vmatprep.subr.bf16.mxu0 %v3035
    %3230 = vmatpush2.bf16.msra.mxu0 %v3034
    %3231 = vmatprep.subr.bf16.mxu0 %v3031
    %3232 = vmatpush2.bf16.msra.mxu0 %v3030
    %3233 = vmatprep.subr.bf16.mxu0 %v3027
    %3234 = vmatpush2.bf16.msra.mxu0 %v3026
    %3235 = vmatprep.subr.bf16.mxu0 %v3023
    %3236 = vmatpush2.bf16.msra.mxu0 %v3022
    %3237 = vmatprep.subr.bf16.mxu0 %v3019
    %3238 = vmatpush2.bf16.msra.mxu0 %v3018
    %3239 = vmatprep.subr.bf16.mxu0 %v3015
    %3240 = vmatpush2.bf16.msra.mxu0 %v3014
    %3241 = vmatprep.subr.bf16.mxu0 %v3011
    %3242 = vmatpush2.bf16.msra.mxu0 %v3010
    %3243 = vmatprep.mubr.bf16.mxu0 %v2379
    %3244 = vmatmul.mubr.bf16.gmra.mxu0 %v2378
    %v3245 = vpop.f32.mrf.mxu0
    %v3246 = vadd.f32 %v3205, %v3245
    %v3247 = vpop.f32.mrf.mxu0
    %v3248 = vadd.f32 %v3207, %v3247
    %v3249 = vpop.f32.mrf.mxu0
    %v3250 = vpop.f32.mrf.mxu0
    %3251 = vdwg.mxu0
    %3252 = vmatprep.subr.bf16.mxu0 %v2945
    %3253 = vmatpush1.bf16.msra.mxu0 %v2944
    %3254 = vmatprep.subr.bf16.mxu0 %v2941
    %3255 = vmatpush1.bf16.msra.mxu0 %v2940
    %3256 = vmatprep.subr.bf16.mxu0 %v2937
    %3257 = vmatpush1.bf16.msra.mxu0 %v2936
    %3258 = vmatprep.subr.bf16.mxu0 %v2933
    %3259 = vmatpush1.bf16.msra.mxu0 %v2932
    %3260 = vmatprep.subr.bf16.mxu0 %v2929
    %3261 = vmatpush1.bf16.msra.mxu0 %v2928
    %3262 = vmatprep.subr.bf16.mxu0 %v2925
    %3263 = vmatpush1.bf16.msra.mxu0 %v2924
    %3264 = vmatprep.subr.bf16.mxu0 %v2921
    %3265 = vmatpush1.bf16.msra.mxu0 %v2920
    %3266 = vmatprep.subr.bf16.mxu0 %v2917
    %3267 = vmatpush1.bf16.msra.mxu0 %v2916
    %3268 = vmatprep.subr.bf16.mxu0 %v2977
    %3269 = vmatpush2.bf16.msra.mxu0 %v2976
    %3270 = vmatprep.subr.bf16.mxu0 %v2973
    %3271 = vmatpush2.bf16.msra.mxu0 %v2972
    %3272 = vmatprep.subr.bf16.mxu0 %v2969
    %3273 = vmatpush2.bf16.msra.mxu0 %v2968
    %3274 = vmatprep.subr.bf16.mxu0 %v2965
    %3275 = vmatpush2.bf16.msra.mxu0 %v2964
    %3276 = vmatprep.subr.bf16.mxu0 %v2961
    %3277 = vmatpush2.bf16.msra.mxu0 %v2960
    %3278 = vmatprep.subr.bf16.mxu0 %v2957
    %3279 = vmatpush2.bf16.msra.mxu0 %v2956
    %3280 = vmatprep.subr.bf16.mxu0 %v2953
    %3281 = vmatpush2.bf16.msra.mxu0 %v2952
    %3282 = vmatprep.subr.bf16.mxu0 %v2949
    %3283 = vmatpush2.bf16.msra.mxu0 %v2948
    %3284 = vmatprep.mubr.bf16.mxu0 %v2377
    %3285 = vmatmul.mubr.bf16.gmra.mxu0 %v2376
    %v3286 = vpop.f32.mrf.mxu0
    %v3287 = vadd.f32 %v2521, %v3286
    %v3288 = vpop.f32.mrf.mxu0
    %v3289 = vadd.f32 %v2525, %v3288
    %v3290 = vpop.f32.mrf.mxu0
    %v3291 = vpop.f32.mrf.mxu0
    %3292 = vdwg.mxu0
    %3293 = vmatprep.subr.bf16.mxu0 %v3009
    %3294 = vmatpush1.bf16.msra.mxu0 %v3008
    %3295 = vmatprep.subr.bf16.mxu0 %v3005
    %3296 = vmatpush1.bf16.msra.mxu0 %v3004
    %3297 = vmatprep.subr.bf16.mxu0 %v3001
    %3298 = vmatpush1.bf16.msra.mxu0 %v3000
    %3299 = vmatprep.subr.bf16.mxu0 %v2997
    %3300 = vmatpush1.bf16.msra.mxu0 %v2996
    %3301 = vmatprep.subr.bf16.mxu0 %v2993
    %3302 = vmatpush1.bf16.msra.mxu0 %v2992
    %3303 = vmatprep.subr.bf16.mxu0 %v2989
    %3304 = vmatpush1.bf16.msra.mxu0 %v2988
    %3305 = vmatprep.subr.bf16.mxu0 %v2985
    %3306 = vmatpush1.bf16.msra.mxu0 %v2984
    %3307 = vmatprep.subr.bf16.mxu0 %v2981
    %3308 = vmatpush1.bf16.msra.mxu0 %v2980
    %3309 = vmatprep.subr.bf16.mxu0 %v3041
    %3310 = vmatpush2.bf16.msra.mxu0 %v3040
    %3311 = vmatprep.subr.bf16.mxu0 %v3037
    %3312 = vmatpush2.bf16.msra.mxu0 %v3036
    %3313 = vmatprep.subr.bf16.mxu0 %v3033
    %3314 = vmatpush2.bf16.msra.mxu0 %v3032
    %3315 = vmatprep.subr.bf16.mxu0 %v3029
    %3316 = vmatpush2.bf16.msra.mxu0 %v3028
    %3317 = vmatprep.subr.bf16.mxu0 %v3025
    %3318 = vmatpush2.bf16.msra.mxu0 %v3024
    %3319 = vmatprep.subr.bf16.mxu0 %v3021
    %3320 = vmatpush2.bf16.msra.mxu0 %v3020
    %3321 = vmatprep.subr.bf16.mxu0 %v3017
    %3322 = vmatpush2.bf16.msra.mxu0 %v3016
    %3323 = vmatprep.subr.bf16.mxu0 %v3013
    %3324 = vmatpush2.bf16.msra.mxu0 %v3012
    %3325 = vmatprep.mubr.bf16.mxu0 %v2379
    %3326 = vmatmul.mubr.bf16.gmra.mxu0 %v2378
    %v3327 = vpop.f32.mrf.mxu0
    %v3328 = vadd.f32 %v3287, %v3327
    %v3329 = vpop.f32.mrf.mxu0
    %v3330 = vadd.f32 %v3289, %v3329
    %v3331 = vpop.f32.mrf.mxu0
    %v3332 = vpop.f32.mrf.mxu0
    %3333 = vdwg.mxu0
    %v3334 = vmax.f32 %v3246, 0.0
    %v3335 = vmax.f32 %v3248, 0.0
    %v3336 = vmax.f32 %v3328, 0.0
    %v3337 = vmax.f32 %v3330, 0.0
    %v3338 = vpack.c.bf16 %v3334, %v3334
    %v3339 = vpack.c.bf16 %v3335, %v3335
    %v3340 = vpack.c.bf16 %v3336, %v3336
    %v3341 = vpack.c.bf16 %v3337, %v3337
    %v3342 = vld [vmem:[#allocation9] sm:$0xff]
    %v3343 = vld [vmem:[#allocation9 + $0x8] sm:$0xff]
    %v3344 = vld [vmem:[#allocation9 + $0x10] sm:$0xff]
    %v3345 = vld [vmem:[#allocation9 + $0x18] sm:$0xff]
    %v3346 = vld [vmem:[#allocation9 + $0x20] sm:$0xff]
    %v3347 = vld [vmem:[#allocation9 + $0x28] sm:$0xff]
    %v3348 = vld [vmem:[#allocation9 + $0x30] sm:$0xff]
    %v3349 = vld [vmem:[#allocation9 + $0x38] sm:$0xff]
    %v3350 = vld [vmem:[#allocation9 + $0x40] sm:$0xff]
    %v3351 = vld [vmem:[#allocation9 + $0x48] sm:$0xff]
    %v3352 = vld [vmem:[#allocation9 + $0x50] sm:$0xff]
    %v3353 = vld [vmem:[#allocation9 + $0x58] sm:$0xff]
    %v3354 = vld [vmem:[#allocation9 + $0x60] sm:$0xff]
    %v3355 = vld [vmem:[#allocation9 + $0x68] sm:$0xff]
    %v3356 = vld [vmem:[#allocation9 + $0x70] sm:$0xff]
    %v3357 = vld [vmem:[#allocation9 + $0x78] sm:$0xff]
    %v3358 = vld [vmem:[#allocation9 + $0x80] sm:$0xff]
    %v3359 = vld [vmem:[#allocation9 + $0x88] sm:$0xff]
    %v3360 = vld [vmem:[#allocation9 + $0x90] sm:$0xff]
    %v3361 = vld [vmem:[#allocation9 + $0x98] sm:$0xff]
    %v3362 = vld [vmem:[#allocation9 + $0xa0] sm:$0xff]
    %v3363 = vld [vmem:[#allocation9 + $0xa8] sm:$0xff]
    %v3364 = vld [vmem:[#allocation9 + $0xb0] sm:$0xff]
    %v3365 = vld [vmem:[#allocation9 + $0xb8] sm:$0xff]
    %v3366 = vld [vmem:[#allocation9 + $0xc0] sm:$0xff]
    %v3367 = vld [vmem:[#allocation9 + $0xc8] sm:$0xff]
    %v3368 = vld [vmem:[#allocation9 + $0xd0] sm:$0xff]
    %v3369 = vld [vmem:[#allocation9 + $0xd8] sm:$0xff]
    %v3370 = vld [vmem:[#allocation9 + $0xe0] sm:$0xff]
    %v3371 = vld [vmem:[#allocation9 + $0xe8] sm:$0xff]
    %v3372 = vld [vmem:[#allocation9 + $0xf0] sm:$0xff]
    %v3373 = vld [vmem:[#allocation9 + $0xf8] sm:$0xff]
    %v3374 = vld [vmem:[#allocation9 + $0x100] sm:$0xff]
    %v3375 = vld [vmem:[#allocation9 + $0x108] sm:$0xff]
    %v3376 = vld [vmem:[#allocation9 + $0x110] sm:$0xff]
    %v3377 = vld [vmem:[#allocation9 + $0x118] sm:$0xff]
    %v3378 = vld [vmem:[#allocation9 + $0x120] sm:$0xff]
    %v3379 = vld [vmem:[#allocation9 + $0x128] sm:$0xff]
    %v3380 = vld [vmem:[#allocation9 + $0x130] sm:$0xff]
    %v3381 = vld [vmem:[#allocation9 + $0x138] sm:$0xff]
    %v3382 = vld [vmem:[#allocation9 + $0x140] sm:$0xff]
    %v3383 = vld [vmem:[#allocation9 + $0x148] sm:$0xff]
    %v3384 = vld [vmem:[#allocation9 + $0x150] sm:$0xff]
    %v3385 = vld [vmem:[#allocation9 + $0x158] sm:$0xff]
    %v3386 = vld [vmem:[#allocation9 + $0x160] sm:$0xff]
    %v3387 = vld [vmem:[#allocation9 + $0x168] sm:$0xff]
    %v3388 = vld [vmem:[#allocation9 + $0x170] sm:$0xff]
    %v3389 = vld [vmem:[#allocation9 + $0x178] sm:$0xff]
    %v3390 = vld [vmem:[#allocation9 + $0x180] sm:$0xff]
    %v3391 = vld [vmem:[#allocation9 + $0x188] sm:$0xff]
    %v3392 = vld [vmem:[#allocation9 + $0x190] sm:$0xff]
    %v3393 = vld [vmem:[#allocation9 + $0x198] sm:$0xff]
    %v3394 = vld [vmem:[#allocation9 + $0x1a0] sm:$0xff]
    %v3395 = vld [vmem:[#allocation9 + $0x1a8] sm:$0xff]
    %v3396 = vld [vmem:[#allocation9 + $0x1b0] sm:$0xff]
    %v3397 = vld [vmem:[#allocation9 + $0x1b8] sm:$0xff]
    %v3398 = vld [vmem:[#allocation9 + $0x1c0] sm:$0xff]
    %v3399 = vld [vmem:[#allocation9 + $0x1c8] sm:$0xff]
    %v3400 = vld [vmem:[#allocation9 + $0x1d0] sm:$0xff]
    %v3401 = vld [vmem:[#allocation9 + $0x1d8] sm:$0xff]
    %v3402 = vld [vmem:[#allocation9 + $0x1e0] sm:$0xff]
    %v3403 = vld [vmem:[#allocation9 + $0x1e8] sm:$0xff]
    %v3404 = vld [vmem:[#allocation9 + $0x1f0] sm:$0xff]
    %v3405 = vld [vmem:[#allocation9 + $0x1f8] sm:$0xff]
    %v3406 = vld [vmem:[#allocation9 + $0x200] sm:$0xff]
    %v3407 = vld [vmem:[#allocation9 + $0x208] sm:$0xff]
    %v3408 = vld [vmem:[#allocation9 + $0x210] sm:$0xff]
    %v3409 = vld [vmem:[#allocation9 + $0x218] sm:$0xff]
    %v3410 = vld [vmem:[#allocation9 + $0x220] sm:$0xff]
    %v3411 = vld [vmem:[#allocation9 + $0x228] sm:$0xff]
    %v3412 = vld [vmem:[#allocation9 + $0x230] sm:$0xff]
    %v3413 = vld [vmem:[#allocation9 + $0x238] sm:$0xff]
    %v3414 = vld [vmem:[#allocation9 + $0x240] sm:$0xff]
    %v3415 = vld [vmem:[#allocation9 + $0x248] sm:$0xff]
    %v3416 = vld [vmem:[#allocation9 + $0x250] sm:$0xff]
    %v3417 = vld [vmem:[#allocation9 + $0x258] sm:$0xff]
    %v3418 = vld [vmem:[#allocation9 + $0x260] sm:$0xff]
    %v3419 = vld [vmem:[#allocation9 + $0x268] sm:$0xff]
    %v3420 = vld [vmem:[#allocation9 + $0x270] sm:$0xff]
    %v3421 = vld [vmem:[#allocation9 + $0x278] sm:$0xff]
    %v3422 = vld [vmem:[#allocation9 + $0x280] sm:$0xff]
    %v3423 = vld [vmem:[#allocation9 + $0x288] sm:$0xff]
    %v3424 = vld [vmem:[#allocation9 + $0x290] sm:$0xff]
    %v3425 = vld [vmem:[#allocation9 + $0x298] sm:$0xff]
    %v3426 = vld [vmem:[#allocation9 + $0x2a0] sm:$0xff]
    %v3427 = vld [vmem:[#allocation9 + $0x2a8] sm:$0xff]
    %v3428 = vld [vmem:[#allocation9 + $0x2b0] sm:$0xff]
    %v3429 = vld [vmem:[#allocation9 + $0x2b8] sm:$0xff]
    %v3430 = vld [vmem:[#allocation9 + $0x2c0] sm:$0xff]
    %v3431 = vld [vmem:[#allocation9 + $0x2c8] sm:$0xff]
    %v3432 = vld [vmem:[#allocation9 + $0x2d0] sm:$0xff]
    %v3433 = vld [vmem:[#allocation9 + $0x2d8] sm:$0xff]
    %v3434 = vld [vmem:[#allocation9 + $0x2e0] sm:$0xff]
    %v3435 = vld [vmem:[#allocation9 + $0x2e8] sm:$0xff]
    %v3436 = vld [vmem:[#allocation9 + $0x2f0] sm:$0xff]
    %v3437 = vld [vmem:[#allocation9 + $0x2f8] sm:$0xff]
    %v3438 = vld [vmem:[#allocation9 + $0x300] sm:$0xff]
    %v3439 = vld [vmem:[#allocation9 + $0x308] sm:$0xff]
    %v3440 = vld [vmem:[#allocation9 + $0x310] sm:$0xff]
    %v3441 = vld [vmem:[#allocation9 + $0x318] sm:$0xff]
    %v3442 = vld [vmem:[#allocation9 + $0x320] sm:$0xff]
    %v3443 = vld [vmem:[#allocation9 + $0x328] sm:$0xff]
    %v3444 = vld [vmem:[#allocation9 + $0x330] sm:$0xff]
    %v3445 = vld [vmem:[#allocation9 + $0x338] sm:$0xff]
    %v3446 = vld [vmem:[#allocation9 + $0x340] sm:$0xff]
    %v3447 = vld [vmem:[#allocation9 + $0x348] sm:$0xff]
    %v3448 = vld [vmem:[#allocation9 + $0x350] sm:$0xff]
    %v3449 = vld [vmem:[#allocation9 + $0x358] sm:$0xff]
    %v3450 = vld [vmem:[#allocation9 + $0x360] sm:$0xff]
    %v3451 = vld [vmem:[#allocation9 + $0x368] sm:$0xff]
    %v3452 = vld [vmem:[#allocation9 + $0x370] sm:$0xff]
    %v3453 = vld [vmem:[#allocation9 + $0x378] sm:$0xff]
    %v3454 = vld [vmem:[#allocation9 + $0x380] sm:$0xff]
    %v3455 = vld [vmem:[#allocation9 + $0x388] sm:$0xff]
    %v3456 = vld [vmem:[#allocation9 + $0x390] sm:$0xff]
    %v3457 = vld [vmem:[#allocation9 + $0x398] sm:$0xff]
    %v3458 = vld [vmem:[#allocation9 + $0x3a0] sm:$0xff]
    %v3459 = vld [vmem:[#allocation9 + $0x3a8] sm:$0xff]
    %v3460 = vld [vmem:[#allocation9 + $0x3b0] sm:$0xff]
    %v3461 = vld [vmem:[#allocation9 + $0x3b8] sm:$0xff]
    %v3462 = vld [vmem:[#allocation9 + $0x3c0] sm:$0xff]
    %v3463 = vld [vmem:[#allocation9 + $0x3c8] sm:$0xff]
    %v3464 = vld [vmem:[#allocation9 + $0x3d0] sm:$0xff]
    %v3465 = vld [vmem:[#allocation9 + $0x3d8] sm:$0xff]
    %v3466 = vld [vmem:[#allocation9 + $0x3e0] sm:$0xff]
    %v3467 = vld [vmem:[#allocation9 + $0x3e8] sm:$0xff]
    %v3468 = vld [vmem:[#allocation9 + $0x3f0] sm:$0xff]
    %v3469 = vld [vmem:[#allocation9 + $0x3f8] sm:$0xff]
    %v3470 = vld [vmem:[%s10] sm:$0xf]
    %v3472 = vlaneseq
    %v3473 = vshrl.u32 %v3472, 7
    %v3474 = vsub.s32 0, %v3473
    %v3475 = vrot.slane %v3470, %v3474
    %v3476 = vlaneseq
    %v3477 = vshrl.u32 %v3476, 7
    %v3478 = vsub.s32 1, %v3477
    %v3479 = vrot.slane %v3470, %v3478
    %v3480 = vlaneseq
    %v3481 = vshrl.u32 %v3480, 7
    %v3482 = vsub.s32 2, %v3481
    %v3483 = vrot.slane %v3470, %v3482
    %v3484 = vlaneseq
    %v3485 = vshrl.u32 %v3484, 7
    %v3486 = vsub.s32 3, %v3485
    %v3487 = vrot.slane %v3470, %v3486
    %v3620 = vunpack.c.l.b16 %v3342
    %v3621 = vunpack.c.h.b16 %v3342
    %v3622 = vunpack.c.l.b16 %v3343
    %v3623 = vunpack.c.h.b16 %v3343
    %v3624 = vunpack.c.l.b16 %v3344
    %v3625 = vunpack.c.h.b16 %v3344
    %v3626 = vunpack.c.l.b16 %v3345
    %v3627 = vunpack.c.h.b16 %v3345
    %v3628 = vunpack.c.l.b16 %v3346
    %v3629 = vunpack.c.h.b16 %v3346
    %v3630 = vunpack.c.l.b16 %v3347
    %v3631 = vunpack.c.h.b16 %v3347
    %v3632 = vunpack.c.l.b16 %v3348
    %v3633 = vunpack.c.h.b16 %v3348
    %v3634 = vunpack.c.l.b16 %v3349
    %v3635 = vunpack.c.h.b16 %v3349
    %v3636 = vunpack.c.l.b16 %v3350
    %v3637 = vunpack.c.h.b16 %v3350
    %v3638 = vunpack.c.l.b16 %v3351
    %v3639 = vunpack.c.h.b16 %v3351
    %v3640 = vunpack.c.l.b16 %v3352
    %v3641 = vunpack.c.h.b16 %v3352
    %v3642 = vunpack.c.l.b16 %v3353
    %v3643 = vunpack.c.h.b16 %v3353
    %v3644 = vunpack.c.l.b16 %v3354
    %v3645 = vunpack.c.h.b16 %v3354
    %v3646 = vunpack.c.l.b16 %v3355
    %v3647 = vunpack.c.h.b16 %v3355
    %v3648 = vunpack.c.l.b16 %v3356
    %v3649 = vunpack.c.h.b16 %v3356
    %v3650 = vunpack.c.l.b16 %v3357
    %v3651 = vunpack.c.h.b16 %v3357
    %v3652 = vunpack.c.l.b16 %v3358
    %v3653 = vunpack.c.h.b16 %v3358
    %v3654 = vunpack.c.l.b16 %v3359
    %v3655 = vunpack.c.h.b16 %v3359
    %v3656 = vunpack.c.l.b16 %v3360
    %v3657 = vunpack.c.h.b16 %v3360
    %v3658 = vunpack.c.l.b16 %v3361
    %v3659 = vunpack.c.h.b16 %v3361
    %v3660 = vunpack.c.l.b16 %v3362
    %v3661 = vunpack.c.h.b16 %v3362
    %v3662 = vunpack.c.l.b16 %v3363
    %v3663 = vunpack.c.h.b16 %v3363
    %v3664 = vunpack.c.l.b16 %v3364
    %v3665 = vunpack.c.h.b16 %v3364
    %v3666 = vunpack.c.l.b16 %v3365
    %v3667 = vunpack.c.h.b16 %v3365
    %v3668 = vunpack.c.l.b16 %v3366
    %v3669 = vunpack.c.h.b16 %v3366
    %v3670 = vunpack.c.l.b16 %v3367
    %v3671 = vunpack.c.h.b16 %v3367
    %v3672 = vunpack.c.l.b16 %v3368
    %v3673 = vunpack.c.h.b16 %v3368
    %v3674 = vunpack.c.l.b16 %v3369
    %v3675 = vunpack.c.h.b16 %v3369
    %v3676 = vunpack.c.l.b16 %v3370
    %v3677 = vunpack.c.h.b16 %v3370
    %v3678 = vunpack.c.l.b16 %v3371
    %v3679 = vunpack.c.h.b16 %v3371
    %v3680 = vunpack.c.l.b16 %v3372
    %v3681 = vunpack.c.h.b16 %v3372
    %v3682 = vunpack.c.l.b16 %v3373
    %v3683 = vunpack.c.h.b16 %v3373
    %v3684 = vunpack.c.l.b16 %v3374
    %v3685 = vunpack.c.h.b16 %v3374
    %v3686 = vunpack.c.l.b16 %v3375
    %v3687 = vunpack.c.h.b16 %v3375
    %v3688 = vunpack.c.l.b16 %v3376
    %v3689 = vunpack.c.h.b16 %v3376
    %v3690 = vunpack.c.l.b16 %v3377
    %v3691 = vunpack.c.h.b16 %v3377
    %v3692 = vunpack.c.l.b16 %v3378
    %v3693 = vunpack.c.h.b16 %v3378
    %v3694 = vunpack.c.l.b16 %v3379
    %v3695 = vunpack.c.h.b16 %v3379
    %v3696 = vunpack.c.l.b16 %v3380
    %v3697 = vunpack.c.h.b16 %v3380
    %v3698 = vunpack.c.l.b16 %v3381
    %v3699 = vunpack.c.h.b16 %v3381
    %v3700 = vunpack.c.l.b16 %v3382
    %v3701 = vunpack.c.h.b16 %v3382
    %v3702 = vunpack.c.l.b16 %v3383
    %v3703 = vunpack.c.h.b16 %v3383
    %v3704 = vunpack.c.l.b16 %v3384
    %v3705 = vunpack.c.h.b16 %v3384
    %v3706 = vunpack.c.l.b16 %v3385
    %v3707 = vunpack.c.h.b16 %v3385
    %v3708 = vunpack.c.l.b16 %v3386
    %v3709 = vunpack.c.h.b16 %v3386
    %v3710 = vunpack.c.l.b16 %v3387
    %v3711 = vunpack.c.h.b16 %v3387
    %v3712 = vunpack.c.l.b16 %v3388
    %v3713 = vunpack.c.h.b16 %v3388
    %v3714 = vunpack.c.l.b16 %v3389
    %v3715 = vunpack.c.h.b16 %v3389
    %v3716 = vunpack.c.l.b16 %v3390
    %v3717 = vunpack.c.h.b16 %v3390
    %v3718 = vunpack.c.l.b16 %v3391
    %v3719 = vunpack.c.h.b16 %v3391
    %v3720 = vunpack.c.l.b16 %v3392
    %v3721 = vunpack.c.h.b16 %v3392
    %v3722 = vunpack.c.l.b16 %v3393
    %v3723 = vunpack.c.h.b16 %v3393
    %v3724 = vunpack.c.l.b16 %v3394
    %v3725 = vunpack.c.h.b16 %v3394
    %v3726 = vunpack.c.l.b16 %v3395
    %v3727 = vunpack.c.h.b16 %v3395
    %v3728 = vunpack.c.l.b16 %v3396
    %v3729 = vunpack.c.h.b16 %v3396
    %v3730 = vunpack.c.l.b16 %v3397
    %v3731 = vunpack.c.h.b16 %v3397
    %v3732 = vunpack.c.l.b16 %v3398
    %v3733 = vunpack.c.h.b16 %v3398
    %v3734 = vunpack.c.l.b16 %v3399
    %v3735 = vunpack.c.h.b16 %v3399
    %v3736 = vunpack.c.l.b16 %v3400
    %v3737 = vunpack.c.h.b16 %v3400
    %v3738 = vunpack.c.l.b16 %v3401
    %v3739 = vunpack.c.h.b16 %v3401
    %v3740 = vunpack.c.l.b16 %v3402
    %v3741 = vunpack.c.h.b16 %v3402
    %v3742 = vunpack.c.l.b16 %v3403
    %v3743 = vunpack.c.h.b16 %v3403
    %v3744 = vunpack.c.l.b16 %v3404
    %v3745 = vunpack.c.h.b16 %v3404
    %v3746 = vunpack.c.l.b16 %v3405
    %v3747 = vunpack.c.h.b16 %v3405
    %v3748 = vunpack.c.l.b16 %v3406
    %v3749 = vunpack.c.h.b16 %v3406
    %v3750 = vunpack.c.l.b16 %v3407
    %v3751 = vunpack.c.h.b16 %v3407
    %v3752 = vunpack.c.l.b16 %v3408
    %v3753 = vunpack.c.h.b16 %v3408
    %v3754 = vunpack.c.l.b16 %v3409
    %v3755 = vunpack.c.h.b16 %v3409
    %v3756 = vunpack.c.l.b16 %v3410
    %v3757 = vunpack.c.h.b16 %v3410
    %v3758 = vunpack.c.l.b16 %v3411
    %v3759 = vunpack.c.h.b16 %v3411
    %v3760 = vunpack.c.l.b16 %v3412
    %v3761 = vunpack.c.h.b16 %v3412
    %v3762 = vunpack.c.l.b16 %v3413
    %v3763 = vunpack.c.h.b16 %v3413
    %v3764 = vunpack.c.l.b16 %v3414
    %v3765 = vunpack.c.h.b16 %v3414
    %v3766 = vunpack.c.l.b16 %v3415
    %v3767 = vunpack.c.h.b16 %v3415
    %v3768 = vunpack.c.l.b16 %v3416
    %v3769 = vunpack.c.h.b16 %v3416
    %v3770 = vunpack.c.l.b16 %v3417
    %v3771 = vunpack.c.h.b16 %v3417
    %v3772 = vunpack.c.l.b16 %v3418
    %v3773 = vunpack.c.h.b16 %v3418
    %v3774 = vunpack.c.l.b16 %v3419
    %v3775 = vunpack.c.h.b16 %v3419
    %v3776 = vunpack.c.l.b16 %v3420
    %v3777 = vunpack.c.h.b16 %v3420
    %v3778 = vunpack.c.l.b16 %v3421
    %v3779 = vunpack.c.h.b16 %v3421
    %v3780 = vunpack.c.l.b16 %v3422
    %v3781 = vunpack.c.h.b16 %v3422
    %v3782 = vunpack.c.l.b16 %v3423
    %v3783 = vunpack.c.h.b16 %v3423
    %v3784 = vunpack.c.l.b16 %v3424
    %v3785 = vunpack.c.h.b16 %v3424
    %v3786 = vunpack.c.l.b16 %v3425
    %v3787 = vunpack.c.h.b16 %v3425
    %v3788 = vunpack.c.l.b16 %v3426
    %v3789 = vunpack.c.h.b16 %v3426
    %v3790 = vunpack.c.l.b16 %v3427
    %v3791 = vunpack.c.h.b16 %v3427
    %v3792 = vunpack.c.l.b16 %v3428
    %v3793 = vunpack.c.h.b16 %v3428
    %v3794 = vunpack.c.l.b16 %v3429
    %v3795 = vunpack.c.h.b16 %v3429
    %v3796 = vunpack.c.l.b16 %v3430
    %v3797 = vunpack.c.h.b16 %v3430
    %v3798 = vunpack.c.l.b16 %v3431
    %v3799 = vunpack.c.h.b16 %v3431
    %v3800 = vunpack.c.l.b16 %v3432
    %v3801 = vunpack.c.h.b16 %v3432
    %v3802 = vunpack.c.l.b16 %v3433
    %v3803 = vunpack.c.h.b16 %v3433
    %v3804 = vunpack.c.l.b16 %v3434
    %v3805 = vunpack.c.h.b16 %v3434
    %v3806 = vunpack.c.l.b16 %v3435
    %v3807 = vunpack.c.h.b16 %v3435
    %v3808 = vunpack.c.l.b16 %v3436
    %v3809 = vunpack.c.h.b16 %v3436
    %v3810 = vunpack.c.l.b16 %v3437
    %v3811 = vunpack.c.h.b16 %v3437
    %v3812 = vunpack.c.l.b16 %v3438
    %v3813 = vunpack.c.h.b16 %v3438
    %v3814 = vunpack.c.l.b16 %v3439
    %v3815 = vunpack.c.h.b16 %v3439
    %v3816 = vunpack.c.l.b16 %v3440
    %v3817 = vunpack.c.h.b16 %v3440
    %v3818 = vunpack.c.l.b16 %v3441
    %v3819 = vunpack.c.h.b16 %v3441
    %v3820 = vunpack.c.l.b16 %v3442
    %v3821 = vunpack.c.h.b16 %v3442
    %v3822 = vunpack.c.l.b16 %v3443
    %v3823 = vunpack.c.h.b16 %v3443
    %v3824 = vunpack.c.l.b16 %v3444
    %v3825 = vunpack.c.h.b16 %v3444
    %v3826 = vunpack.c.l.b16 %v3445
    %v3827 = vunpack.c.h.b16 %v3445
    %v3828 = vunpack.c.l.b16 %v3446
    %v3829 = vunpack.c.h.b16 %v3446
    %v3830 = vunpack.c.l.b16 %v3447
    %v3831 = vunpack.c.h.b16 %v3447
    %v3832 = vunpack.c.l.b16 %v3448
    %v3833 = vunpack.c.h.b16 %v3448
    %v3834 = vunpack.c.l.b16 %v3449
    %v3835 = vunpack.c.h.b16 %v3449
    %v3836 = vunpack.c.l.b16 %v3450
    %v3837 = vunpack.c.h.b16 %v3450
    %v3838 = vunpack.c.l.b16 %v3451
    %v3839 = vunpack.c.h.b16 %v3451
    %v3840 = vunpack.c.l.b16 %v3452
    %v3841 = vunpack.c.h.b16 %v3452
    %v3842 = vunpack.c.l.b16 %v3453
    %v3843 = vunpack.c.h.b16 %v3453
    %v3844 = vunpack.c.l.b16 %v3454
    %v3845 = vunpack.c.h.b16 %v3454
    %v3846 = vunpack.c.l.b16 %v3455
    %v3847 = vunpack.c.h.b16 %v3455
    %v3848 = vunpack.c.l.b16 %v3456
    %v3849 = vunpack.c.h.b16 %v3456
    %v3850 = vunpack.c.l.b16 %v3457
    %v3851 = vunpack.c.h.b16 %v3457
    %v3852 = vunpack.c.l.b16 %v3458
    %v3853 = vunpack.c.h.b16 %v3458
    %v3854 = vunpack.c.l.b16 %v3459
    %v3855 = vunpack.c.h.b16 %v3459
    %v3856 = vunpack.c.l.b16 %v3460
    %v3857 = vunpack.c.h.b16 %v3460
    %v3858 = vunpack.c.l.b16 %v3461
    %v3859 = vunpack.c.h.b16 %v3461
    %v3860 = vunpack.c.l.b16 %v3462
    %v3861 = vunpack.c.h.b16 %v3462
    %v3862 = vunpack.c.l.b16 %v3463
    %v3863 = vunpack.c.h.b16 %v3463
    %v3864 = vunpack.c.l.b16 %v3464
    %v3865 = vunpack.c.h.b16 %v3464
    %v3866 = vunpack.c.l.b16 %v3465
    %v3867 = vunpack.c.h.b16 %v3465
    %v3868 = vunpack.c.l.b16 %v3466
    %v3869 = vunpack.c.h.b16 %v3466
    %v3870 = vunpack.c.l.b16 %v3467
    %v3871 = vunpack.c.h.b16 %v3467
    %v3872 = vunpack.c.l.b16 %v3468
    %v3873 = vunpack.c.h.b16 %v3468
    %v3874 = vunpack.c.l.b16 %v3469
    %v3875 = vunpack.c.h.b16 %v3469
    %v3876 = vpack.c.b16 %v3624, %v3620
    %v3877 = vpack.c.b16 %v3625, %v3621
    %v3878 = vpack.c.b16 %v3626, %v3622
    %v3879 = vpack.c.b16 %v3627, %v3623
    %v3880 = vpack.c.b16 %v3632, %v3628
    %v3881 = vpack.c.b16 %v3633, %v3629
    %v3882 = vpack.c.b16 %v3634, %v3630
    %v3883 = vpack.c.b16 %v3635, %v3631
    %v3884 = vpack.c.b16 %v3640, %v3636
    %v3885 = vpack.c.b16 %v3641, %v3637
    %v3886 = vpack.c.b16 %v3642, %v3638
    %v3887 = vpack.c.b16 %v3643, %v3639
    %v3888 = vpack.c.b16 %v3648, %v3644
    %v3889 = vpack.c.b16 %v3649, %v3645
    %v3890 = vpack.c.b16 %v3650, %v3646
    %v3891 = vpack.c.b16 %v3651, %v3647
    %v3892 = vpack.c.b16 %v3656, %v3652
    %v3893 = vpack.c.b16 %v3657, %v3653
    %v3894 = vpack.c.b16 %v3658, %v3654
    %v3895 = vpack.c.b16 %v3659, %v3655
    %v3896 = vpack.c.b16 %v3664, %v3660
    %v3897 = vpack.c.b16 %v3665, %v3661
    %v3898 = vpack.c.b16 %v3666, %v3662
    %v3899 = vpack.c.b16 %v3667, %v3663
    %v3900 = vpack.c.b16 %v3672, %v3668
    %v3901 = vpack.c.b16 %v3673, %v3669
    %v3902 = vpack.c.b16 %v3674, %v3670
    %v3903 = vpack.c.b16 %v3675, %v3671
    %v3904 = vpack.c.b16 %v3680, %v3676
    %v3905 = vpack.c.b16 %v3681, %v3677
    %v3906 = vpack.c.b16 %v3682, %v3678
    %v3907 = vpack.c.b16 %v3683, %v3679
    %v3908 = vpack.c.b16 %v3688, %v3684
    %v3909 = vpack.c.b16 %v3689, %v3685
    %v3910 = vpack.c.b16 %v3690, %v3686
    %v3911 = vpack.c.b16 %v3691, %v3687
    %v3912 = vpack.c.b16 %v3696, %v3692
    %v3913 = vpack.c.b16 %v3697, %v3693
    %v3914 = vpack.c.b16 %v3698, %v3694
    %v3915 = vpack.c.b16 %v3699, %v3695
    %v3916 = vpack.c.b16 %v3704, %v3700
    %v3917 = vpack.c.b16 %v3705, %v3701
    %v3918 = vpack.c.b16 %v3706, %v3702
    %v3919 = vpack.c.b16 %v3707, %v3703
    %v3920 = vpack.c.b16 %v3712, %v3708
    %v3921 = vpack.c.b16 %v3713, %v3709
    %v3922 = vpack.c.b16 %v3714, %v3710
    %v3923 = vpack.c.b16 %v3715, %v3711
    %v3924 = vpack.c.b16 %v3720, %v3716
    %v3925 = vpack.c.b16 %v3721, %v3717
    %v3926 = vpack.c.b16 %v3722, %v3718
    %v3927 = vpack.c.b16 %v3723, %v3719
    %v3928 = vpack.c.b16 %v3728, %v3724
    %v3929 = vpack.c.b16 %v3729, %v3725
    %v3930 = vpack.c.b16 %v3730, %v3726
    %v3931 = vpack.c.b16 %v3731, %v3727
    %v3932 = vpack.c.b16 %v3736, %v3732
    %v3933 = vpack.c.b16 %v3737, %v3733
    %v3934 = vpack.c.b16 %v3738, %v3734
    %v3935 = vpack.c.b16 %v3739, %v3735
    %v3936 = vpack.c.b16 %v3744, %v3740
    %v3937 = vpack.c.b16 %v3745, %v3741
    %v3938 = vpack.c.b16 %v3746, %v3742
    %v3939 = vpack.c.b16 %v3747, %v3743
    %v3940 = vpack.c.b16 %v3752, %v3748
    %v3941 = vpack.c.b16 %v3753, %v3749
    %v3942 = vpack.c.b16 %v3754, %v3750
    %v3943 = vpack.c.b16 %v3755, %v3751
    %v3944 = vpack.c.b16 %v3760, %v3756
    %v3945 = vpack.c.b16 %v3761, %v3757
    %v3946 = vpack.c.b16 %v3762, %v3758
    %v3947 = vpack.c.b16 %v3763, %v3759
    %v3948 = vpack.c.b16 %v3768, %v3764
    %v3949 = vpack.c.b16 %v3769, %v3765
    %v3950 = vpack.c.b16 %v3770, %v3766
    %v3951 = vpack.c.b16 %v3771, %v3767
    %v3952 = vpack.c.b16 %v3776, %v3772
    %v3953 = vpack.c.b16 %v3777, %v3773
    %v3954 = vpack.c.b16 %v3778, %v3774
    %v3955 = vpack.c.b16 %v3779, %v3775
    %v3956 = vpack.c.b16 %v3784, %v3780
    %v3957 = vpack.c.b16 %v3785, %v3781
    %v3958 = vpack.c.b16 %v3786, %v3782
    %v3959 = vpack.c.b16 %v3787, %v3783
    %v3960 = vpack.c.b16 %v3792, %v3788
    %v3961 = vpack.c.b16 %v3793, %v3789
    %v3962 = vpack.c.b16 %v3794, %v3790
    %v3963 = vpack.c.b16 %v3795, %v3791
    %v3964 = vpack.c.b16 %v3800, %v3796
    %v3965 = vpack.c.b16 %v3801, %v3797
    %v3966 = vpack.c.b16 %v3802, %v3798
    %v3967 = vpack.c.b16 %v3803, %v3799
    %v3968 = vpack.c.b16 %v3808, %v3804
    %v3969 = vpack.c.b16 %v3809, %v3805
    %v3970 = vpack.c.b16 %v3810, %v3806
    %v3971 = vpack.c.b16 %v3811, %v3807
    %v3972 = vpack.c.b16 %v3816, %v3812
    %v3973 = vpack.c.b16 %v3817, %v3813
    %v3974 = vpack.c.b16 %v3818, %v3814
    %v3975 = vpack.c.b16 %v3819, %v3815
    %v3976 = vpack.c.b16 %v3824, %v3820
    %v3977 = vpack.c.b16 %v3825, %v3821
    %v3978 = vpack.c.b16 %v3826, %v3822
    %v3979 = vpack.c.b16 %v3827, %v3823
    %v3980 = vpack.c.b16 %v3832, %v3828
    %v3981 = vpack.c.b16 %v3833, %v3829
    %v3982 = vpack.c.b16 %v3834, %v3830
    %v3983 = vpack.c.b16 %v3835, %v3831
    %v3984 = vpack.c.b16 %v3840, %v3836
    %v3985 = vpack.c.b16 %v3841, %v3837
    %v3986 = vpack.c.b16 %v3842, %v3838
    %v3987 = vpack.c.b16 %v3843, %v3839
    %v3988 = vpack.c.b16 %v3848, %v3844
    %v3989 = vpack.c.b16 %v3849, %v3845
    %v3990 = vpack.c.b16 %v3850, %v3846
    %v3991 = vpack.c.b16 %v3851, %v3847
    %v3992 = vpack.c.b16 %v3856, %v3852
    %v3993 = vpack.c.b16 %v3857, %v3853
    %v3994 = vpack.c.b16 %v3858, %v3854
    %v3995 = vpack.c.b16 %v3859, %v3855
    %v3996 = vpack.c.b16 %v3864, %v3860
    %v3997 = vpack.c.b16 %v3865, %v3861
    %v3998 = vpack.c.b16 %v3866, %v3862
    %v3999 = vpack.c.b16 %v3867, %v3863
    %v4000 = vpack.c.b16 %v3872, %v3868
    %v4001 = vpack.c.b16 %v3873, %v3869
    %v4002 = vpack.c.b16 %v3874, %v3870
    %v4003 = vpack.c.b16 %v3875, %v3871
    %4132 = vmatprep.subr.bf16.mxu0 %v3905
    %4133 = vmatpush1.bf16.msra.mxu0 %v3904
    %4134 = vmatprep.subr.bf16.mxu0 %v3901
    %4135 = vmatpush1.bf16.msra.mxu0 %v3900
    %4136 = vmatprep.subr.bf16.mxu0 %v3897
    %4137 = vmatpush1.bf16.msra.mxu0 %v3896
    %4138 = vmatprep.subr.bf16.mxu0 %v3893
    %4139 = vmatpush1.bf16.msra.mxu0 %v3892
    %4140 = vmatprep.subr.bf16.mxu0 %v3889
    %4141 = vmatpush1.bf16.msra.mxu0 %v3888
    %4142 = vmatprep.subr.bf16.mxu0 %v3885
    %4143 = vmatpush1.bf16.msra.mxu0 %v3884
    %4144 = vmatprep.subr.bf16.mxu0 %v3881
    %4145 = vmatpush1.bf16.msra.mxu0 %v3880
    %4146 = vmatprep.subr.bf16.mxu0 %v3877
    %4147 = vmatpush1.bf16.msra.mxu0 %v3876
    %4148 = vmatprep.subr.bf16.mxu0 %v3937
    %4149 = vmatpush2.bf16.msra.mxu0 %v3936
    %4150 = vmatprep.subr.bf16.mxu0 %v3933
    %4151 = vmatpush2.bf16.msra.mxu0 %v3932
    %4152 = vmatprep.subr.bf16.mxu0 %v3929
    %4153 = vmatpush2.bf16.msra.mxu0 %v3928
    %4154 = vmatprep.subr.bf16.mxu0 %v3925
    %4155 = vmatpush2.bf16.msra.mxu0 %v3924
    %4156 = vmatprep.subr.bf16.mxu0 %v3921
    %4157 = vmatpush2.bf16.msra.mxu0 %v3920
    %4158 = vmatprep.subr.bf16.mxu0 %v3917
    %4159 = vmatpush2.bf16.msra.mxu0 %v3916
    %4160 = vmatprep.subr.bf16.mxu0 %v3913
    %4161 = vmatpush2.bf16.msra.mxu0 %v3912
    %4162 = vmatprep.subr.bf16.mxu0 %v3909
    %4163 = vmatpush2.bf16.msra.mxu0 %v3908
    %4164 = vmatprep.mubr.bf16.mxu0 %v3339
    %4165 = vmatmul.mubr.bf16.gmra.mxu0 %v3338
    %v4166 = vpop.f32.mrf.mxu0
    %v4167 = vadd.f32 %v3475, %v4166
    %v4168 = vpop.f32.mrf.mxu0
    %v4169 = vadd.f32 %v3479, %v4168
    %v4170 = vpop.f32.mrf.mxu0
    %v4171 = vpop.f32.mrf.mxu0
    %4172 = vdwg.mxu0
    %4173 = vmatprep.subr.bf16.mxu0 %v3969
    %4174 = vmatpush1.bf16.msra.mxu0 %v3968
    %4175 = vmatprep.subr.bf16.mxu0 %v3965
    %4176 = vmatpush1.bf16.msra.mxu0 %v3964
    %4177 = vmatprep.subr.bf16.mxu0 %v3961
    %4178 = vmatpush1.bf16.msra.mxu0 %v3960
    %4179 = vmatprep.subr.bf16.mxu0 %v3957
    %4180 = vmatpush1.bf16.msra.mxu0 %v3956
    %4181 = vmatprep.subr.bf16.mxu0 %v3953
    %4182 = vmatpush1.bf16.msra.mxu0 %v3952
    %4183 = vmatprep.subr.bf16.mxu0 %v3949
    %4184 = vmatpush1.bf16.msra.mxu0 %v3948
    %4185 = vmatprep.subr.bf16.mxu0 %v3945
    %4186 = vmatpush1.bf16.msra.mxu0 %v3944
    %4187 = vmatprep.subr.bf16.mxu0 %v3941
    %4188 = vmatpush1.bf16.msra.mxu0 %v3940
    %4189 = vmatprep.subr.bf16.mxu0 %v4001
    %4190 = vmatpush2.bf16.msra.mxu0 %v4000
    %4191 = vmatprep.subr.bf16.mxu0 %v3997
    %4192 = vmatpush2.bf16.msra.mxu0 %v3996
    %4193 = vmatprep.subr.bf16.mxu0 %v3993
    %4194 = vmatpush2.bf16.msra.mxu0 %v3992
    %4195 = vmatprep.subr.bf16.mxu0 %v3989
    %4196 = vmatpush2.bf16.msra.mxu0 %v3988
    %4197 = vmatprep.subr.bf16.mxu0 %v3985
    %4198 = vmatpush2.bf16.msra.mxu0 %v3984
    %4199 = vmatprep.subr.bf16.mxu0 %v3981
    %4200 = vmatpush2.bf16.msra.mxu0 %v3980
    %4201 = vmatprep.subr.bf16.mxu0 %v3977
    %4202 = vmatpush2.bf16.msra.mxu0 %v3976
    %4203 = vmatprep.subr.bf16.mxu0 %v3973
    %4204 = vmatpush2.bf16.msra.mxu0 %v3972
    %4205 = vmatprep.mubr.bf16.mxu0 %v3341
    %4206 = vmatmul.mubr.bf16.gmra.mxu0 %v3340
    %v4207 = vpop.f32.mrf.mxu0
    %v4208 = vadd.f32 %v4167, %v4207
    %v4209 = vpop.f32.mrf.mxu0
    %v4210 = vadd.f32 %v4169, %v4209
    %v4211 = vpop.f32.mrf.mxu0
    %v4212 = vpop.f32.mrf.mxu0
    %4213 = vdwg.mxu0
    %4214 = vmatprep.subr.bf16.mxu0 %v3907
    %4215 = vmatpush1.bf16.msra.mxu0 %v3906
    %4216 = vmatprep.subr.bf16.mxu0 %v3903
    %4217 = vmatpush1.bf16.msra.mxu0 %v3902
    %4218 = vmatprep.subr.bf16.mxu0 %v3899
    %4219 = vmatpush1.bf16.msra.mxu0 %v3898
    %4220 = vmatprep.subr.bf16.mxu0 %v3895
    %4221 = vmatpush1.bf16.msra.mxu0 %v3894
    %4222 = vmatprep.subr.bf16.mxu0 %v3891
    %4223 = vmatpush1.bf16.msra.mxu0 %v3890
    %4224 = vmatprep.subr.bf16.mxu0 %v3887
    %4225 = vmatpush1.bf16.msra.mxu0 %v3886
    %4226 = vmatprep.subr.bf16.mxu0 %v3883
    %4227 = vmatpush1.bf16.msra.mxu0 %v3882
    %4228 = vmatprep.subr.bf16.mxu0 %v3879
    %4229 = vmatpush1.bf16.msra.mxu0 %v3878
    %4230 = vmatprep.subr.bf16.mxu0 %v3939
    %4231 = vmatpush2.bf16.msra.mxu0 %v3938
    %4232 = vmatprep.subr.bf16.mxu0 %v3935
    %4233 = vmatpush2.bf16.msra.mxu0 %v3934
    %4234 = vmatprep.subr.bf16.mxu0 %v3931
    %4235 = vmatpush2.bf16.msra.mxu0 %v3930
    %4236 = vmatprep.subr.bf16.mxu0 %v3927
    %4237 = vmatpush2.bf16.msra.mxu0 %v3926
    %4238 = vmatprep.subr.bf16.mxu0 %v3923
    %4239 = vmatpush2.bf16.msra.mxu0 %v3922
    %4240 = vmatprep.subr.bf16.mxu0 %v3919
    %4241 = vmatpush2.bf16.msra.mxu0 %v3918
    %4242 = vmatprep.subr.bf16.mxu0 %v3915
    %4243 = vmatpush2.bf16.msra.mxu0 %v3914
    %4244 = vmatprep.subr.bf16.mxu0 %v3911
    %4245 = vmatpush2.bf16.msra.mxu0 %v3910
    %4246 = vmatprep.mubr.bf16.mxu0 %v3339
    %4247 = vmatmul.mubr.bf16.gmra.mxu0 %v3338
    %v4248 = vpop.f32.mrf.mxu0
    %v4249 = vadd.f32 %v3483, %v4248
    %v4250 = vpop.f32.mrf.mxu0
    %v4251 = vadd.f32 %v3487, %v4250
    %v4252 = vpop.f32.mrf.mxu0
    %v4253 = vpop.f32.mrf.mxu0
    %4254 = vdwg.mxu0
    %4255 = vmatprep.subr.bf16.mxu0 %v3971
    %4256 = vmatpush1.bf16.msra.mxu0 %v3970
    %4257 = vmatprep.subr.bf16.mxu0 %v3967
    %4258 = vmatpush1.bf16.msra.mxu0 %v3966
    %4259 = vmatprep.subr.bf16.mxu0 %v3963
    %4260 = vmatpush1.bf16.msra.mxu0 %v3962
    %4261 = vmatprep.subr.bf16.mxu0 %v3959
    %4262 = vmatpush1.bf16.msra.mxu0 %v3958
    %4263 = vmatprep.subr.bf16.mxu0 %v3955
    %4264 = vmatpush1.bf16.msra.mxu0 %v3954
    %4265 = vmatprep.subr.bf16.mxu0 %v3951
    %4266 = vmatpush1.bf16.msra.mxu0 %v3950
    %4267 = vmatprep.subr.bf16.mxu0 %v3947
    %4268 = vmatpush1.bf16.msra.mxu0 %v3946
    %4269 = vmatprep.subr.bf16.mxu0 %v3943
    %4270 = vmatpush1.bf16.msra.mxu0 %v3942
    %4271 = vmatprep.subr.bf16.mxu0 %v4003
    %4272 = vmatpush2.bf16.msra.mxu0 %v4002
    %4273 = vmatprep.subr.bf16.mxu0 %v3999
    %4274 = vmatpush2.bf16.msra.mxu0 %v3998
    %4275 = vmatprep.subr.bf16.mxu0 %v3995
    %4276 = vmatpush2.bf16.msra.mxu0 %v3994
    %4277 = vmatprep.subr.bf16.mxu0 %v3991
    %4278 = vmatpush2.bf16.msra.mxu0 %v3990
    %4279 = vmatprep.subr.bf16.mxu0 %v3987
    %4280 = vmatpush2.bf16.msra.mxu0 %v3986
    %4281 = vmatprep.subr.bf16.mxu0 %v3983
    %4282 = vmatpush2.bf16.msra.mxu0 %v3982
    %4283 = vmatprep.subr.bf16.mxu0 %v3979
    %4284 = vmatpush2.bf16.msra.mxu0 %v3978
    %4285 = vmatprep.subr.bf16.mxu0 %v3975
    %4286 = vmatpush2.bf16.msra.mxu0 %v3974
    %4287 = vmatprep.mubr.bf16.mxu0 %v3341
    %4288 = vmatmul.mubr.bf16.gmra.mxu0 %v3340
    %v4289 = vpop.f32.mrf.mxu0
    %v4290 = vadd.f32 %v4249, %v4289
    %v4291 = vpop.f32.mrf.mxu0
    %v4292 = vadd.f32 %v4251, %v4291
    %v4293 = vpop.f32.mrf.mxu0
    %v4294 = vpop.f32.mrf.mxu0
    %4295 = vdwg.mxu0
    %v4296 = vadd.f32 %v4208, %v2372
    %v4297 = vadd.f32 %v4210, %v2373
    %v4298 = vadd.f32 %v4290, %v2374
    %v4299 = vadd.f32 %v4292, %v2375
    %v4300 = vadd.f32 %v4296, %v444
    %v4301 = vadd.f32 %v4297, %v445
    %v4302 = vadd.f32 %v4298, %v446
    %v4303 = vadd.f32 %v4299, %v447
    %v4304 = vmax.f32 %v4300, 0.0
    %v4305 = vmax.f32 %v4301, 0.0
    %v4306 = vmax.f32 %v4302, 0.0
    %v4307 = vmax.f32 %v4303, 0.0
    %v4308 = vpack.c.bf16 %v4304, %v4304
    %v4309 = vpack.c.bf16 %v4305, %v4305
    %v4310 = vpack.c.bf16 %v4306, %v4306
    %v4311 = vpack.c.bf16 %v4307, %v4307
    %v4312 = vld [vmem:[#allocation10] sm:$0xf]
    %v4313 = vld [vmem:[#allocation10 + $0x4] sm:$0xf]
    %v4314 = vld [vmem:[#allocation10 + $0x8] sm:$0xf]
    %v4315 = vld [vmem:[#allocation10 + $0xc] sm:$0xf]
    %v4316 = vld [vmem:[#allocation10 + $0x10] sm:$0xf]
    %v4317 = vld [vmem:[#allocation10 + $0x14] sm:$0xf]
    %v4318 = vld [vmem:[#allocation10 + $0x18] sm:$0xf]
    %v4319 = vld [vmem:[#allocation10 + $0x1c] sm:$0xf]
    %v4320 = vld [vmem:[#allocation10 + $0x20] sm:$0xf]
    %v4321 = vld [vmem:[#allocation10 + $0x24] sm:$0xf]
    %v4322 = vld [vmem:[#allocation10 + $0x28] sm:$0xf]
    %v4323 = vld [vmem:[#allocation10 + $0x2c] sm:$0xf]
    %v4324 = vld [vmem:[#allocation10 + $0x30] sm:$0xf]
    %v4325 = vld [vmem:[#allocation10 + $0x34] sm:$0xf]
    %v4326 = vld [vmem:[#allocation10 + $0x38] sm:$0xf]
    %v4327 = vld [vmem:[#allocation10 + $0x3c] sm:$0xf]
    %v4328 = vld [vmem:[#allocation10 + $0x40] sm:$0xf]
    %v4329 = vld [vmem:[#allocation10 + $0x44] sm:$0xf]
    %v4330 = vld [vmem:[#allocation10 + $0x48] sm:$0xf]
    %v4331 = vld [vmem:[#allocation10 + $0x4c] sm:$0xf]
    %v4332 = vld [vmem:[#allocation10 + $0x50] sm:$0xf]
    %v4333 = vld [vmem:[#allocation10 + $0x54] sm:$0xf]
    %v4334 = vld [vmem:[#allocation10 + $0x58] sm:$0xf]
    %v4335 = vld [vmem:[#allocation10 + $0x5c] sm:$0xf]
    %v4336 = vld [vmem:[#allocation10 + $0x60] sm:$0xf]
    %v4337 = vld [vmem:[#allocation10 + $0x64] sm:$0xf]
    %v4338 = vld [vmem:[#allocation10 + $0x68] sm:$0xf]
    %v4339 = vld [vmem:[#allocation10 + $0x6c] sm:$0xf]
    %v4340 = vld [vmem:[#allocation10 + $0x70] sm:$0xf]
    %v4341 = vld [vmem:[#allocation10 + $0x74] sm:$0xf]
    %v4342 = vld [vmem:[#allocation10 + $0x78] sm:$0xf]
    %v4343 = vld [vmem:[#allocation10 + $0x7c] sm:$0xf]
    %v4344 = vld [vmem:[#allocation10 + $0x80] sm:$0xf]
    %v4345 = vld [vmem:[#allocation10 + $0x84] sm:$0xf]
    %v4346 = vld [vmem:[#allocation10 + $0x88] sm:$0xf]
    %v4347 = vld [vmem:[#allocation10 + $0x8c] sm:$0xf]
    %v4348 = vld [vmem:[#allocation10 + $0x90] sm:$0xf]
    %v4349 = vld [vmem:[#allocation10 + $0x94] sm:$0xf]
    %v4350 = vld [vmem:[#allocation10 + $0x98] sm:$0xf]
    %v4351 = vld [vmem:[#allocation10 + $0x9c] sm:$0xf]
    %v4352 = vld [vmem:[#allocation10 + $0xa0] sm:$0xf]
    %v4353 = vld [vmem:[#allocation10 + $0xa4] sm:$0xf]
    %v4354 = vld [vmem:[#allocation10 + $0xa8] sm:$0xf]
    %v4355 = vld [vmem:[#allocation10 + $0xac] sm:$0xf]
    %v4356 = vld [vmem:[#allocation10 + $0xb0] sm:$0xf]
    %v4357 = vld [vmem:[#allocation10 + $0xb4] sm:$0xf]
    %v4358 = vld [vmem:[#allocation10 + $0xb8] sm:$0xf]
    %v4359 = vld [vmem:[#allocation10 + $0xbc] sm:$0xf]
    %v4360 = vld [vmem:[#allocation10 + $0xc0] sm:$0xf]
    %v4361 = vld [vmem:[#allocation10 + $0xc4] sm:$0xf]
    %v4362 = vld [vmem:[#allocation10 + $0xc8] sm:$0xf]
    %v4363 = vld [vmem:[#allocation10 + $0xcc] sm:$0xf]
    %v4364 = vld [vmem:[#allocation10 + $0xd0] sm:$0xf]
    %v4365 = vld [vmem:[#allocation10 + $0xd4] sm:$0xf]
    %v4366 = vld [vmem:[#allocation10 + $0xd8] sm:$0xf]
    %v4367 = vld [vmem:[#allocation10 + $0xdc] sm:$0xf]
    %v4368 = vld [vmem:[#allocation10 + $0xe0] sm:$0xf]
    %v4369 = vld [vmem:[#allocation10 + $0xe4] sm:$0xf]
    %v4370 = vld [vmem:[#allocation10 + $0xe8] sm:$0xf]
    %v4371 = vld [vmem:[#allocation10 + $0xec] sm:$0xf]
    %v4372 = vld [vmem:[#allocation10 + $0xf0] sm:$0xf]
    %v4373 = vld [vmem:[#allocation10 + $0xf4] sm:$0xf]
    %v4374 = vld [vmem:[#allocation10 + $0xf8] sm:$0xf]
    %v4375 = vld [vmem:[#allocation10 + $0xfc] sm:$0xf]
    %v4376 = vld [vmem:[%s12] sm:$0x1]
    %v4378 = vlaneseq
    %v4379 = vshrl.u32 %v4378, 7
    %v4380 = vsub.s32 0, %v4379
    %v4381 = vrot.slane %v4376, %v4380
    %v4447 = vunpack.c.l.b16 %v4312
    %v4448 = vunpack.c.l.b16 %v4313
    %v4449 = vunpack.c.l.b16 %v4314
    %v4450 = vunpack.c.l.b16 %v4315
    %v4451 = vunpack.c.l.b16 %v4316
    %v4452 = vunpack.c.l.b16 %v4317
    %v4453 = vunpack.c.l.b16 %v4318
    %v4454 = vunpack.c.l.b16 %v4319
    %v4455 = vunpack.c.l.b16 %v4320
    %v4456 = vunpack.c.l.b16 %v4321
    %v4457 = vunpack.c.l.b16 %v4322
    %v4458 = vunpack.c.l.b16 %v4323
    %v4459 = vunpack.c.l.b16 %v4324
    %v4460 = vunpack.c.l.b16 %v4325
    %v4461 = vunpack.c.l.b16 %v4326
    %v4462 = vunpack.c.l.b16 %v4327
    %v4463 = vunpack.c.l.b16 %v4328
    %v4464 = vunpack.c.l.b16 %v4329
    %v4465 = vunpack.c.l.b16 %v4330
    %v4466 = vunpack.c.l.b16 %v4331
    %v4467 = vunpack.c.l.b16 %v4332
    %v4468 = vunpack.c.l.b16 %v4333
    %v4469 = vunpack.c.l.b16 %v4334
    %v4470 = vunpack.c.l.b16 %v4335
    %v4471 = vunpack.c.l.b16 %v4336
    %v4472 = vunpack.c.l.b16 %v4337
    %v4473 = vunpack.c.l.b16 %v4338
    %v4474 = vunpack.c.l.b16 %v4339
    %v4475 = vunpack.c.l.b16 %v4340
    %v4476 = vunpack.c.l.b16 %v4341
    %v4477 = vunpack.c.l.b16 %v4342
    %v4478 = vunpack.c.l.b16 %v4343
    %v4479 = vunpack.c.l.b16 %v4344
    %v4480 = vunpack.c.l.b16 %v4345
    %v4481 = vunpack.c.l.b16 %v4346
    %v4482 = vunpack.c.l.b16 %v4347
    %v4483 = vunpack.c.l.b16 %v4348
    %v4484 = vunpack.c.l.b16 %v4349
    %v4485 = vunpack.c.l.b16 %v4350
    %v4486 = vunpack.c.l.b16 %v4351
    %v4487 = vunpack.c.l.b16 %v4352
    %v4488 = vunpack.c.l.b16 %v4353
    %v4489 = vunpack.c.l.b16 %v4354
    %v4490 = vunpack.c.l.b16 %v4355
    %v4491 = vunpack.c.l.b16 %v4356
    %v4492 = vunpack.c.l.b16 %v4357
    %v4493 = vunpack.c.l.b16 %v4358
    %v4494 = vunpack.c.l.b16 %v4359
    %v4495 = vunpack.c.l.b16 %v4360
    %v4496 = vunpack.c.l.b16 %v4361
    %v4497 = vunpack.c.l.b16 %v4362
    %v4498 = vunpack.c.l.b16 %v4363
    %v4499 = vunpack.c.l.b16 %v4364
    %v4500 = vunpack.c.l.b16 %v4365
    %v4501 = vunpack.c.l.b16 %v4366
    %v4502 = vunpack.c.l.b16 %v4367
    %v4503 = vunpack.c.l.b16 %v4368
    %v4504 = vunpack.c.l.b16 %v4369
    %v4505 = vunpack.c.l.b16 %v4370
    %v4506 = vunpack.c.l.b16 %v4371
    %v4507 = vunpack.c.l.b16 %v4372
    %v4508 = vunpack.c.l.b16 %v4373
    %v4509 = vunpack.c.l.b16 %v4374
    %v4510 = vunpack.c.l.b16 %v4375
    %v4511 = vpack.c.b16 %v4448, %v4447
    %v4512 = vpack.c.b16 %v4450, %v4449
    %v4513 = vpack.c.b16 %v4452, %v4451
    %v4514 = vpack.c.b16 %v4454, %v4453
    %v4515 = vpack.c.b16 %v4456, %v4455
    %v4516 = vpack.c.b16 %v4458, %v4457
    %v4517 = vpack.c.b16 %v4460, %v4459
    %v4518 = vpack.c.b16 %v4462, %v4461
    %v4519 = vpack.c.b16 %v4464, %v4463
    %v4520 = vpack.c.b16 %v4466, %v4465
    %v4521 = vpack.c.b16 %v4468, %v4467
    %v4522 = vpack.c.b16 %v4470, %v4469
    %v4523 = vpack.c.b16 %v4472, %v4471
    %v4524 = vpack.c.b16 %v4474, %v4473
    %v4525 = vpack.c.b16 %v4476, %v4475
    %v4526 = vpack.c.b16 %v4478, %v4477
    %v4527 = vpack.c.b16 %v4480, %v4479
    %v4528 = vpack.c.b16 %v4482, %v4481
    %v4529 = vpack.c.b16 %v4484, %v4483
    %v4530 = vpack.c.b16 %v4486, %v4485
    %v4531 = vpack.c.b16 %v4488, %v4487
    %v4532 = vpack.c.b16 %v4490, %v4489
    %v4533 = vpack.c.b16 %v4492, %v4491
    %v4534 = vpack.c.b16 %v4494, %v4493
    %v4535 = vpack.c.b16 %v4496, %v4495
    %v4536 = vpack.c.b16 %v4498, %v4497
    %v4537 = vpack.c.b16 %v4500, %v4499
    %v4538 = vpack.c.b16 %v4502, %v4501
    %v4539 = vpack.c.b16 %v4504, %v4503
    %v4540 = vpack.c.b16 %v4506, %v4505
    %v4541 = vpack.c.b16 %v4508, %v4507
    %v4542 = vpack.c.b16 %v4510, %v4509
    %4575 = vmatprep.subr.bf16.mxu0 0
    %4576 = vmatpush1.bf16.msra.mxu0 %v4518
    %4577 = vmatprep.subr.bf16.mxu0 0
    %4578 = vmatpush1.bf16.msra.mxu0 %v4517
    %4579 = vmatprep.subr.bf16.mxu0 0
    %4580 = vmatpush1.bf16.msra.mxu0 %v4516
    %4581 = vmatprep.subr.bf16.mxu0 0
    %4582 = vmatpush1.bf16.msra.mxu0 %v4515
    %4583 = vmatprep.subr.bf16.mxu0 0
    %4584 = vmatpush1.bf16.msra.mxu0 %v4514
    %4585 = vmatprep.subr.bf16.mxu0 0
    %4586 = vmatpush1.bf16.msra.mxu0 %v4513
    %4587 = vmatprep.subr.bf16.mxu0 0
    %4588 = vmatpush1.bf16.msra.mxu0 %v4512
    %4589 = vmatprep.subr.bf16.mxu0 0
    %4590 = vmatpush1.bf16.msra.mxu0 %v4511
    %4591 = vmatprep.subr.bf16.mxu0 0
    %4592 = vmatpush2.bf16.msra.mxu0 %v4526
    %4593 = vmatprep.subr.bf16.mxu0 0
    %4594 = vmatpush2.bf16.msra.mxu0 %v4525
    %4595 = vmatprep.subr.bf16.mxu0 0
    %4596 = vmatpush2.bf16.msra.mxu0 %v4524
    %4597 = vmatprep.subr.bf16.mxu0 0
    %4598 = vmatpush2.bf16.msra.mxu0 %v4523
    %4599 = vmatprep.subr.bf16.mxu0 0
    %4600 = vmatpush2.bf16.msra.mxu0 %v4522
    %4601 = vmatprep.subr.bf16.mxu0 0
    %4602 = vmatpush2.bf16.msra.mxu0 %v4521
    %4603 = vmatprep.subr.bf16.mxu0 0
    %4604 = vmatpush2.bf16.msra.mxu0 %v4520
    %4605 = vmatprep.subr.bf16.mxu0 0
    %4606 = vmatpush2.bf16.msra.mxu0 %v4519
    %4607 = vmatprep.mubr.bf16.mxu0 %v4309
    %4608 = vmatmul.mubr.bf16.gmra.mxu0 %v4308
    %v4609 = vpop.f32.mrf.mxu0
    %v4610 = vadd.f32 %v4381, %v4609
    %v4611 = vpop.f32.mrf.mxu0
    %v4612 = vpop.f32.mrf.mxu0
    %v4613 = vpop.f32.mrf.mxu0
    %4614 = vdwg.mxu0
    %4615 = vmatprep.subr.bf16.mxu0 0
    %4616 = vmatpush1.bf16.msra.mxu0 %v4534
    %4617 = vmatprep.subr.bf16.mxu0 0
    %4618 = vmatpush1.bf16.msra.mxu0 %v4533
    %4619 = vmatprep.subr.bf16.mxu0 0
    %4620 = vmatpush1.bf16.msra.mxu0 %v4532
    %4621 = vmatprep.subr.bf16.mxu0 0
    %4622 = vmatpush1.bf16.msra.mxu0 %v4531
    %4623 = vmatprep.subr.bf16.mxu0 0
    %4624 = vmatpush1.bf16.msra.mxu0 %v4530
    %4625 = vmatprep.subr.bf16.mxu0 0
    %4626 = vmatpush1.bf16.msra.mxu0 %v4529
    %4627 = vmatprep.subr.bf16.mxu0 0
    %4628 = vmatpush1.bf16.msra.mxu0 %v4528
    %4629 = vmatprep.subr.bf16.mxu0 0
    %4630 = vmatpush1.bf16.msra.mxu0 %v4527
    %4631 = vmatprep.subr.bf16.mxu0 0
    %4632 = vmatpush2.bf16.msra.mxu0 %v4542
    %4633 = vmatprep.subr.bf16.mxu0 0
    %4634 = vmatpush2.bf16.msra.mxu0 %v4541
    %4635 = vmatprep.subr.bf16.mxu0 0
    %4636 = vmatpush2.bf16.msra.mxu0 %v4540
    %4637 = vmatprep.subr.bf16.mxu0 0
    %4638 = vmatpush2.bf16.msra.mxu0 %v4539
    %4639 = vmatprep.subr.bf16.mxu0 0
    %4640 = vmatpush2.bf16.msra.mxu0 %v4538
    %4641 = vmatprep.subr.bf16.mxu0 0
    %4642 = vmatpush2.bf16.msra.mxu0 %v4537
    %4643 = vmatprep.subr.bf16.mxu0 0
    %4644 = vmatpush2.bf16.msra.mxu0 %v4536
    %4645 = vmatprep.subr.bf16.mxu0 0
    %4646 = vmatpush2.bf16.msra.mxu0 %v4535
    %4647 = vmatprep.mubr.bf16.mxu0 %v4311
    %4648 = vmatmul.mubr.bf16.gmra.mxu0 %v4310
    %v4649 = vpop.f32.mrf.mxu0
    %v4650 = vadd.f32 %v4610, %v4649
    %v4651 = vpop.f32.mrf.mxu0
    %v4652 = vpop.f32.mrf.mxu0
    %v4653 = vpop.f32.mrf.mxu0
    %4654 = vdwg.mxu0
    %v4655 = vtanh.pop %v4650
    %v4656 = vpack.c.bf16 %v4655, %v4655
    %v4657 = vld [vmem:[#allocation12] sm:$0xf]
    %v4658 = vld [vmem:[#allocation12 + $0x4] sm:$0xf]
    %v4659 = vld [vmem:[#allocation12 + $0x8] sm:$0xf]
    %v4660 = vld [vmem:[#allocation12 + $0xc] sm:$0xf]
    %v4661 = vld [vmem:[#allocation12 + $0x10] sm:$0xf]
    %v4662 = vld [vmem:[#allocation12 + $0x14] sm:$0xf]
    %v4663 = vld [vmem:[#allocation12 + $0x18] sm:$0xf]
    %v4664 = vld [vmem:[#allocation12 + $0x1c] sm:$0xf]
    %v4665 = vld [vmem:[#allocation12 + $0x20] sm:$0xf]
    %v4666 = vld [vmem:[#allocation12 + $0x24] sm:$0xf]
    %v4667 = vld [vmem:[#allocation12 + $0x28] sm:$0xf]
    %v4668 = vld [vmem:[#allocation12 + $0x2c] sm:$0xf]
    %v4669 = vld [vmem:[#allocation12 + $0x30] sm:$0xf]
    %v4670 = vld [vmem:[#allocation12 + $0x34] sm:$0xf]
    %v4671 = vld [vmem:[#allocation12 + $0x38] sm:$0xf]
    %v4672 = vld [vmem:[#allocation12 + $0x3c] sm:$0xf]
    %v4673 = vld [vmem:[%s14] sm:$0x1]
    %v4675 = vlaneseq
    %v4676 = vshrl.u32 %v4675, 7
    %v4677 = vsub.s32 0, %v4676
    %v4678 = vrot.slane %v4673, %v4677
    %v4696 = vunpack.c.l.b16 %v4657
    %v4697 = vunpack.c.l.b16 %v4658
    %v4698 = vunpack.c.l.b16 %v4659
    %v4699 = vunpack.c.l.b16 %v4660
    %v4700 = vunpack.c.l.b16 %v4661
    %v4701 = vunpack.c.l.b16 %v4662
    %v4702 = vunpack.c.l.b16 %v4663
    %v4703 = vunpack.c.l.b16 %v4664
    %v4704 = vunpack.c.l.b16 %v4665
    %v4705 = vunpack.c.l.b16 %v4666
    %v4706 = vunpack.c.l.b16 %v4667
    %v4707 = vunpack.c.l.b16 %v4668
    %v4708 = vunpack.c.l.b16 %v4669
    %v4709 = vunpack.c.l.b16 %v4670
    %v4710 = vunpack.c.l.b16 %v4671
    %v4711 = vunpack.c.l.b16 %v4672
    %v4712 = vpack.c.b16 %v4697, %v4696
    %v4713 = vpack.c.b16 %v4699, %v4698
    %v4714 = vpack.c.b16 %v4701, %v4700
    %v4715 = vpack.c.b16 %v4703, %v4702
    %v4716 = vpack.c.b16 %v4705, %v4704
    %v4717 = vpack.c.b16 %v4707, %v4706
    %v4718 = vpack.c.b16 %v4709, %v4708
    %v4719 = vpack.c.b16 %v4711, %v4710
    %4728 = vmatprep.subr.bf16.mxu0 0
    %4729 = vmatpush1.bf16.msra.mxu0 %v4719
    %4730 = vmatprep.subr.bf16.mxu0 0
    %4731 = vmatpush1.bf16.msra.mxu0 %v4718
    %4732 = vmatprep.subr.bf16.mxu0 0
    %4733 = vmatpush1.bf16.msra.mxu0 %v4717
    %4734 = vmatprep.subr.bf16.mxu0 0
    %4735 = vmatpush1.bf16.msra.mxu0 %v4716
    %4736 = vmatprep.subr.bf16.mxu0 0
    %4737 = vmatpush1.bf16.msra.mxu0 %v4715
    %4738 = vmatprep.subr.bf16.mxu0 0
    %4739 = vmatpush1.bf16.msra.mxu0 %v4714
    %4740 = vmatprep.subr.bf16.mxu0 0
    %4741 = vmatpush1.bf16.msra.mxu0 %v4713
    %4742 = vmatprep.subr.bf16.mxu0 0
    %4743 = vmatpush1.bf16.msra.mxu0 %v4712
    %4744 = vmatprep.subr.bf16.mxu0 0
    %4745 = vmatpush2.bf16.msra.mxu0 0
    %4746 = vmatprep.subr.bf16.mxu0 0
    %4747 = vmatpush2.bf16.msra.mxu0 0
    %4748 = vmatprep.subr.bf16.mxu0 0
    %4749 = vmatpush2.bf16.msra.mxu0 0
    %4750 = vmatprep.subr.bf16.mxu0 0
    %4751 = vmatpush2.bf16.msra.mxu0 0
    %4752 = vmatprep.subr.bf16.mxu0 0
    %4753 = vmatpush2.bf16.msra.mxu0 0
    %4754 = vmatprep.subr.bf16.mxu0 0
    %4755 = vmatpush2.bf16.msra.mxu0 0
    %4756 = vmatprep.subr.bf16.mxu0 0
    %4757 = vmatpush2.bf16.msra.mxu0 0
    %4758 = vmatprep.subr.bf16.mxu0 0
    %4759 = vmatpush2.bf16.msra.mxu0 0
    %4760 = vmatprep.mubr.bf16.mxu0 0
    %4761 = vmatmul.mubr.bf16.gmra.mxu0 %v4656
    %v4762 = vpop.f32.mrf.mxu0
    %v4763 = vadd.f32 %v4678, %v4762
    %v4764 = vpop.f32.mrf.mxu0
    %v4765 = vpop.f32.mrf.mxu0
    %v4766 = vpop.f32.mrf.mxu0
    %4767 = vdwg.mxu0
    %4768 = vst [vmem:[%s15] sm:$0xff] %v4763
    // Predicated region
    $region90: #{neurd_forward.1} parent=1 // pred_check
      _
    $region91: #{neurd_forward.1} parent=1 // pred_check_branch
      %4770 = sbr.rel (0) target = $region93
    $region92: #{neurd_forward.1} parent=1 // pred_region
      _
    $region93: #{neurd_forward.1} parent=1 // pred_fallthru
      _
    // Predicated region
    $region94: #{neurd_forward.1} parent=1 // pred_check
      _
    $region95: #{neurd_forward.1} parent=1 // pred_check_branch
      %4772 = sbr.rel (0) target = $region97
    $region96: #{neurd_forward.1} parent=1 // pred_region
      _
    $region97: #{neurd_forward.1} parent=1 // pred_fallthru
      _
    %4773 = vsyncpa [#allocation3], 1
    %4774 = vsyncpa [#allocation5], 1
    %4775 = vsyncpa [#allocation8], 1
    %4776 = vsyncpa [#allocation11], 1

</llo_original>
